<compile_context>
chip_gen: v6e
topology: v6e:2x2x1
jax: 0.10.0
libtpu: 0.0.40
codegen_flags: <defaults>
</compile_context>

<pallas_src>
import functools

import jax
import jax.numpy as jnp
from jax.experimental import pallas as pl
from jax.experimental.pallas import tpu as pltpu


# ------------------------- small config (shapes consistent with ModelArgs) ------
class SmallArgs:
    num_heads = 4
    num_layer = 2
    dim = 64                  # embed dim (768 in the reference)
    img_size = 64             # 256 in the reference -> 16 patches here
    channel = 3
    patch_size = 16
    classes = 10
    hidden_dim_layer_1 = 64   # 512 in the reference
    hidden_dim_layer_2 = 32   # 196 in the reference


PAD_CLASSES = 128             # lane-dense output width (sliced to `classes` on host)


# ------------------------- in-kernel math helpers -------------------------------
def _gelu(x):
    # tanh-approximate GELU: the tanh goes to the (otherwise idle) EUP slot.
    c = 0.7978845608028654    # sqrt(2/pi)
    return 0.5 * x * (1.0 + jnp.tanh(c * (x + 0.044715 * x * x * x)))


def _layernorm(x, gamma, beta, eps=1e-5):
    mean = jnp.mean(x, axis=-1, keepdims=True)
    var = jnp.mean(jnp.square(x - mean), axis=-1, keepdims=True)
    return (x - mean) * jax.lax.rsqrt(var + eps) * gamma + beta


def _dot(a, b):
    # bf16 MXU inputs, f32 accumulation (2x MXU rate + half weight DMA on v6e/v7x).
    return jnp.dot(a.astype(jnp.bfloat16), b.astype(jnp.bfloat16),
                   preferred_element_type=jnp.float32)


# ------------------------- fused ViT kernel --------------------------------------
def vit_kernel(patch_ref,                              # (B_TILE*S, C*P*P) bf16
               pw_ref, pb_ref,                         # patch embed
               wqkv_ref, bqkv_ref,                     # fused QKV (L, D, 3D) / (L, 1, 3D)
               wodd_ref,                               # (L, 3, D, D) = [Wo, W1, W2]
               vec_ref,                                # (L, 7, D) = [bo,g1,be1,b1,b2,g2,be2]
               hw1_ref, hb1_ref, hw2_ref, hb2_ref, hw3_ref, hb3_ref,
               o_ref,                                  # (1, B_TILE, PAD_CLASSES)
               *, num_heads, num_layer, b_tile, seq):
    # ---- patch embedding (im2col done on host, bf16 streamed) ----
    x = _dot(patch_ref[...], pw_ref[...]) + pb_ref[...]        # (M, D) f32
    M, D = x.shape
    hd = D // num_heads

    # ---- encoder layers (static unroll; layer params stacked on leading axis) ----
    for l in range(num_layer):
        vec = vec_ref[l]                                        # (7, D) f32
        # Fused QKV projection: one MXU pass with N = 3D.
        # NOTE: 1/sqrt(hd) is pre-folded into the Q columns/bias on the host.
        qkv = _dot(x, wqkv_ref[l]) + bqkv_ref[l]                # (M, 3D) f32
        qkv3 = qkv.reshape(b_tile, seq, 3 * D)                  # sample axis out front

        heads = []
        for h in range(num_heads):
            qh = qkv3[..., h * hd:(h + 1) * hd]
            kh = qkv3[..., D + h * hd:D + (h + 1) * hd]
            vh = qkv3[..., 2 * D + h * hd:2 * D + (h + 1) * hd]
            s = jnp.einsum('bqd,bkd->bqk', qh.astype(jnp.bfloat16),
                           kh.astype(jnp.bfloat16),
                           preferred_element_type=jnp.float32)  # (b, S, S)
            s = s - jnp.max(s, axis=-1, keepdims=True)
            p = jnp.exp(s)
            p = p * pl.reciprocal(jnp.sum(p, axis=-1, keepdims=True), approx=True)
            heads.append(jnp.einsum('bqk,bkd->bqd', p.astype(jnp.bfloat16),
                                    vh.astype(jnp.bfloat16),
                                    preferred_element_type=jnp.float32))
        # Lane-concat the head outputs and do ONE full-width output projection.
        o3 = jnp.concatenate(heads, axis=-1)                    # (b, S, D) f32
        attn = _dot(o3.reshape(M, D), wodd_ref[l, 0]) + vec[0:1, :]

        h1 = _layernorm(x + attn, vec[1:2, :], vec[2:3, :])
        f = _gelu(_dot(h1, wodd_ref[l, 1]) + vec[3:4, :])
        f = _dot(f, wodd_ref[l, 2]) + vec[4:5, :]
        x = _layernorm(h1 + f, vec[5:6, :], vec[6:7, :])

    # ---- classification head on token 0 of each sample ----
    # Gather rows {0, S, 2S, ...} with a tiny one-hot matmul (avoids relayout).
    row = jax.lax.broadcasted_iota(jnp.int32, (b_tile, M), 0)
    col = jax.lax.broadcasted_iota(jnp.int32, (b_tile, M), 1)
    sel = (col == row * seq).astype(jnp.bfloat16)               # (b_tile, M)
    x0 = jnp.dot(sel, x.astype(jnp.bfloat16),
                 preferred_element_type=jnp.float32)            # (b_tile, D)

    h = _gelu(_dot(x0, hw1_ref[...]) + hb1_ref[...])
    h = _gelu(_dot(h, hw2_ref[...]) + hb2_ref[...])
    logits = _dot(h, hw3_ref[...]) + hb3_ref[...]               # (b_tile, 128) padded
    o_ref[0] = logits.astype(o_ref.dtype)


# ------------------------- host glue + pallas_call --------------------------------
def patchify(x, patch_size):
    # NCHW -> [B*N, C*P*P]; per-patch flatten order (c, kh, kw) matches
    # Conv2d weight.reshape(D, -1); rows are sample-major, patch-grid row-major.
    B, C, H, W = x.shape
    P = patch_size
    nh, nw = H // P, W // P
    x = x.reshape(B, C, nh, P, nw, P)
    x = x.transpose(0, 2, 4, 1, 3, 5)                # B, nh, nw, C, P, P
    return x.reshape(B * nh * nw, C * P * P)


def _pick_b_tile(batch, target=16):
    # v6e/v7x MXU is 256 rows tall -> 16 samples x 16 patches = 256-row slabs
    # (use target=8 on v5e). Cap at batch//2 so the grid keeps >= 2 steps and
    # both v7x TensorCores stay busy; must divide the batch.
    cap = max(1, min(target, batch // 2)) if batch >= 2 else 1
    for c in range(cap, 0, -1):
        if batch % c == 0:
            return c
    return 1


def pack_params(params, cfg):
    """Pack PyTorch-layout f32 params into the 12 kernel operands."""
    D = cfg.dim
    hd = D // cfg.num_heads
    scale = 1.0 / float(hd) ** 0.5
    bf = lambda a: a.astype(jnp.bfloat16)
    # Fold 1/sqrt(hd) into the Q projection: (x Wq + bq) * s == x (s Wq) + s bq.
    wqkv = jnp.concatenate([params["wq"] * scale, params["wk"], params["wv"]], axis=-1)
    bqkv = jnp.concatenate([params["bq"] * scale, params["bk"], params["bv"]], axis=-1)
    wodd = jnp.stack([params["wo"], params["w1"], params["w2"]], axis=1)      # (L,3,D,D)
    vec = jnp.concatenate([params["bo"], params["ln1_g"], params["ln1_b"],
                           params["b1"], params["b2"],
                           params["ln2_g"], params["ln2_b"]], axis=1)         # (L,7,D)
    pad = PAD_CLASSES - cfg.classes
    hw3 = jnp.pad(params["hw3"], ((0, 0), (0, pad)))
    hb3 = jnp.pad(params["hb3"], ((0, 0), (0, pad)))
    return [bf(params["patch_w"]), params["patch_b"],
            bf(wqkv), bqkv, bf(wodd), vec,
            bf(params["hw1"]), params["hb1"],
            bf(params["hw2"]), params["hb2"],
            bf(hw3), hb3]


def vit_forward(params, x, cfg, b_tile=None):
    B = x.shape[0]
    S = (cfg.img_size // cfg.patch_size) ** 2
    CPP = cfg.channel * cfg.patch_size * cfg.patch_size
    if b_tile is None:
        b_tile = _pick_b_tile(B)
    assert B % b_tile == 0
    n_tiles = B // b_tile

    # bf16 im2col patches: halves the only per-step streaming DMA.
    patches = patchify(x, cfg.patch_size).astype(jnp.bfloat16)   # (B*S, CPP)
    ops = pack_params(params, cfg)

    kernel = functools.partial(vit_kernel, num_heads=cfg.num_heads,
                               num_layer=cfg.num_layer, b_tile=b_tile, seq=S)

    out = pl.pallas_call(
        kernel,
        out_shape=jax.ShapeDtypeStruct((n_tiles, b_tile, PAD_CLASSES), jnp.float32),
        grid=(n_tiles,),
        in_specs=[pl.BlockSpec((b_tile * S, CPP), lambda i: (i, 0))]   # streamed
                 + [pl.BlockSpec(w.shape, lambda i, n=w.ndim: (0,) * n)
                    for w in ops],                                      # VMEM-resident
        out_specs=pl.BlockSpec((1, b_tile, PAD_CLASSES), lambda i: (i, 0, 0)),
        compiler_params=pltpu.CompilerParams(
            dimension_semantics=("parallel",)),                         # 2 TCs on v7x
    )(patches, *ops)
    return out.reshape(B, PAD_CLASSES)[:, :cfg.classes]


# ------------------------- deterministic parameter init ---------------------------
def init_params(key, cfg):
    D, L = cfg.dim, cfg.num_layer
    CPP = cfg.channel * cfg.patch_size * cfg.patch_size
    keys = iter(jax.random.split(key, 32))

    def w(shape, scale=0.02):
        return scale * jax.random.normal(next(keys), shape, jnp.float32)

    return {
        # Conv2d weight [D, C, P, P] stored pre-flattened/transposed as [C*P*P, D]
        "patch_w": w((CPP, D)), "patch_b": w((1, D)),
        # encoder layer params stacked on a leading L axis
        "wq": w((L, D, D)), "bq": w((L, 1, D)),
        "wk": w((L, D, D)), "bk": w((L, 1, D)),
        "wv": w((L, D, D)), "bv": w((L, 1, D)),
        "wo": w((L, D, D)), "bo": w((L, 1, D)),
        "ln1_g": jnp.ones((L, 1, D), jnp.float32),
        "ln1_b": jnp.zeros((L, 1, D), jnp.float32),
        "w1": w((L, D, D)), "b1": w((L, 1, D)),              # f_dim = dim
        "w2": w((L, D, D)), "b2": w((L, 1, D)),              # s_dim = dim
        "ln2_g": jnp.ones((L, 1, D), jnp.float32),
        "ln2_b": jnp.zeros((L, 1, D), jnp.float32),
        # MLP head
        "hw1": w((D, cfg.hidden_dim_layer_1)), "hb1": w((1, cfg.hidden_dim_layer_1)),
        "hw2": w((cfg.hidden_dim_layer_1, cfg.hidden_dim_layer_2)),
        "hb2": w((1, cfg.hidden_dim_layer_2)),
        "hw3": w((cfg.hidden_dim_layer_2, cfg.classes)),
        "hb3": w((1, cfg.classes)),
    }


if __name__ == "__main__":
    cfg = SmallArgs()
    key = jax.random.PRNGKey(0)
    pkey, xkey = jax.random.split(key)
    params = init_params(pkey, cfg)
    # batch=4 -> B_TILE=2, grid=(2,): exercises both the batched slab path and
    # a >=2-step grid (keeps both v7x TensorCores busy).
    x = jax.random.normal(
        xkey, (4, cfg.channel, cfg.img_size, cfg.img_size), dtype=jnp.float32)

    out = jax.block_until_ready(vit_forward(params, x, cfg))
    assert out.shape == (4, cfg.classes), out.shape
    assert bool(jnp.all(jnp.isfinite(out)))
    print("KERNEL_OK")
</pallas_src>

<mosaic_0001>
module attributes {stable_mosaic.version = 11 : i64} {
  func.func @vit_kernel(%arg0: i32, %arg1: memref<32x768xbf16, #tpu.memory_space<vmem>>, %arg2: memref<768x64xbf16, #tpu.memory_space<vmem>>, %arg3: memref<1x64xf32, #tpu.memory_space<vmem>>, %arg4: memref<2x64x192xbf16, #tpu.memory_space<vmem>>, %arg5: memref<2x1x192xf32, #tpu.memory_space<vmem>>, %arg6: memref<2x3x64x64xbf16, #tpu.memory_space<vmem>>, %arg7: memref<2x7x64xf32, #tpu.memory_space<vmem>>, %arg8: memref<64x64xbf16, #tpu.memory_space<vmem>>, %arg9: memref<1x64xf32, #tpu.memory_space<vmem>>, %arg10: memref<64x32xbf16, #tpu.memory_space<vmem>>, %arg11: memref<1x32xf32, #tpu.memory_space<vmem>>, %arg12: memref<32x128xbf16, #tpu.memory_space<vmem>>, %arg13: memref<1x128xf32, #tpu.memory_space<vmem>>, %arg14: memref<1x2x128xf32, #tpu.memory_space<vmem>>) attributes {dimension_semantics = [#tpu.dimension_semantics<parallel>], iteration_bounds = array<i64: 2>, scalar_prefetch = 0 : i64, scratch_operands = 0 : i64, tpu.core_type = #tpu.core_type<tc>, window_params = [{transform_indices = @transform_0, window_bounds = array<i64: 32, 768>}, {pipeline_mode = #tpu.pipeline_mode<synchronous>, transform_indices = @transform_1, window_bounds = array<i64: 768, 64>}, {pipeline_mode = #tpu.pipeline_mode<synchronous>, transform_indices = @transform_2, window_bounds = array<i64: 1, 64>}, {pipeline_mode = #tpu.pipeline_mode<synchronous>, transform_indices = @transform_3, window_bounds = array<i64: 2, 64, 192>}, {pipeline_mode = #tpu.pipeline_mode<synchronous>, transform_indices = @transform_4, window_bounds = array<i64: 2, 1, 192>}, {pipeline_mode = #tpu.pipeline_mode<synchronous>, transform_indices = @transform_5, window_bounds = array<i64: 2, 3, 64, 64>}, {pipeline_mode = #tpu.pipeline_mode<synchronous>, transform_indices = @transform_6, window_bounds = array<i64: 2, 7, 64>}, {pipeline_mode = #tpu.pipeline_mode<synchronous>, transform_indices = @transform_7, window_bounds = array<i64: 64, 64>}, {pipeline_mode = #tpu.pipeline_mode<synchronous>, transform_indices = @transform_8, window_bounds = array<i64: 1, 64>}, {pipeline_mode = #tpu.pipeline_mode<synchronous>, transform_indices = @transform_9, window_bounds = array<i64: 64, 32>}, {pipeline_mode = #tpu.pipeline_mode<synchronous>, transform_indices = @transform_10, window_bounds = array<i64: 1, 32>}, {pipeline_mode = #tpu.pipeline_mode<synchronous>, transform_indices = @transform_11, window_bounds = array<i64: 32, 128>}, {pipeline_mode = #tpu.pipeline_mode<synchronous>, transform_indices = @transform_12, window_bounds = array<i64: 1, 128>}, {transform_indices = @transform_13, window_bounds = array<i64: 1, 2, 128>}]} {
    %c0 = arith.constant 0 : index
    %c0_0 = arith.constant 0 : index
    %0 = vector.load %arg1[%c0, %c0_0] : memref<32x768xbf16, #tpu.memory_space<vmem>>, vector<32x768xbf16>
    %c0_1 = arith.constant 0 : index
    %c0_2 = arith.constant 0 : index
    %1 = vector.load %arg2[%c0_1, %c0_2] : memref<768x64xbf16, #tpu.memory_space<vmem>>, vector<768x64xbf16>
    %cst = arith.constant dense<0.000000e+00> : vector<32x64xf32>
    %2 = tpu.matmul %0, %1, %cst {dimension_numbers = #tpu.dot_dimension_numbers<[1], [0], [0], [1], [0, 0, 1, 1], [], []>} : vector<32x768xbf16>, vector<768x64xbf16>, vector<32x64xf32> -> vector<32x64xf32>
    %c0_3 = arith.constant 0 : index
    %c0_4 = arith.constant 0 : index
    %3 = vector.load %arg3[%c0_3, %c0_4] : memref<1x64xf32, #tpu.memory_space<vmem>>, vector<1x64xf32>
    %4 = vector.broadcast %3 : vector<1x64xf32> to vector<32x64xf32>
    %5 = arith.addf %2, %4 : vector<32x64xf32>
    %c0_5 = arith.constant 0 : index
    %c0_6 = arith.constant 0 : index
    %c0_7 = arith.constant 0 : index
    %6 = vector.load %arg7[%c0_5, %c0_6, %c0_7] : memref<2x7x64xf32, #tpu.memory_space<vmem>>, vector<1x7x64xf32>
    %7 = vector.shape_cast %6 : vector<1x7x64xf32> to vector<7x64xf32>
    %c0_8 = arith.constant 0 : index
    %c0_9 = arith.constant 0 : index
    %c0_10 = arith.constant 0 : index
    %8 = vector.load %arg4[%c0_8, %c0_9, %c0_10] : memref<2x64x192xbf16, #tpu.memory_space<vmem>>, vector<1x64x192xbf16>
    %9 = vector.shape_cast %8 : vector<1x64x192xbf16> to vector<64x192xbf16>
    %10 = arith.truncf %5 : vector<32x64xf32> to vector<32x64xbf16>
    %cst_11 = arith.constant dense<0.000000e+00> : vector<32x192xf32>
    %11 = tpu.matmul %10, %9, %cst_11 {dimension_numbers = #tpu.dot_dimension_numbers<[1], [0], [0], [1], [0, 0, 1, 1], [], []>} : vector<32x64xbf16>, vector<64x192xbf16>, vector<32x192xf32> -> vector<32x192xf32>
    %c0_12 = arith.constant 0 : index
    %c0_13 = arith.constant 0 : index
    %c0_14 = arith.constant 0 : index
    %12 = vector.load %arg5[%c0_12, %c0_13, %c0_14] : memref<2x1x192xf32, #tpu.memory_space<vmem>>, vector<1x1x192xf32>
    %13 = vector.shape_cast %12 : vector<1x1x192xf32> to vector<1x192xf32>
    %14 = vector.broadcast %13 : vector<1x192xf32> to vector<32x192xf32>
    %15 = arith.addf %11, %14 : vector<32x192xf32>
    %16 = vector.shape_cast %15 : vector<32x192xf32> to vector<2x16x192xf32>
    %17 = vector.extract_strided_slice %16 {offsets = [0, 0, 0], sizes = [2, 16, 16], strides = [1, 1, 1]} : vector<2x16x192xf32> to vector<2x16x16xf32>
    %18 = vector.extract_strided_slice %16 {offsets = [0, 0, 64], sizes = [2, 16, 16], strides = [1, 1, 1]} : vector<2x16x192xf32> to vector<2x16x16xf32>
    %19 = vector.extract_strided_slice %16 {offsets = [0, 0, 128], sizes = [2, 16, 16], strides = [1, 1, 1]} : vector<2x16x192xf32> to vector<2x16x16xf32>
    %20 = arith.truncf %17 : vector<2x16x16xf32> to vector<2x16x16xbf16>
    %21 = arith.truncf %18 : vector<2x16x16xf32> to vector<2x16x16xbf16>
    "tpu.trace_start"() <{level = 10 : i32, message = "bqd,bkd->bqk"}> : () -> ()
    %cst_15 = arith.constant dense<0.000000e+00> : vector<2x16x16xf32>
    %22 = tpu.matmul %20, %21, %cst_15 {dimension_numbers = #tpu.dot_dimension_numbers<[2], [2], [1], [1], [0, 0, 0, 1, 1, 1], [0], [0]>} : vector<2x16x16xbf16>, vector<2x16x16xbf16>, vector<2x16x16xf32> -> vector<2x16x16xf32>
    "tpu.trace_stop"() : () -> ()
    %cst_16 = arith.constant dense<0xFF800000> : vector<2x16xf32>
    %23 = vector.multi_reduction <maximumf>, %22, %cst_16 [2] : vector<2x16x16xf32> to vector<2x16xf32>
    %24 = vector.shape_cast %23 : vector<2x16xf32> to vector<2x16x1xf32>
    %25 = vector.broadcast %24 : vector<2x16x1xf32> to vector<2x16x16xf32>
    %26 = arith.subf %22, %25 : vector<2x16x16xf32>
    %27 = math.exp %26 : vector<2x16x16xf32>
    %cst_17 = arith.constant dense<0.000000e+00> : vector<2x16xf32>
    %28 = vector.multi_reduction <add>, %27, %cst_17 [2] : vector<2x16x16xf32> to vector<2x16xf32>
    %29 = vector.shape_cast %28 : vector<2x16xf32> to vector<2x16x1xf32>
    %30 = tpu.reciprocal %29 {approx = true} : vector<2x16x1xf32> -> vector<2x16x1xf32>
    %31 = vector.broadcast %30 : vector<2x16x1xf32> to vector<2x16x16xf32>
    %32 = arith.mulf %27, %31 : vector<2x16x16xf32>
    %33 = arith.truncf %32 : vector<2x16x16xf32> to vector<2x16x16xbf16>
    %34 = arith.truncf %19 : vector<2x16x16xf32> to vector<2x16x16xbf16>
    "tpu.trace_start"() <{level = 10 : i32, message = "bqk,bkd->bqd"}> : () -> ()
    %cst_18 = arith.constant dense<0.000000e+00> : vector<2x16x16xf32>
    %35 = tpu.matmul %33, %34, %cst_18 {dimension_numbers = #tpu.dot_dimension_numbers<[2], [1], [1], [2], [0, 0, 0, 1, 1, 2], [0], [0]>} : vector<2x16x16xbf16>, vector<2x16x16xbf16>, vector<2x16x16xf32> -> vector<2x16x16xf32>
    "tpu.trace_stop"() : () -> ()
    %36 = vector.extract_strided_slice %16 {offsets = [0, 0, 16], sizes = [2, 16, 16], strides = [1, 1, 1]} : vector<2x16x192xf32> to vector<2x16x16xf32>
    %37 = vector.extract_strided_slice %16 {offsets = [0, 0, 80], sizes = [2, 16, 16], strides = [1, 1, 1]} : vector<2x16x192xf32> to vector<2x16x16xf32>
    %38 = vector.extract_strided_slice %16 {offsets = [0, 0, 144], sizes = [2, 16, 16], strides = [1, 1, 1]} : vector<2x16x192xf32> to vector<2x16x16xf32>
    %39 = arith.truncf %36 : vector<2x16x16xf32> to vector<2x16x16xbf16>
    %40 = arith.truncf %37 : vector<2x16x16xf32> to vector<2x16x16xbf16>
    "tpu.trace_start"() <{level = 10 : i32, message = "bqd,bkd->bqk"}> : () -> ()
    %cst_19 = arith.constant dense<0.000000e+00> : vector<2x16x16xf32>
    %41 = tpu.matmul %39, %40, %cst_19 {dimension_numbers = #tpu.dot_dimension_numbers<[2], [2], [1], [1], [0, 0, 0, 1, 1, 1], [0], [0]>} : vector<2x16x16xbf16>, vector<2x16x16xbf16>, vector<2x16x16xf32> -> vector<2x16x16xf32>
    "tpu.trace_stop"() : () -> ()
    %cst_20 = arith.constant dense<0xFF800000> : vector<2x16xf32>
    %42 = vector.multi_reduction <maximumf>, %41, %cst_20 [2] : vector<2x16x16xf32> to vector<2x16xf32>
    %43 = vector.shape_cast %42 : vector<2x16xf32> to vector<2x16x1xf32>
    %44 = vector.broadcast %43 : vector<2x16x1xf32> to vector<2x16x16xf32>
    %45 = arith.subf %41, %44 : vector<2x16x16xf32>
    %46 = math.exp %45 : vector<2x16x16xf32>
    %cst_21 = arith.constant dense<0.000000e+00> : vector<2x16xf32>
    %47 = vector.multi_reduction <add>, %46, %cst_21 [2] : vector<2x16x16xf32> to vector<2x16xf32>
    %48 = vector.shape_cast %47 : vector<2x16xf32> to vector<2x16x1xf32>
    %49 = tpu.reciprocal %48 {approx = true} : vector<2x16x1xf32> -> vector<2x16x1xf32>
    %50 = vector.broadcast %49 : vector<2x16x1xf32> to vector<2x16x16xf32>
    %51 = arith.mulf %46, %50 : vector<2x16x16xf32>
    %52 = arith.truncf %51 : vector<2x16x16xf32> to vector<2x16x16xbf16>
    %53 = arith.truncf %38 : vector<2x16x16xf32> to vector<2x16x16xbf16>
    "tpu.trace_start"() <{level = 10 : i32, message = "bqk,bkd->bqd"}> : () -> ()
    %cst_22 = arith.constant dense<0.000000e+00> : vector<2x16x16xf32>
    %54 = tpu.matmul %52, %53, %cst_22 {dimension_numbers = #tpu.dot_dimension_numbers<[2], [1], [1], [2], [0, 0, 0, 1, 1, 2], [0], [0]>} : vector<2x16x16xbf16>, vector<2x16x16xbf16>, vector<2x16x16xf32> -> vector<2x16x16xf32>
    "tpu.trace_stop"() : () -> ()
    %55 = vector.extract_strided_slice %16 {offsets = [0, 0, 32], sizes = [2, 16, 16], strides = [1, 1, 1]} : vector<2x16x192xf32> to vector<2x16x16xf32>
    %56 = vector.extract_strided_slice %16 {offsets = [0, 0, 96], sizes = [2, 16, 16], strides = [1, 1, 1]} : vector<2x16x192xf32> to vector<2x16x16xf32>
    %57 = vector.extract_strided_slice %16 {offsets = [0, 0, 160], sizes = [2, 16, 16], strides = [1, 1, 1]} : vector<2x16x192xf32> to vector<2x16x16xf32>
    %58 = arith.truncf %55 : vector<2x16x16xf32> to vector<2x16x16xbf16>
    %59 = arith.truncf %56 : vector<2x16x16xf32> to vector<2x16x16xbf16>
    "tpu.trace_start"() <{level = 10 : i32, message = "bqd,bkd->bqk"}> : () -> ()
    %cst_23 = arith.constant dense<0.000000e+00> : vector<2x16x16xf32>
    %60 = tpu.matmul %58, %59, %cst_23 {dimension_numbers = #tpu.dot_dimension_numbers<[2], [2], [1], [1], [0, 0, 0, 1, 1, 1], [0], [0]>} : vector<2x16x16xbf16>, vector<2x16x16xbf16>, vector<2x16x16xf32> -> vector<2x16x16xf32>
    "tpu.trace_stop"() : () -> ()
    %cst_24 = arith.constant dense<0xFF800000> : vector<2x16xf32>
    %61 = vector.multi_reduction <maximumf>, %60, %cst_24 [2] : vector<2x16x16xf32> to vector<2x16xf32>
    %62 = vector.shape_cast %61 : vector<2x16xf32> to vector<2x16x1xf32>
    %63 = vector.broadcast %62 : vector<2x16x1xf32> to vector<2x16x16xf32>
    %64 = arith.subf %60, %63 : vector<2x16x16xf32>
    %65 = math.exp %64 : vector<2x16x16xf32>
    %cst_25 = arith.constant dense<0.000000e+00> : vector<2x16xf32>
    %66 = vector.multi_reduction <add>, %65, %cst_25 [2] : vector<2x16x16xf32> to vector<2x16xf32>
    %67 = vector.shape_cast %66 : vector<2x16xf32> to vector<2x16x1xf32>
    %68 = tpu.reciprocal %67 {approx = true} : vector<2x16x1xf32> -> vector<2x16x1xf32>
    %69 = vector.broadcast %68 : vector<2x16x1xf32> to vector<2x16x16xf32>
    %70 = arith.mulf %65, %69 : vector<2x16x16xf32>
    %71 = arith.truncf %70 : vector<2x16x16xf32> to vector<2x16x16xbf16>
    %72 = arith.truncf %57 : vector<2x16x16xf32> to vector<2x16x16xbf16>
    "tpu.trace_start"() <{level = 10 : i32, message = "bqk,bkd->bqd"}> : () -> ()
    %cst_26 = arith.constant dense<0.000000e+00> : vector<2x16x16xf32>
    %73 = tpu.matmul %71, %72, %cst_26 {dimension_numbers = #tpu.dot_dimension_numbers<[2], [1], [1], [2], [0, 0, 0, 1, 1, 2], [0], [0]>} : vector<2x16x16xbf16>, vector<2x16x16xbf16>, vector<2x16x16xf32> -> vector<2x16x16xf32>
    "tpu.trace_stop"() : () -> ()
    %74 = vector.extract_strided_slice %16 {offsets = [0, 0, 48], sizes = [2, 16, 16], strides = [1, 1, 1]} : vector<2x16x192xf32> to vector<2x16x16xf32>
    %75 = vector.extract_strided_slice %16 {offsets = [0, 0, 112], sizes = [2, 16, 16], strides = [1, 1, 1]} : vector<2x16x192xf32> to vector<2x16x16xf32>
    %76 = vector.extract_strided_slice %16 {offsets = [0, 0, 176], sizes = [2, 16, 16], strides = [1, 1, 1]} : vector<2x16x192xf32> to vector<2x16x16xf32>
    %77 = arith.truncf %74 : vector<2x16x16xf32> to vector<2x16x16xbf16>
    %78 = arith.truncf %75 : vector<2x16x16xf32> to vector<2x16x16xbf16>
    "tpu.trace_start"() <{level = 10 : i32, message = "bqd,bkd->bqk"}> : () -> ()
    %cst_27 = arith.constant dense<0.000000e+00> : vector<2x16x16xf32>
    %79 = tpu.matmul %77, %78, %cst_27 {dimension_numbers = #tpu.dot_dimension_numbers<[2], [2], [1], [1], [0, 0, 0, 1, 1, 1], [0], [0]>} : vector<2x16x16xbf16>, vector<2x16x16xbf16>, vector<2x16x16xf32> -> vector<2x16x16xf32>
    "tpu.trace_stop"() : () -> ()
    %cst_28 = arith.constant dense<0xFF800000> : vector<2x16xf32>
    %80 = vector.multi_reduction <maximumf>, %79, %cst_28 [2] : vector<2x16x16xf32> to vector<2x16xf32>
    %81 = vector.shape_cast %80 : vector<2x16xf32> to vector<2x16x1xf32>
    %82 = vector.broadcast %81 : vector<2x16x1xf32> to vector<2x16x16xf32>
    %83 = arith.subf %79, %82 : vector<2x16x16xf32>
    %84 = math.exp %83 : vector<2x16x16xf32>
    %cst_29 = arith.constant dense<0.000000e+00> : vector<2x16xf32>
    %85 = vector.multi_reduction <add>, %84, %cst_29 [2] : vector<2x16x16xf32> to vector<2x16xf32>
    %86 = vector.shape_cast %85 : vector<2x16xf32> to vector<2x16x1xf32>
    %87 = tpu.reciprocal %86 {approx = true} : vector<2x16x1xf32> -> vector<2x16x1xf32>
    %88 = vector.broadcast %87 : vector<2x16x1xf32> to vector<2x16x16xf32>
    %89 = arith.mulf %84, %88 : vector<2x16x16xf32>
    %90 = arith.truncf %89 : vector<2x16x16xf32> to vector<2x16x16xbf16>
    %91 = arith.truncf %76 : vector<2x16x16xf32> to vector<2x16x16xbf16>
    "tpu.trace_start"() <{level = 10 : i32, message = "bqk,bkd->bqd"}> : () -> ()
    %cst_30 = arith.constant dense<0.000000e+00> : vector<2x16x16xf32>
    %92 = tpu.matmul %90, %91, %cst_30 {dimension_numbers = #tpu.dot_dimension_numbers<[2], [1], [1], [2], [0, 0, 0, 1, 1, 2], [0], [0]>} : vector<2x16x16xbf16>, vector<2x16x16xbf16>, vector<2x16x16xf32> -> vector<2x16x16xf32>
    "tpu.trace_stop"() : () -> ()
    %93 = tpu.concatenate %35, %54, %73, %92 in 2 : vector<2x16x16xf32>, vector<2x16x16xf32>, vector<2x16x16xf32>, vector<2x16x16xf32> -> vector<2x16x64xf32>
    %94 = vector.shape_cast %93 : vector<2x16x64xf32> to vector<32x64xf32>
    %c0_31 = arith.constant 0 : index
    %c0_32 = arith.constant 0 : index
    %c0_33 = arith.constant 0 : index
    %c0_34 = arith.constant 0 : index
    %95 = vector.load %arg6[%c0_31, %c0_32, %c0_33, %c0_34] : memref<2x3x64x64xbf16, #tpu.memory_space<vmem>>, vector<1x1x64x64xbf16>
    %96 = vector.shape_cast %95 : vector<1x1x64x64xbf16> to vector<64x64xbf16>
    %97 = arith.truncf %94 : vector<32x64xf32> to vector<32x64xbf16>
    %cst_35 = arith.constant dense<0.000000e+00> : vector<32x64xf32>
    %98 = tpu.matmul %97, %96, %cst_35 {dimension_numbers = #tpu.dot_dimension_numbers<[1], [0], [0], [1], [0, 0, 1, 1], [], []>} : vector<32x64xbf16>, vector<64x64xbf16>, vector<32x64xf32> -> vector<32x64xf32>
    %99 = vector.extract_strided_slice %7 {offsets = [0, 0], sizes = [1, 64], strides = [1, 1]} : vector<7x64xf32> to vector<1x64xf32>
    %100 = vector.broadcast %99 : vector<1x64xf32> to vector<32x64xf32>
    %101 = arith.addf %98, %100 : vector<32x64xf32>
    %102 = arith.addf %5, %101 : vector<32x64xf32>
    %103 = vector.extract_strided_slice %7 {offsets = [1, 0], sizes = [1, 64], strides = [1, 1]} : vector<7x64xf32> to vector<1x64xf32>
    %104 = vector.extract_strided_slice %7 {offsets = [2, 0], sizes = [1, 64], strides = [1, 1]} : vector<7x64xf32> to vector<1x64xf32>
    %cst_36 = arith.constant dense<0.000000e+00> : vector<32xf32>
    %105 = vector.multi_reduction <add>, %102, %cst_36 [1] : vector<32x64xf32> to vector<32xf32>
    %106 = vector.shape_cast %105 : vector<32xf32> to vector<32x1xf32>
    %cst_37 = arith.constant 6.400000e+01 : f32
    %107 = vector.broadcast %cst_37 : f32 to vector<32x1xf32>
    %108 = arith.divf %106, %107 : vector<32x1xf32>
    %109 = vector.broadcast %108 : vector<32x1xf32> to vector<32x64xf32>
    %110 = arith.subf %102, %109 : vector<32x64xf32>
    %111 = arith.mulf %110, %110 : vector<32x64xf32>
    %cst_38 = arith.constant dense<0.000000e+00> : vector<32xf32>
    %112 = vector.multi_reduction <add>, %111, %cst_38 [1] : vector<32x64xf32> to vector<32xf32>
    %113 = vector.shape_cast %112 : vector<32xf32> to vector<32x1xf32>
    %cst_39 = arith.constant 6.400000e+01 : f32
    %114 = vector.broadcast %cst_39 : f32 to vector<32x1xf32>
    %115 = arith.divf %113, %114 : vector<32x1xf32>
    %116 = vector.broadcast %108 : vector<32x1xf32> to vector<32x64xf32>
    %117 = arith.subf %102, %116 : vector<32x64xf32>
    %cst_40 = arith.constant 9.99999974E-6 : f32
    %118 = vector.broadcast %cst_40 : f32 to vector<32x1xf32>
    %119 = arith.addf %115, %118 : vector<32x1xf32>
    %120 = math.rsqrt %119 : vector<32x1xf32>
    %121 = vector.broadcast %120 : vector<32x1xf32> to vector<32x64xf32>
    %122 = arith.mulf %117, %121 : vector<32x64xf32>
    %123 = vector.broadcast %103 : vector<1x64xf32> to vector<32x64xf32>
    %124 = arith.mulf %122, %123 : vector<32x64xf32>
    %125 = vector.broadcast %104 : vector<1x64xf32> to vector<32x64xf32>
    %126 = arith.addf %124, %125 : vector<32x64xf32>
    %c0_41 = arith.constant 0 : index
    %c1 = arith.constant 1 : index
    %c0_42 = arith.constant 0 : index
    %c0_43 = arith.constant 0 : index
    %127 = vector.load %arg6[%c0_41, %c1, %c0_42, %c0_43] : memref<2x3x64x64xbf16, #tpu.memory_space<vmem>>, vector<1x1x64x64xbf16>
    %128 = vector.shape_cast %127 : vector<1x1x64x64xbf16> to vector<64x64xbf16>
    %129 = arith.truncf %126 : vector<32x64xf32> to vector<32x64xbf16>
    %cst_44 = arith.constant dense<0.000000e+00> : vector<32x64xf32>
    %130 = tpu.matmul %129, %128, %cst_44 {dimension_numbers = #tpu.dot_dimension_numbers<[1], [0], [0], [1], [0, 0, 1, 1], [], []>} : vector<32x64xbf16>, vector<64x64xbf16>, vector<32x64xf32> -> vector<32x64xf32>
    %131 = vector.extract_strided_slice %7 {offsets = [3, 0], sizes = [1, 64], strides = [1, 1]} : vector<7x64xf32> to vector<1x64xf32>
    %132 = vector.broadcast %131 : vector<1x64xf32> to vector<32x64xf32>
    %133 = arith.addf %130, %132 : vector<32x64xf32>
    %cst_45 = arith.constant 5.000000e-01 : f32
    %134 = vector.broadcast %cst_45 : f32 to vector<32x64xf32>
    %135 = arith.mulf %134, %133 : vector<32x64xf32>
    %cst_46 = arith.constant 4.471500e-02 : f32
    %136 = vector.broadcast %cst_46 : f32 to vector<32x64xf32>
    %137 = arith.mulf %136, %133 : vector<32x64xf32>
    %138 = arith.mulf %137, %133 : vector<32x64xf32>
    %139 = arith.mulf %138, %133 : vector<32x64xf32>
    %140 = arith.addf %133, %139 : vector<32x64xf32>
    %cst_47 = arith.constant 0.797884583 : f32
    %141 = vector.broadcast %cst_47 : f32 to vector<32x64xf32>
    %142 = arith.mulf %141, %140 : vector<32x64xf32>
    %143 = math.tanh %142 : vector<32x64xf32>
    %cst_48 = arith.constant 1.000000e+00 : f32
    %144 = vector.broadcast %cst_48 : f32 to vector<32x64xf32>
    %145 = arith.addf %144, %143 : vector<32x64xf32>
    %146 = arith.mulf %135, %145 : vector<32x64xf32>
    %c0_49 = arith.constant 0 : index
    %c2 = arith.constant 2 : index
    %c0_50 = arith.constant 0 : index
    %c0_51 = arith.constant 0 : index
    %147 = vector.load %arg6[%c0_49, %c2, %c0_50, %c0_51] : memref<2x3x64x64xbf16, #tpu.memory_space<vmem>>, vector<1x1x64x64xbf16>
    %148 = vector.shape_cast %147 : vector<1x1x64x64xbf16> to vector<64x64xbf16>
    %149 = arith.truncf %146 : vector<32x64xf32> to vector<32x64xbf16>
    %cst_52 = arith.constant dense<0.000000e+00> : vector<32x64xf32>
    %150 = tpu.matmul %149, %148, %cst_52 {dimension_numbers = #tpu.dot_dimension_numbers<[1], [0], [0], [1], [0, 0, 1, 1], [], []>} : vector<32x64xbf16>, vector<64x64xbf16>, vector<32x64xf32> -> vector<32x64xf32>
    %151 = vector.extract_strided_slice %7 {offsets = [4, 0], sizes = [1, 64], strides = [1, 1]} : vector<7x64xf32> to vector<1x64xf32>
    %152 = vector.broadcast %151 : vector<1x64xf32> to vector<32x64xf32>
    %153 = arith.addf %150, %152 : vector<32x64xf32>
    %154 = arith.addf %126, %153 : vector<32x64xf32>
    %155 = vector.extract_strided_slice %7 {offsets = [5, 0], sizes = [1, 64], strides = [1, 1]} : vector<7x64xf32> to vector<1x64xf32>
    %156 = vector.extract_strided_slice %7 {offsets = [6, 0], sizes = [1, 64], strides = [1, 1]} : vector<7x64xf32> to vector<1x64xf32>
    %cst_53 = arith.constant dense<0.000000e+00> : vector<32xf32>
    %157 = vector.multi_reduction <add>, %154, %cst_53 [1] : vector<32x64xf32> to vector<32xf32>
    %158 = vector.shape_cast %157 : vector<32xf32> to vector<32x1xf32>
    %cst_54 = arith.constant 6.400000e+01 : f32
    %159 = vector.broadcast %cst_54 : f32 to vector<32x1xf32>
    %160 = arith.divf %158, %159 : vector<32x1xf32>
    %161 = vector.broadcast %160 : vector<32x1xf32> to vector<32x64xf32>
    %162 = arith.subf %154, %161 : vector<32x64xf32>
    %163 = arith.mulf %162, %162 : vector<32x64xf32>
    %cst_55 = arith.constant dense<0.000000e+00> : vector<32xf32>
    %164 = vector.multi_reduction <add>, %163, %cst_55 [1] : vector<32x64xf32> to vector<32xf32>
    %165 = vector.shape_cast %164 : vector<32xf32> to vector<32x1xf32>
    %cst_56 = arith.constant 6.400000e+01 : f32
    %166 = vector.broadcast %cst_56 : f32 to vector<32x1xf32>
    %167 = arith.divf %165, %166 : vector<32x1xf32>
    %168 = vector.broadcast %160 : vector<32x1xf32> to vector<32x64xf32>
    %169 = arith.subf %154, %168 : vector<32x64xf32>
    %cst_57 = arith.constant 9.99999974E-6 : f32
    %170 = vector.broadcast %cst_57 : f32 to vector<32x1xf32>
    %171 = arith.addf %167, %170 : vector<32x1xf32>
    %172 = math.rsqrt %171 : vector<32x1xf32>
    %173 = vector.broadcast %172 : vector<32x1xf32> to vector<32x64xf32>
    %174 = arith.mulf %169, %173 : vector<32x64xf32>
    %175 = vector.broadcast %155 : vector<1x64xf32> to vector<32x64xf32>
    %176 = arith.mulf %174, %175 : vector<32x64xf32>
    %177 = vector.broadcast %156 : vector<1x64xf32> to vector<32x64xf32>
    %178 = arith.addf %176, %177 : vector<32x64xf32>
    %c1_58 = arith.constant 1 : index
    %c0_59 = arith.constant 0 : index
    %c0_60 = arith.constant 0 : index
    %179 = vector.load %arg7[%c1_58, %c0_59, %c0_60] : memref<2x7x64xf32, #tpu.memory_space<vmem>>, vector<1x7x64xf32>
    %180 = vector.shape_cast %179 : vector<1x7x64xf32> to vector<7x64xf32>
    %c1_61 = arith.constant 1 : index
    %c0_62 = arith.constant 0 : index
    %c0_63 = arith.constant 0 : index
    %181 = vector.load %arg4[%c1_61, %c0_62, %c0_63] : memref<2x64x192xbf16, #tpu.memory_space<vmem>>, vector<1x64x192xbf16>
    %182 = vector.shape_cast %181 : vector<1x64x192xbf16> to vector<64x192xbf16>
    %183 = arith.truncf %178 : vector<32x64xf32> to vector<32x64xbf16>
    %cst_64 = arith.constant dense<0.000000e+00> : vector<32x192xf32>
    %184 = tpu.matmul %183, %182, %cst_64 {dimension_numbers = #tpu.dot_dimension_numbers<[1], [0], [0], [1], [0, 0, 1, 1], [], []>} : vector<32x64xbf16>, vector<64x192xbf16>, vector<32x192xf32> -> vector<32x192xf32>
    %c1_65 = arith.constant 1 : index
    %c0_66 = arith.constant 0 : index
    %c0_67 = arith.constant 0 : index
    %185 = vector.load %arg5[%c1_65, %c0_66, %c0_67] : memref<2x1x192xf32, #tpu.memory_space<vmem>>, vector<1x1x192xf32>
    %186 = vector.shape_cast %185 : vector<1x1x192xf32> to vector<1x192xf32>
    %187 = vector.broadcast %186 : vector<1x192xf32> to vector<32x192xf32>
    %188 = arith.addf %184, %187 : vector<32x192xf32>
    %189 = vector.shape_cast %188 : vector<32x192xf32> to vector<2x16x192xf32>
    %190 = vector.extract_strided_slice %189 {offsets = [0, 0, 0], sizes = [2, 16, 16], strides = [1, 1, 1]} : vector<2x16x192xf32> to vector<2x16x16xf32>
    %191 = vector.extract_strided_slice %189 {offsets = [0, 0, 64], sizes = [2, 16, 16], strides = [1, 1, 1]} : vector<2x16x192xf32> to vector<2x16x16xf32>
    %192 = vector.extract_strided_slice %189 {offsets = [0, 0, 128], sizes = [2, 16, 16], strides = [1, 1, 1]} : vector<2x16x192xf32> to vector<2x16x16xf32>
    %193 = arith.truncf %190 : vector<2x16x16xf32> to vector<2x16x16xbf16>
    %194 = arith.truncf %191 : vector<2x16x16xf32> to vector<2x16x16xbf16>
    "tpu.trace_start"() <{level = 10 : i32, message = "bqd,bkd->bqk"}> : () -> ()
    %cst_68 = arith.constant dense<0.000000e+00> : vector<2x16x16xf32>
    %195 = tpu.matmul %193, %194, %cst_68 {dimension_numbers = #tpu.dot_dimension_numbers<[2], [2], [1], [1], [0, 0, 0, 1, 1, 1], [0], [0]>} : vector<2x16x16xbf16>, vector<2x16x16xbf16>, vector<2x16x16xf32> -> vector<2x16x16xf32>
    "tpu.trace_stop"() : () -> ()
    %cst_69 = arith.constant dense<0xFF800000> : vector<2x16xf32>
    %196 = vector.multi_reduction <maximumf>, %195, %cst_69 [2] : vector<2x16x16xf32> to vector<2x16xf32>
    %197 = vector.shape_cast %196 : vector<2x16xf32> to vector<2x16x1xf32>
    %198 = vector.broadcast %197 : vector<2x16x1xf32> to vector<2x16x16xf32>
    %199 = arith.subf %195, %198 : vector<2x16x16xf32>
    %200 = math.exp %199 : vector<2x16x16xf32>
    %cst_70 = arith.constant dense<0.000000e+00> : vector<2x16xf32>
    %201 = vector.multi_reduction <add>, %200, %cst_70 [2] : vector<2x16x16xf32> to vector<2x16xf32>
    %202 = vector.shape_cast %201 : vector<2x16xf32> to vector<2x16x1xf32>
    %203 = tpu.reciprocal %202 {approx = true} : vector<2x16x1xf32> -> vector<2x16x1xf32>
    %204 = vector.broadcast %203 : vector<2x16x1xf32> to vector<2x16x16xf32>
    %205 = arith.mulf %200, %204 : vector<2x16x16xf32>
    %206 = arith.truncf %205 : vector<2x16x16xf32> to vector<2x16x16xbf16>
    %207 = arith.truncf %192 : vector<2x16x16xf32> to vector<2x16x16xbf16>
    "tpu.trace_start"() <{level = 10 : i32, message = "bqk,bkd->bqd"}> : () -> ()
    %cst_71 = arith.constant dense<0.000000e+00> : vector<2x16x16xf32>
    %208 = tpu.matmul %206, %207, %cst_71 {dimension_numbers = #tpu.dot_dimension_numbers<[2], [1], [1], [2], [0, 0, 0, 1, 1, 2], [0], [0]>} : vector<2x16x16xbf16>, vector<2x16x16xbf16>, vector<2x16x16xf32> -> vector<2x16x16xf32>
    "tpu.trace_stop"() : () -> ()
    %209 = vector.extract_strided_slice %189 {offsets = [0, 0, 16], sizes = [2, 16, 16], strides = [1, 1, 1]} : vector<2x16x192xf32> to vector<2x16x16xf32>
    %210 = vector.extract_strided_slice %189 {offsets = [0, 0, 80], sizes = [2, 16, 16], strides = [1, 1, 1]} : vector<2x16x192xf32> to vector<2x16x16xf32>
    %211 = vector.extract_strided_slice %189 {offsets = [0, 0, 144], sizes = [2, 16, 16], strides = [1, 1, 1]} : vector<2x16x192xf32> to vector<2x16x16xf32>
    %212 = arith.truncf %209 : vector<2x16x16xf32> to vector<2x16x16xbf16>
    %213 = arith.truncf %210 : vector<2x16x16xf32> to vector<2x16x16xbf16>
    "tpu.trace_start"() <{level = 10 : i32, message = "bqd,bkd->bqk"}> : () -> ()
    %cst_72 = arith.constant dense<0.000000e+00> : vector<2x16x16xf32>
    %214 = tpu.matmul %212, %213, %cst_72 {dimension_numbers = #tpu.dot_dimension_numbers<[2], [2], [1], [1], [0, 0, 0, 1, 1, 1], [0], [0]>} : vector<2x16x16xbf16>, vector<2x16x16xbf16>, vector<2x16x16xf32> -> vector<2x16x16xf32>
    "tpu.trace_stop"() : () -> ()
    %cst_73 = arith.constant dense<0xFF800000> : vector<2x16xf32>
    %215 = vector.multi_reduction <maximumf>, %214, %cst_73 [2] : vector<2x16x16xf32> to vector<2x16xf32>
    %216 = vector.shape_cast %215 : vector<2x16xf32> to vector<2x16x1xf32>
    %217 = vector.broadcast %216 : vector<2x16x1xf32> to vector<2x16x16xf32>
    %218 = arith.subf %214, %217 : vector<2x16x16xf32>
    %219 = math.exp %218 : vector<2x16x16xf32>
    %cst_74 = arith.constant dense<0.000000e+00> : vector<2x16xf32>
    %220 = vector.multi_reduction <add>, %219, %cst_74 [2] : vector<2x16x16xf32> to vector<2x16xf32>
    %221 = vector.shape_cast %220 : vector<2x16xf32> to vector<2x16x1xf32>
    %222 = tpu.reciprocal %221 {approx = true} : vector<2x16x1xf32> -> vector<2x16x1xf32>
    %223 = vector.broadcast %222 : vector<2x16x1xf32> to vector<2x16x16xf32>
    %224 = arith.mulf %219, %223 : vector<2x16x16xf32>
    %225 = arith.truncf %224 : vector<2x16x16xf32> to vector<2x16x16xbf16>
    %226 = arith.truncf %211 : vector<2x16x16xf32> to vector<2x16x16xbf16>
    "tpu.trace_start"() <{level = 10 : i32, message = "bqk,bkd->bqd"}> : () -> ()
    %cst_75 = arith.constant dense<0.000000e+00> : vector<2x16x16xf32>
    %227 = tpu.matmul %225, %226, %cst_75 {dimension_numbers = #tpu.dot_dimension_numbers<[2], [1], [1], [2], [0, 0, 0, 1, 1, 2], [0], [0]>} : vector<2x16x16xbf16>, vector<2x16x16xbf16>, vector<2x16x16xf32> -> vector<2x16x16xf32>
    "tpu.trace_stop"() : () -> ()
    %228 = vector.extract_strided_slice %189 {offsets = [0, 0, 32], sizes = [2, 16, 16], strides = [1, 1, 1]} : vector<2x16x192xf32> to vector<2x16x16xf32>
    %229 = vector.extract_strided_slice %189 {offsets = [0, 0, 96], sizes = [2, 16, 16], strides = [1, 1, 1]} : vector<2x16x192xf32> to vector<2x16x16xf32>
    %230 = vector.extract_strided_slice %189 {offsets = [0, 0, 160], sizes = [2, 16, 16], strides = [1, 1, 1]} : vector<2x16x192xf32> to vector<2x16x16xf32>
    %231 = arith.truncf %228 : vector<2x16x16xf32> to vector<2x16x16xbf16>
    %232 = arith.truncf %229 : vector<2x16x16xf32> to vector<2x16x16xbf16>
    "tpu.trace_start"() <{level = 10 : i32, message = "bqd,bkd->bqk"}> : () -> ()
    %cst_76 = arith.constant dense<0.000000e+00> : vector<2x16x16xf32>
    %233 = tpu.matmul %231, %232, %cst_76 {dimension_numbers = #tpu.dot_dimension_numbers<[2], [2], [1], [1], [0, 0, 0, 1, 1, 1], [0], [0]>} : vector<2x16x16xbf16>, vector<2x16x16xbf16>, vector<2x16x16xf32> -> vector<2x16x16xf32>
    "tpu.trace_stop"() : () -> ()
    %cst_77 = arith.constant dense<0xFF800000> : vector<2x16xf32>
    %234 = vector.multi_reduction <maximumf>, %233, %cst_77 [2] : vector<2x16x16xf32> to vector<2x16xf32>
    %235 = vector.shape_cast %234 : vector<2x16xf32> to vector<2x16x1xf32>
    %236 = vector.broadcast %235 : vector<2x16x1xf32> to vector<2x16x16xf32>
    %237 = arith.subf %233, %236 : vector<2x16x16xf32>
    %238 = math.exp %237 : vector<2x16x16xf32>
    %cst_78 = arith.constant dense<0.000000e+00> : vector<2x16xf32>
    %239 = vector.multi_reduction <add>, %238, %cst_78 [2] : vector<2x16x16xf32> to vector<2x16xf32>
    %240 = vector.shape_cast %239 : vector<2x16xf32> to vector<2x16x1xf32>
    %241 = tpu.reciprocal %240 {approx = true} : vector<2x16x1xf32> -> vector<2x16x1xf32>
    %242 = vector.broadcast %241 : vector<2x16x1xf32> to vector<2x16x16xf32>
    %243 = arith.mulf %238, %242 : vector<2x16x16xf32>
    %244 = arith.truncf %243 : vector<2x16x16xf32> to vector<2x16x16xbf16>
    %245 = arith.truncf %230 : vector<2x16x16xf32> to vector<2x16x16xbf16>
    "tpu.trace_start"() <{level = 10 : i32, message = "bqk,bkd->bqd"}> : () -> ()
    %cst_79 = arith.constant dense<0.000000e+00> : vector<2x16x16xf32>
    %246 = tpu.matmul %244, %245, %cst_79 {dimension_numbers = #tpu.dot_dimension_numbers<[2], [1], [1], [2], [0, 0, 0, 1, 1, 2], [0], [0]>} : vector<2x16x16xbf16>, vector<2x16x16xbf16>, vector<2x16x16xf32> -> vector<2x16x16xf32>
    "tpu.trace_stop"() : () -> ()
    %247 = vector.extract_strided_slice %189 {offsets = [0, 0, 48], sizes = [2, 16, 16], strides = [1, 1, 1]} : vector<2x16x192xf32> to vector<2x16x16xf32>
    %248 = vector.extract_strided_slice %189 {offsets = [0, 0, 112], sizes = [2, 16, 16], strides = [1, 1, 1]} : vector<2x16x192xf32> to vector<2x16x16xf32>
    %249 = vector.extract_strided_slice %189 {offsets = [0, 0, 176], sizes = [2, 16, 16], strides = [1, 1, 1]} : vector<2x16x192xf32> to vector<2x16x16xf32>
    %250 = arith.truncf %247 : vector<2x16x16xf32> to vector<2x16x16xbf16>
    %251 = arith.truncf %248 : vector<2x16x16xf32> to vector<2x16x16xbf16>
    "tpu.trace_start"() <{level = 10 : i32, message = "bqd,bkd->bqk"}> : () -> ()
    %cst_80 = arith.constant dense<0.000000e+00> : vector<2x16x16xf32>
    %252 = tpu.matmul %250, %251, %cst_80 {dimension_numbers = #tpu.dot_dimension_numbers<[2], [2], [1], [1], [0, 0, 0, 1, 1, 1], [0], [0]>} : vector<2x16x16xbf16>, vector<2x16x16xbf16>, vector<2x16x16xf32> -> vector<2x16x16xf32>
    "tpu.trace_stop"() : () -> ()
    %cst_81 = arith.constant dense<0xFF800000> : vector<2x16xf32>
    %253 = vector.multi_reduction <maximumf>, %252, %cst_81 [2] : vector<2x16x16xf32> to vector<2x16xf32>
    %254 = vector.shape_cast %253 : vector<2x16xf32> to vector<2x16x1xf32>
    %255 = vector.broadcast %254 : vector<2x16x1xf32> to vector<2x16x16xf32>
    %256 = arith.subf %252, %255 : vector<2x16x16xf32>
    %257 = math.exp %256 : vector<2x16x16xf32>
    %cst_82 = arith.constant dense<0.000000e+00> : vector<2x16xf32>
    %258 = vector.multi_reduction <add>, %257, %cst_82 [2] : vector<2x16x16xf32> to vector<2x16xf32>
    %259 = vector.shape_cast %258 : vector<2x16xf32> to vector<2x16x1xf32>
    %260 = tpu.reciprocal %259 {approx = true} : vector<2x16x1xf32> -> vector<2x16x1xf32>
    %261 = vector.broadcast %260 : vector<2x16x1xf32> to vector<2x16x16xf32>
    %262 = arith.mulf %257, %261 : vector<2x16x16xf32>
    %263 = arith.truncf %262 : vector<2x16x16xf32> to vector<2x16x16xbf16>
    %264 = arith.truncf %249 : vector<2x16x16xf32> to vector<2x16x16xbf16>
    "tpu.trace_start"() <{level = 10 : i32, message = "bqk,bkd->bqd"}> : () -> ()
    %cst_83 = arith.constant dense<0.000000e+00> : vector<2x16x16xf32>
    %265 = tpu.matmul %263, %264, %cst_83 {dimension_numbers = #tpu.dot_dimension_numbers<[2], [1], [1], [2], [0, 0, 0, 1, 1, 2], [0], [0]>} : vector<2x16x16xbf16>, vector<2x16x16xbf16>, vector<2x16x16xf32> -> vector<2x16x16xf32>
    "tpu.trace_stop"() : () -> ()
    %266 = tpu.concatenate %208, %227, %246, %265 in 2 : vector<2x16x16xf32>, vector<2x16x16xf32>, vector<2x16x16xf32>, vector<2x16x16xf32> -> vector<2x16x64xf32>
    %267 = vector.shape_cast %266 : vector<2x16x64xf32> to vector<32x64xf32>
    %c1_84 = arith.constant 1 : index
    %c0_85 = arith.constant 0 : index
    %c0_86 = arith.constant 0 : index
    %c0_87 = arith.constant 0 : index
    %268 = vector.load %arg6[%c1_84, %c0_85, %c0_86, %c0_87] : memref<2x3x64x64xbf16, #tpu.memory_space<vmem>>, vector<1x1x64x64xbf16>
    %269 = vector.shape_cast %268 : vector<1x1x64x64xbf16> to vector<64x64xbf16>
    %270 = arith.truncf %267 : vector<32x64xf32> to vector<32x64xbf16>
    %cst_88 = arith.constant dense<0.000000e+00> : vector<32x64xf32>
    %271 = tpu.matmul %270, %269, %cst_88 {dimension_numbers = #tpu.dot_dimension_numbers<[1], [0], [0], [1], [0, 0, 1, 1], [], []>} : vector<32x64xbf16>, vector<64x64xbf16>, vector<32x64xf32> -> vector<32x64xf32>
    %272 = vector.extract_strided_slice %180 {offsets = [0, 0], sizes = [1, 64], strides = [1, 1]} : vector<7x64xf32> to vector<1x64xf32>
    %273 = vector.broadcast %272 : vector<1x64xf32> to vector<32x64xf32>
    %274 = arith.addf %271, %273 : vector<32x64xf32>
    %275 = arith.addf %178, %274 : vector<32x64xf32>
    %276 = vector.extract_strided_slice %180 {offsets = [1, 0], sizes = [1, 64], strides = [1, 1]} : vector<7x64xf32> to vector<1x64xf32>
    %277 = vector.extract_strided_slice %180 {offsets = [2, 0], sizes = [1, 64], strides = [1, 1]} : vector<7x64xf32> to vector<1x64xf32>
    %cst_89 = arith.constant dense<0.000000e+00> : vector<32xf32>
    %278 = vector.multi_reduction <add>, %275, %cst_89 [1] : vector<32x64xf32> to vector<32xf32>
    %279 = vector.shape_cast %278 : vector<32xf32> to vector<32x1xf32>
    %cst_90 = arith.constant 6.400000e+01 : f32
    %280 = vector.broadcast %cst_90 : f32 to vector<32x1xf32>
    %281 = arith.divf %279, %280 : vector<32x1xf32>
    %282 = vector.broadcast %281 : vector<32x1xf32> to vector<32x64xf32>
    %283 = arith.subf %275, %282 : vector<32x64xf32>
    %284 = arith.mulf %283, %283 : vector<32x64xf32>
    %cst_91 = arith.constant dense<0.000000e+00> : vector<32xf32>
    %285 = vector.multi_reduction <add>, %284, %cst_91 [1] : vector<32x64xf32> to vector<32xf32>
    %286 = vector.shape_cast %285 : vector<32xf32> to vector<32x1xf32>
    %cst_92 = arith.constant 6.400000e+01 : f32
    %287 = vector.broadcast %cst_92 : f32 to vector<32x1xf32>
    %288 = arith.divf %286, %287 : vector<32x1xf32>
    %289 = vector.broadcast %281 : vector<32x1xf32> to vector<32x64xf32>
    %290 = arith.subf %275, %289 : vector<32x64xf32>
    %cst_93 = arith.constant 9.99999974E-6 : f32
    %291 = vector.broadcast %cst_93 : f32 to vector<32x1xf32>
    %292 = arith.addf %288, %291 : vector<32x1xf32>
    %293 = math.rsqrt %292 : vector<32x1xf32>
    %294 = vector.broadcast %293 : vector<32x1xf32> to vector<32x64xf32>
    %295 = arith.mulf %290, %294 : vector<32x64xf32>
    %296 = vector.broadcast %276 : vector<1x64xf32> to vector<32x64xf32>
    %297 = arith.mulf %295, %296 : vector<32x64xf32>
    %298 = vector.broadcast %277 : vector<1x64xf32> to vector<32x64xf32>
    %299 = arith.addf %297, %298 : vector<32x64xf32>
    %c1_94 = arith.constant 1 : index
    %c1_95 = arith.constant 1 : index
    %c0_96 = arith.constant 0 : index
    %c0_97 = arith.constant 0 : index
    %300 = vector.load %arg6[%c1_94, %c1_95, %c0_96, %c0_97] : memref<2x3x64x64xbf16, #tpu.memory_space<vmem>>, vector<1x1x64x64xbf16>
    %301 = vector.shape_cast %300 : vector<1x1x64x64xbf16> to vector<64x64xbf16>
    %302 = arith.truncf %299 : vector<32x64xf32> to vector<32x64xbf16>
    %cst_98 = arith.constant dense<0.000000e+00> : vector<32x64xf32>
    %303 = tpu.matmul %302, %301, %cst_98 {dimension_numbers = #tpu.dot_dimension_numbers<[1], [0], [0], [1], [0, 0, 1, 1], [], []>} : vector<32x64xbf16>, vector<64x64xbf16>, vector<32x64xf32> -> vector<32x64xf32>
    %304 = vector.extract_strided_slice %180 {offsets = [3, 0], sizes = [1, 64], strides = [1, 1]} : vector<7x64xf32> to vector<1x64xf32>
    %305 = vector.broadcast %304 : vector<1x64xf32> to vector<32x64xf32>
    %306 = arith.addf %303, %305 : vector<32x64xf32>
    %cst_99 = arith.constant 5.000000e-01 : f32
    %307 = vector.broadcast %cst_99 : f32 to vector<32x64xf32>
    %308 = arith.mulf %307, %306 : vector<32x64xf32>
    %cst_100 = arith.constant 4.471500e-02 : f32
    %309 = vector.broadcast %cst_100 : f32 to vector<32x64xf32>
    %310 = arith.mulf %309, %306 : vector<32x64xf32>
    %311 = arith.mulf %310, %306 : vector<32x64xf32>
    %312 = arith.mulf %311, %306 : vector<32x64xf32>
    %313 = arith.addf %306, %312 : vector<32x64xf32>
    %cst_101 = arith.constant 0.797884583 : f32
    %314 = vector.broadcast %cst_101 : f32 to vector<32x64xf32>
    %315 = arith.mulf %314, %313 : vector<32x64xf32>
    %316 = math.tanh %315 : vector<32x64xf32>
    %cst_102 = arith.constant 1.000000e+00 : f32
    %317 = vector.broadcast %cst_102 : f32 to vector<32x64xf32>
    %318 = arith.addf %317, %316 : vector<32x64xf32>
    %319 = arith.mulf %308, %318 : vector<32x64xf32>
    %c1_103 = arith.constant 1 : index
    %c2_104 = arith.constant 2 : index
    %c0_105 = arith.constant 0 : index
    %c0_106 = arith.constant 0 : index
    %320 = vector.load %arg6[%c1_103, %c2_104, %c0_105, %c0_106] : memref<2x3x64x64xbf16, #tpu.memory_space<vmem>>, vector<1x1x64x64xbf16>
    %321 = vector.shape_cast %320 : vector<1x1x64x64xbf16> to vector<64x64xbf16>
    %322 = arith.truncf %319 : vector<32x64xf32> to vector<32x64xbf16>
    %cst_107 = arith.constant dense<0.000000e+00> : vector<32x64xf32>
    %323 = tpu.matmul %322, %321, %cst_107 {dimension_numbers = #tpu.dot_dimension_numbers<[1], [0], [0], [1], [0, 0, 1, 1], [], []>} : vector<32x64xbf16>, vector<64x64xbf16>, vector<32x64xf32> -> vector<32x64xf32>
    %324 = vector.extract_strided_slice %180 {offsets = [4, 0], sizes = [1, 64], strides = [1, 1]} : vector<7x64xf32> to vector<1x64xf32>
    %325 = vector.broadcast %324 : vector<1x64xf32> to vector<32x64xf32>
    %326 = arith.addf %323, %325 : vector<32x64xf32>
    %327 = arith.addf %299, %326 : vector<32x64xf32>
    %328 = vector.extract_strided_slice %180 {offsets = [5, 0], sizes = [1, 64], strides = [1, 1]} : vector<7x64xf32> to vector<1x64xf32>
    %329 = vector.extract_strided_slice %180 {offsets = [6, 0], sizes = [1, 64], strides = [1, 1]} : vector<7x64xf32> to vector<1x64xf32>
    %cst_108 = arith.constant dense<0.000000e+00> : vector<32xf32>
    %330 = vector.multi_reduction <add>, %327, %cst_108 [1] : vector<32x64xf32> to vector<32xf32>
    %331 = vector.shape_cast %330 : vector<32xf32> to vector<32x1xf32>
    %cst_109 = arith.constant 6.400000e+01 : f32
    %332 = vector.broadcast %cst_109 : f32 to vector<32x1xf32>
    %333 = arith.divf %331, %332 : vector<32x1xf32>
    %334 = vector.broadcast %333 : vector<32x1xf32> to vector<32x64xf32>
    %335 = arith.subf %327, %334 : vector<32x64xf32>
    %336 = arith.mulf %335, %335 : vector<32x64xf32>
    %cst_110 = arith.constant dense<0.000000e+00> : vector<32xf32>
    %337 = vector.multi_reduction <add>, %336, %cst_110 [1] : vector<32x64xf32> to vector<32xf32>
    %338 = vector.shape_cast %337 : vector<32xf32> to vector<32x1xf32>
    %cst_111 = arith.constant 6.400000e+01 : f32
    %339 = vector.broadcast %cst_111 : f32 to vector<32x1xf32>
    %340 = arith.divf %338, %339 : vector<32x1xf32>
    %341 = vector.broadcast %333 : vector<32x1xf32> to vector<32x64xf32>
    %342 = arith.subf %327, %341 : vector<32x64xf32>
    %cst_112 = arith.constant 9.99999974E-6 : f32
    %343 = vector.broadcast %cst_112 : f32 to vector<32x1xf32>
    %344 = arith.addf %340, %343 : vector<32x1xf32>
    %345 = math.rsqrt %344 : vector<32x1xf32>
    %346 = vector.broadcast %345 : vector<32x1xf32> to vector<32x64xf32>
    %347 = arith.mulf %342, %346 : vector<32x64xf32>
    %348 = vector.broadcast %328 : vector<1x64xf32> to vector<32x64xf32>
    %349 = arith.mulf %347, %348 : vector<32x64xf32>
    %350 = vector.broadcast %329 : vector<1x64xf32> to vector<32x64xf32>
    %351 = arith.addf %349, %350 : vector<32x64xf32>
    %352 = tpu.iota {dimensions = array<i32: 0>} : vector<2x32xi32>
    %353 = tpu.iota {dimensions = array<i32: 1>} : vector<2x32xi32>
    %c16_i32 = arith.constant 16 : i32
    %354 = vector.broadcast %c16_i32 : i32 to vector<2x32xi32>
    %355 = arith.muli %352, %354 : vector<2x32xi32>
    %356 = arith.cmpi eq, %353, %355 : vector<2x32xi32>
    %357 = arith.extui %356 : vector<2x32xi1> to vector<2x32xi32>
    %358 = arith.sitofp %357 : vector<2x32xi32> to vector<2x32xf32>
    %359 = arith.truncf %358 : vector<2x32xf32> to vector<2x32xbf16>
    %360 = arith.truncf %351 : vector<32x64xf32> to vector<32x64xbf16>
    %cst_113 = arith.constant dense<0.000000e+00> : vector<2x64xf32>
    %361 = tpu.matmul %359, %360, %cst_113 {dimension_numbers = #tpu.dot_dimension_numbers<[1], [0], [0], [1], [0, 0, 1, 1], [], []>} : vector<2x32xbf16>, vector<32x64xbf16>, vector<2x64xf32> -> vector<2x64xf32>
    %c0_114 = arith.constant 0 : index
    %c0_115 = arith.constant 0 : index
    %362 = vector.load %arg8[%c0_114, %c0_115] : memref<64x64xbf16, #tpu.memory_space<vmem>>, vector<64x64xbf16>
    %363 = arith.truncf %361 : vector<2x64xf32> to vector<2x64xbf16>
    %cst_116 = arith.constant dense<0.000000e+00> : vector<2x64xf32>
    %364 = tpu.matmul %363, %362, %cst_116 {dimension_numbers = #tpu.dot_dimension_numbers<[1], [0], [0], [1], [0, 0, 1, 1], [], []>} : vector<2x64xbf16>, vector<64x64xbf16>, vector<2x64xf32> -> vector<2x64xf32>
    %c0_117 = arith.constant 0 : index
    %c0_118 = arith.constant 0 : index
    %365 = vector.load %arg9[%c0_117, %c0_118] : memref<1x64xf32, #tpu.memory_space<vmem>>, vector<1x64xf32>
    %366 = vector.broadcast %365 : vector<1x64xf32> to vector<2x64xf32>
    %367 = arith.addf %364, %366 : vector<2x64xf32>
    %cst_119 = arith.constant 5.000000e-01 : f32
    %368 = vector.broadcast %cst_119 : f32 to vector<2x64xf32>
    %369 = arith.mulf %368, %367 : vector<2x64xf32>
    %cst_120 = arith.constant 4.471500e-02 : f32
    %370 = vector.broadcast %cst_120 : f32 to vector<2x64xf32>
    %371 = arith.mulf %370, %367 : vector<2x64xf32>
    %372 = arith.mulf %371, %367 : vector<2x64xf32>
    %373 = arith.mulf %372, %367 : vector<2x64xf32>
    %374 = arith.addf %367, %373 : vector<2x64xf32>
    %cst_121 = arith.constant 0.797884583 : f32
    %375 = vector.broadcast %cst_121 : f32 to vector<2x64xf32>
    %376 = arith.mulf %375, %374 : vector<2x64xf32>
    %377 = math.tanh %376 : vector<2x64xf32>
    %cst_122 = arith.constant 1.000000e+00 : f32
    %378 = vector.broadcast %cst_122 : f32 to vector<2x64xf32>
    %379 = arith.addf %378, %377 : vector<2x64xf32>
    %380 = arith.mulf %369, %379 : vector<2x64xf32>
    %c0_123 = arith.constant 0 : index
    %c0_124 = arith.constant 0 : index
    %381 = vector.load %arg10[%c0_123, %c0_124] : memref<64x32xbf16, #tpu.memory_space<vmem>>, vector<64x32xbf16>
    %382 = arith.truncf %380 : vector<2x64xf32> to vector<2x64xbf16>
    %cst_125 = arith.constant dense<0.000000e+00> : vector<2x32xf32>
    %383 = tpu.matmul %382, %381, %cst_125 {dimension_numbers = #tpu.dot_dimension_numbers<[1], [0], [0], [1], [0, 0, 1, 1], [], []>} : vector<2x64xbf16>, vector<64x32xbf16>, vector<2x32xf32> -> vector<2x32xf32>
    %c0_126 = arith.constant 0 : index
    %c0_127 = arith.constant 0 : index
    %384 = vector.load %arg11[%c0_126, %c0_127] : memref<1x32xf32, #tpu.memory_space<vmem>>, vector<1x32xf32>
    %385 = vector.broadcast %384 : vector<1x32xf32> to vector<2x32xf32>
    %386 = arith.addf %383, %385 : vector<2x32xf32>
    %cst_128 = arith.constant 5.000000e-01 : f32
    %387 = vector.broadcast %cst_128 : f32 to vector<2x32xf32>
    %388 = arith.mulf %387, %386 : vector<2x32xf32>
    %cst_129 = arith.constant 4.471500e-02 : f32
    %389 = vector.broadcast %cst_129 : f32 to vector<2x32xf32>
    %390 = arith.mulf %389, %386 : vector<2x32xf32>
    %391 = arith.mulf %390, %386 : vector<2x32xf32>
    %392 = arith.mulf %391, %386 : vector<2x32xf32>
    %393 = arith.addf %386, %392 : vector<2x32xf32>
    %cst_130 = arith.constant 0.797884583 : f32
    %394 = vector.broadcast %cst_130 : f32 to vector<2x32xf32>
    %395 = arith.mulf %394, %393 : vector<2x32xf32>
    %396 = math.tanh %395 : vector<2x32xf32>
    %cst_131 = arith.constant 1.000000e+00 : f32
    %397 = vector.broadcast %cst_131 : f32 to vector<2x32xf32>
    %398 = arith.addf %397, %396 : vector<2x32xf32>
    %399 = arith.mulf %388, %398 : vector<2x32xf32>
    %c0_132 = arith.constant 0 : index
    %c0_133 = arith.constant 0 : index
    %400 = vector.load %arg12[%c0_132, %c0_133] : memref<32x128xbf16, #tpu.memory_space<vmem>>, vector<32x128xbf16>
    %401 = arith.truncf %399 : vector<2x32xf32> to vector<2x32xbf16>
    %cst_134 = arith.constant dense<0.000000e+00> : vector<2x128xf32>
    %402 = tpu.matmul %401, %400, %cst_134 {dimension_numbers = #tpu.dot_dimension_numbers<[1], [0], [0], [1], [0, 0, 1, 1], [], []>} : vector<2x32xbf16>, vector<32x128xbf16>, vector<2x128xf32> -> vector<2x128xf32>
    %c0_135 = arith.constant 0 : index
    %c0_136 = arith.constant 0 : index
    %403 = vector.load %arg13[%c0_135, %c0_136] : memref<1x128xf32, #tpu.memory_space<vmem>>, vector<1x128xf32>
    %404 = vector.broadcast %403 : vector<1x128xf32> to vector<2x128xf32>
    %405 = arith.addf %402, %404 : vector<2x128xf32>
    %c0_137 = arith.constant 0 : index
    %c0_138 = arith.constant 0 : index
    %c0_139 = arith.constant 0 : index
    %406 = vector.load %arg14[%c0_137, %c0_138, %c0_139] : memref<1x2x128xf32, #tpu.memory_space<vmem>>, vector<1x2x128xf32>
    %407 = vector.shape_cast %406 : vector<1x2x128xf32> to vector<2x128xf32>
    %408 = vector.shape_cast %405 : vector<2x128xf32> to vector<1x2x128xf32>
    tpu.vector_store %arg14[%c0_137, %c0_138, %c0_139], %408 {strides = array<i32>} : memref<1x2x128xf32, #tpu.memory_space<vmem>>, vector<1x2x128xf32>,
    return
  }
  func.func @transform_0(%arg0: i32) -> (i32, i32) {
    %c0_i32 = arith.constant 0 : i32
    %c0_i32_0 = arith.constant 0 : i32
    return %arg0, %c0_i32 : i32, i32
  }
  func.func @transform_1(%arg0: i32) -> (i32, i32) {
    %c0_i32 = arith.constant 0 : i32
    %c0_i32_0 = arith.constant 0 : i32
    %c0_i32_1 = arith.constant 0 : i32
    return %c0_i32, %c0_i32_0 : i32, i32
  }
  func.func @transform_2(%arg0: i32) -> (i32, i32) {
    %c0_i32 = arith.constant 0 : i32
    %c0_i32_0 = arith.constant 0 : i32
    %c0_i32_1 = arith.constant 0 : i32
    return %c0_i32, %c0_i32_0 : i32, i32
  }
  func.func @transform_3(%arg0: i32) -> (i32, i32, i32) {
    %c0_i32 = arith.constant 0 : i32
    %c0_i32_0 = arith.constant 0 : i32
    %c0_i32_1 = arith.constant 0 : i32
    %c0_i32_2 = arith.constant 0 : i32
    return %c0_i32, %c0_i32_0, %c0_i32_1 : i32, i32, i32
  }
  func.func @transform_4(%arg0: i32) -> (i32, i32, i32) {
    %c0_i32 = arith.constant 0 : i32
    %c0_i32_0 = arith.constant 0 : i32
    %c0_i32_1 = arith.constant 0 : i32
    %c0_i32_2 = arith.constant 0 : i32
    return %c0_i32, %c0_i32_0, %c0_i32_1 : i32, i32, i32
  }
  func.func @transform_5(%arg0: i32) -> (i32, i32, i32, i32) {
    %c0_i32 = arith.constant 0 : i32
    %c0_i32_0 = arith.constant 0 : i32
    %c0_i32_1 = arith.constant 0 : i32
    %c0_i32_2 = arith.constant 0 : i32
    %c0_i32_3 = arith.constant 0 : i32
    return %c0_i32, %c0_i32_0, %c0_i32_1, %c0_i32_2 : i32, i32, i32, i32
  }
  func.func @transform_6(%arg0: i32) -> (i32, i32, i32) {
    %c0_i32 = arith.constant 0 : i32
    %c0_i32_0 = arith.constant 0 : i32
    %c0_i32_1 = arith.constant 0 : i32
    %c0_i32_2 = arith.constant 0 : i32
    return %c0_i32, %c0_i32_0, %c0_i32_1 : i32, i32, i32
  }
  func.func @transform_7(%arg0: i32) -> (i32, i32) {
    %c0_i32 = arith.constant 0 : i32
    %c0_i32_0 = arith.constant 0 : i32
    %c0_i32_1 = arith.constant 0 : i32
    return %c0_i32, %c0_i32_0 : i32, i32
  }
  func.func @transform_8(%arg0: i32) -> (i32, i32) {
    %c0_i32 = arith.constant 0 : i32
    %c0_i32_0 = arith.constant 0 : i32
    %c0_i32_1 = arith.constant 0 : i32
    return %c0_i32, %c0_i32_0 : i32, i32
  }
  func.func @transform_9(%arg0: i32) -> (i32, i32) {
    %c0_i32 = arith.constant 0 : i32
    %c0_i32_0 = arith.constant 0 : i32
    %c0_i32_1 = arith.constant 0 : i32
    return %c0_i32, %c0_i32_0 : i32, i32
  }
  func.func @transform_10(%arg0: i32) -> (i32, i32) {
    %c0_i32 = arith.constant 0 : i32
    %c0_i32_0 = arith.constant 0 : i32
    %c0_i32_1 = arith.constant 0 : i32
    return %c0_i32, %c0_i32_0 : i32, i32
  }
  func.func @transform_11(%arg0: i32) -> (i32, i32) {
    %c0_i32 = arith.constant 0 : i32
    %c0_i32_0 = arith.constant 0 : i32
    %c0_i32_1 = arith.constant 0 : i32
    return %c0_i32, %c0_i32_0 : i32, i32
  }
  func.func @transform_12(%arg0: i32) -> (i32, i32) {
    %c0_i32 = arith.constant 0 : i32
    %c0_i32_0 = arith.constant 0 : i32
    %c0_i32_1 = arith.constant 0 : i32
    return %c0_i32, %c0_i32_0 : i32, i32
  }
  func.func @transform_13(%arg0: i32) -> (i32, i32, i32) {
    %c0_i32 = arith.constant 0 : i32
    %c0_i32_0 = arith.constant 0 : i32
    %c0_i32_1 = arith.constant 0 : i32
    return %arg0, %c0_i32, %c0_i32_0 : i32, i32, i32
  }
}

</mosaic_0001>

<llo_original>
// kernel: tpu_custom_call.1
$region0: #{tpu_custom_call.1}
  #allocation0 [shape = 'u32[]', space=smem, size = 0x4, offset = 0x4, fixed_abs, tag = 'smem constant byte address 0x4 - core index']
  #allocation1 [shape = 'u32[144,128]{1,0:T(1,128)}', space=vmem, size = 0x12000, scoped, tag = 'internal scratch']
  %s0 = inlined_call_operand.vmem [shape: bf16[64,768], index: 0, kind: input, shape index: {}]
  %s1 = inlined_call_operand.vmem [shape: bf16[768,64], index: 1, kind: input, shape index: {}]
  %s2 = inlined_call_operand.vmem [shape: f32[1,64], index: 2, kind: input, shape index: {}]
  %s3 = inlined_call_operand.vmem [shape: bf16[2,64,192], index: 3, kind: input, shape index: {}]
  %s4 = inlined_call_operand.vmem [shape: f32[2,1,192], index: 4, kind: input, shape index: {}]
  %s5 = inlined_call_operand.vmem [shape: bf16[2,3,64,64], index: 5, kind: input, shape index: {}]
  %s6 = inlined_call_operand.vmem [shape: f32[2,7,64], index: 6, kind: input, shape index: {}]
  %s7 = inlined_call_operand.vmem [shape: bf16[64,64], index: 7, kind: input, shape index: {}]
  %s8 = inlined_call_operand.vmem [shape: f32[1,64], index: 8, kind: input, shape index: {}]
  %s9 = inlined_call_operand.vmem [shape: bf16[64,32], index: 9, kind: input, shape index: {}]
  %s10 = inlined_call_operand.vmem [shape: f32[1,32], index: 10, kind: input, shape index: {}]
  %s11 = inlined_call_operand.vmem [shape: bf16[32,128], index: 11, kind: input, shape index: {}]
  %s12 = inlined_call_operand.vmem [shape: f32[1,128], index: 12, kind: input, shape index: {}]
  %s13 = inlined_call_operand.hbm [shape: f32[2,2,128], index: 13, kind: output, shape index: {}]
  %s14 = sld [smem:[#allocation0]]
  $region85: #{tpu_custom_call.1} parent=0
    _
  %s16 = ssub.s32 1, %s14
  %s17 = scalar_select 0, %s16, %s14
  $region1: #{tpu_custom_call.1} parent=0
    #allocation2 [shape = 'u8[2048]{0}', space=vmem, size = 0x800, scoped, tag = 'output window, operand 0']
    #allocation3 [shape = 's32[2]{0}', space=sflag, size = 0x8, scoped, tag = 'scoped memory for tpu_custom_call.1']
    %18 = vsyncpa [#allocation3], 0
    %s19 = scalar_lea.sflag [#allocation3], 1
    %20 = vsyncpa %s19, 0
    loop: start=0, step=1, limit=4
    $region2: #{tpu_custom_call.1} parent=1 // loop_pre_header
      _
    $region3: #{tpu_custom_call.1} parent=1 // loop_header
      %s22 = sphi 0, %s26
      %p23 = scmp.ge.s32.totalorder %s22, 4
      %s32 = sphi 0, %s34
      %s35 = sphi 0, %s32
      %s36 = sphi 0, %s35
      %s52 = sphi 0, %s36
      %s56 = sphi 0, %s56
      %s58 = sphi 0, %s56
      %s59 = sphi 0, %s58
      %s73 = sphi 0, %s59
      %s77 = sphi 0, %s77
      %s79 = sphi 0, %s77
      %s80 = sphi 0, %s79
      %s94 = sphi 0, %s80
      %s98 = sphi 0, %s98
      %s100 = sphi 0, %s98
      %s101 = sphi 0, %s100
      %s115 = sphi 0, %s101
      %s119 = sphi 0, %s119
      %s121 = sphi 0, %s119
      %s122 = sphi 0, %s121
      %s136 = sphi 0, %s122
      %s140 = sphi 0, %s140
      %s142 = sphi 0, %s140
      %s143 = sphi 0, %s142
      %s157 = sphi 0, %s143
      %s161 = sphi 0, %s161
      %s163 = sphi 0, %s161
      %s164 = sphi 0, %s163
      %s178 = sphi 0, %s164
      %s182 = sphi 0, %s182
      %s184 = sphi 0, %s182
      %s185 = sphi 0, %s184
      %s199 = sphi 0, %s185
      %s203 = sphi 0, %s203
      %s205 = sphi 0, %s203
      %s206 = sphi 0, %s205
      %s220 = sphi 0, %s206
      %s224 = sphi 0, %s224
      %s226 = sphi 0, %s224
      %s227 = sphi 0, %s226
      %s241 = sphi 0, %s227
      %s245 = sphi 0, %s245
      %s247 = sphi 0, %s245
      %s248 = sphi 0, %s247
      %s262 = sphi 0, %s248
      %s266 = sphi 0, %s266
      %s268 = sphi 0, %s266
      %s269 = sphi 0, %s268
      %s283 = sphi 0, %s269
      %s287 = sphi 0, %s287
      %s289 = sphi 0, %s287
      %s290 = sphi 0, %s289
      %s304 = sphi 0, %s290
      %s310 = sphi 0, %s312
      %s313 = sphi 0, %s310
      %s314 = sphi 0, %s313
      %s330 = sphi 0, %s314
    $region4: #{tpu_custom_call.1} parent=1 // loop_header_branch
      %25 = sbr.rel (%p23) target = $region8
    $region5: #{tpu_custom_call.1} parent=1 // loop_body
      %s27 = ssub.s32 %s22, 1
      %s28 = ssub.s32 %s22, 2
      %s29 = sadd.s32 %s22, 1
      %s30 = ssub.s32 %s22, %s29
      %p31 = scmp.eq.s32.totalorder %s30, 0
      %s33 = sadd.s32 %s32, 1
      %s34 = scalar_select %p31, %s32, %s33
      %p37 = pneg %p31
      %p38 = scmp.eq.s32.totalorder %s22, 1
      %p39 = por %p37, %p38
      %p40 = scmp.ne.s32.totalorder %s32, %s35
      %p41 = scmp.eq.s32.totalorder %s22, 0
      %p42 = por %p40, %p41
      %p43 = scmp.ne.s32.totalorder %s32, %s35
      %p44 = scmp.eq.s32.totalorder %s27, 1
      %p45 = por %p43, %p44
      %p46 = scmp.ne.s32.totalorder %s35, %s36
      %p47 = scmp.eq.s32.totalorder %s27, 0
      %p48 = por %p46, %p47
      %p49 = scmp.ne.s32.totalorder %s35, %s36
      %p50 = scmp.eq.s32.totalorder %s28, 1
      %p51 = por %p49, %p50
      %p53 = scmp.ne.s32.totalorder %s36, %s52
      %p54 = scmp.eq.s32.totalorder %s28, 0
      %p55 = por %p53, %p54
      %s57 = sadd.s32 %s56, 1
      %p60 = scmp.eq.s32.totalorder %s22, 1
      %p61 = scmp.ne.s32.totalorder %s56, %s58
      %p62 = scmp.eq.s32.totalorder %s22, 0
      %p63 = por %p61, %p62
      %p64 = scmp.ne.s32.totalorder %s56, %s58
      %p65 = scmp.eq.s32.totalorder %s27, 1
      %p66 = por %p64, %p65
      %p67 = scmp.ne.s32.totalorder %s58, %s59
      %p68 = scmp.eq.s32.totalorder %s27, 0
      %p69 = por %p67, %p68
      %p70 = scmp.ne.s32.totalorder %s58, %s59
      %p71 = scmp.eq.s32.totalorder %s28, 1
      %p72 = por %p70, %p71
      %p74 = scmp.ne.s32.totalorder %s59, %s73
      %p75 = scmp.eq.s32.totalorder %s28, 0
      %p76 = por %p74, %p75
      %s78 = sadd.s32 %s77, 1
      %p81 = scmp.eq.s32.totalorder %s22, 1
      %p82 = scmp.ne.s32.totalorder %s77, %s79
      %p83 = scmp.eq.s32.totalorder %s22, 0
      %p84 = por %p82, %p83
      %p85 = scmp.ne.s32.totalorder %s77, %s79
      %p86 = scmp.eq.s32.totalorder %s27, 1
      %p87 = por %p85, %p86
      %p88 = scmp.ne.s32.totalorder %s79, %s80
      %p89 = scmp.eq.s32.totalorder %s27, 0
      %p90 = por %p88, %p89
      %p91 = scmp.ne.s32.totalorder %s79, %s80
      %p92 = scmp.eq.s32.totalorder %s28, 1
      %p93 = por %p91, %p92
      %p95 = scmp.ne.s32.totalorder %s80, %s94
      %p96 = scmp.eq.s32.totalorder %s28, 0
      %p97 = por %p95, %p96
      %s99 = sadd.s32 %s98, 1
      %p102 = scmp.eq.s32.totalorder %s22, 1
      %p103 = scmp.ne.s32.totalorder %s98, %s100
      %p104 = scmp.eq.s32.totalorder %s22, 0
      %p105 = por %p103, %p104
      %p106 = scmp.ne.s32.totalorder %s98, %s100
      %p107 = scmp.eq.s32.totalorder %s27, 1
      %p108 = por %p106, %p107
      %p109 = scmp.ne.s32.totalorder %s100, %s101
      %p110 = scmp.eq.s32.totalorder %s27, 0
      %p111 = por %p109, %p110
      %p112 = scmp.ne.s32.totalorder %s100, %s101
      %p113 = scmp.eq.s32.totalorder %s28, 1
      %p114 = por %p112, %p113
      %p116 = scmp.ne.s32.totalorder %s101, %s115
      %p117 = scmp.eq.s32.totalorder %s28, 0
      %p118 = por %p116, %p117
      %s120 = sadd.s32 %s119, 1
      %p123 = scmp.eq.s32.totalorder %s22, 1
      %p124 = scmp.ne.s32.totalorder %s119, %s121
      %p125 = scmp.eq.s32.totalorder %s22, 0
      %p126 = por %p124, %p125
      %p127 = scmp.ne.s32.totalorder %s119, %s121
      %p128 = scmp.eq.s32.totalorder %s27, 1
      %p129 = por %p127, %p128
      %p130 = scmp.ne.s32.totalorder %s121, %s122
      %p131 = scmp.eq.s32.totalorder %s27, 0
      %p132 = por %p130, %p131
      %p133 = scmp.ne.s32.totalorder %s121, %s122
      %p134 = scmp.eq.s32.totalorder %s28, 1
      %p135 = por %p133, %p134
      %p137 = scmp.ne.s32.totalorder %s122, %s136
      %p138 = scmp.eq.s32.totalorder %s28, 0
      %p139 = por %p137, %p138
      %s141 = sadd.s32 %s140, 1
      %p144 = scmp.eq.s32.totalorder %s22, 1
      %p145 = scmp.ne.s32.totalorder %s140, %s142
      %p146 = scmp.eq.s32.totalorder %s22, 0
      %p147 = por %p145, %p146
      %p148 = scmp.ne.s32.totalorder %s140, %s142
      %p149 = scmp.eq.s32.totalorder %s27, 1
      %p150 = por %p148, %p149
      %p151 = scmp.ne.s32.totalorder %s142, %s143
      %p152 = scmp.eq.s32.totalorder %s27, 0
      %p153 = por %p151, %p152
      %p154 = scmp.ne.s32.totalorder %s142, %s143
      %p155 = scmp.eq.s32.totalorder %s28, 1
      %p156 = por %p154, %p155
      %p158 = scmp.ne.s32.totalorder %s143, %s157
      %p159 = scmp.eq.s32.totalorder %s28, 0
      %p160 = por %p158, %p159
      %s162 = sadd.s32 %s161, 1
      %p165 = scmp.eq.s32.totalorder %s22, 1
      %p166 = scmp.ne.s32.totalorder %s161, %s163
      %p167 = scmp.eq.s32.totalorder %s22, 0
      %p168 = por %p166, %p167
      %p169 = scmp.ne.s32.totalorder %s161, %s163
      %p170 = scmp.eq.s32.totalorder %s27, 1
      %p171 = por %p169, %p170
      %p172 = scmp.ne.s32.totalorder %s163, %s164
      %p173 = scmp.eq.s32.totalorder %s27, 0
      %p174 = por %p172, %p173
      %p175 = scmp.ne.s32.totalorder %s163, %s164
      %p176 = scmp.eq.s32.totalorder %s28, 1
      %p177 = por %p175, %p176
      %p179 = scmp.ne.s32.totalorder %s164, %s178
      %p180 = scmp.eq.s32.totalorder %s28, 0
      %p181 = por %p179, %p180
      %s183 = sadd.s32 %s182, 1
      %p186 = scmp.eq.s32.totalorder %s22, 1
      %p187 = scmp.ne.s32.totalorder %s182, %s184
      %p188 = scmp.eq.s32.totalorder %s22, 0
      %p189 = por %p187, %p188
      %p190 = scmp.ne.s32.totalorder %s182, %s184
      %p191 = scmp.eq.s32.totalorder %s27, 1
      %p192 = por %p190, %p191
      %p193 = scmp.ne.s32.totalorder %s184, %s185
      %p194 = scmp.eq.s32.totalorder %s27, 0
      %p195 = por %p193, %p194
      %p196 = scmp.ne.s32.totalorder %s184, %s185
      %p197 = scmp.eq.s32.totalorder %s28, 1
      %p198 = por %p196, %p197
      %p200 = scmp.ne.s32.totalorder %s185, %s199
      %p201 = scmp.eq.s32.totalorder %s28, 0
      %p202 = por %p200, %p201
      %s204 = sadd.s32 %s203, 1
      %p207 = scmp.eq.s32.totalorder %s22, 1
      %p208 = scmp.ne.s32.totalorder %s203, %s205
      %p209 = scmp.eq.s32.totalorder %s22, 0
      %p210 = por %p208, %p209
      %p211 = scmp.ne.s32.totalorder %s203, %s205
      %p212 = scmp.eq.s32.totalorder %s27, 1
      %p213 = por %p211, %p212
      %p214 = scmp.ne.s32.totalorder %s205, %s206
      %p215 = scmp.eq.s32.totalorder %s27, 0
      %p216 = por %p214, %p215
      %p217 = scmp.ne.s32.totalorder %s205, %s206
      %p218 = scmp.eq.s32.totalorder %s28, 1
      %p219 = por %p217, %p218
      %p221 = scmp.ne.s32.totalorder %s206, %s220
      %p222 = scmp.eq.s32.totalorder %s28, 0
      %p223 = por %p221, %p222
      %s225 = sadd.s32 %s224, 1
      %p228 = scmp.eq.s32.totalorder %s22, 1
      %p229 = scmp.ne.s32.totalorder %s224, %s226
      %p230 = scmp.eq.s32.totalorder %s22, 0
      %p231 = por %p229, %p230
      %p232 = scmp.ne.s32.totalorder %s224, %s226
      %p233 = scmp.eq.s32.totalorder %s27, 1
      %p234 = por %p232, %p233
      %p235 = scmp.ne.s32.totalorder %s226, %s227
      %p236 = scmp.eq.s32.totalorder %s27, 0
      %p237 = por %p235, %p236
      %p238 = scmp.ne.s32.totalorder %s226, %s227
      %p239 = scmp.eq.s32.totalorder %s28, 1
      %p240 = por %p238, %p239
      %p242 = scmp.ne.s32.totalorder %s227, %s241
      %p243 = scmp.eq.s32.totalorder %s28, 0
      %p244 = por %p242, %p243
      %s246 = sadd.s32 %s245, 1
      %p249 = scmp.eq.s32.totalorder %s22, 1
      %p250 = scmp.ne.s32.totalorder %s245, %s247
      %p251 = scmp.eq.s32.totalorder %s22, 0
      %p252 = por %p250, %p251
      %p253 = scmp.ne.s32.totalorder %s245, %s247
      %p254 = scmp.eq.s32.totalorder %s27, 1
      %p255 = por %p253, %p254
      %p256 = scmp.ne.s32.totalorder %s247, %s248
      %p257 = scmp.eq.s32.totalorder %s27, 0
      %p258 = por %p256, %p257
      %p259 = scmp.ne.s32.totalorder %s247, %s248
      %p260 = scmp.eq.s32.totalorder %s28, 1
      %p261 = por %p259, %p260
      %p263 = scmp.ne.s32.totalorder %s248, %s262
      %p264 = scmp.eq.s32.totalorder %s28, 0
      %p265 = por %p263, %p264
      %s267 = sadd.s32 %s266, 1
      %p270 = scmp.eq.s32.totalorder %s22, 1
      %p271 = scmp.ne.s32.totalorder %s266, %s268
      %p272 = scmp.eq.s32.totalorder %s22, 0
      %p273 = por %p271, %p272
      %p274 = scmp.ne.s32.totalorder %s266, %s268
      %p275 = scmp.eq.s32.totalorder %s27, 1
      %p276 = por %p274, %p275
      %p277 = scmp.ne.s32.totalorder %s268, %s269
      %p278 = scmp.eq.s32.totalorder %s27, 0
      %p279 = por %p277, %p278
      %p280 = scmp.ne.s32.totalorder %s268, %s269
      %p281 = scmp.eq.s32.totalorder %s28, 1
      %p282 = por %p280, %p281
      %p284 = scmp.ne.s32.totalorder %s269, %s283
      %p285 = scmp.eq.s32.totalorder %s28, 0
      %p286 = por %p284, %p285
      %s288 = sadd.s32 %s287, 1
      %p291 = scmp.eq.s32.totalorder %s22, 1
      %p292 = scmp.ne.s32.totalorder %s287, %s289
      %p293 = scmp.eq.s32.totalorder %s22, 0
      %p294 = por %p292, %p293
      %p295 = scmp.ne.s32.totalorder %s287, %s289
      %p296 = scmp.eq.s32.totalorder %s27, 1
      %p297 = por %p295, %p296
      %p298 = scmp.ne.s32.totalorder %s289, %s290
      %p299 = scmp.eq.s32.totalorder %s27, 0
      %p300 = por %p298, %p299
      %p301 = scmp.ne.s32.totalorder %s289, %s290
      %p302 = scmp.eq.s32.totalorder %s28, 1
      %p303 = por %p301, %p302
      %p305 = scmp.ne.s32.totalorder %s290, %s304
      %p306 = scmp.eq.s32.totalorder %s28, 0
      %p307 = por %p305, %p306
      %s308 = ssub.s32 %s22, %s29
      %p309 = scmp.eq.s32.totalorder %s308, 0
      %s311 = sadd.s32 %s310, 1
      %s312 = scalar_select %p309, %s310, %s311
      %p315 = pneg %p309
      %p316 = scmp.eq.s32.totalorder %s22, 1
      %p317 = por %p315, %p316
      %p318 = scmp.ne.s32.totalorder %s310, %s313
      %p319 = scmp.eq.s32.totalorder %s22, 0
      %p320 = por %p318, %p319
      %p321 = scmp.ne.s32.totalorder %s310, %s313
      %p322 = scmp.eq.s32.totalorder %s27, 1
      %p323 = por %p321, %p322
      %p324 = scmp.ne.s32.totalorder %s313, %s314
      %p325 = scmp.eq.s32.totalorder %s27, 0
      %p326 = por %p324, %p325
      %p327 = scmp.ne.s32.totalorder %s313, %s314
      %p328 = scmp.eq.s32.totalorder %s28, 1
      %p329 = por %p327, %p328
      %p331 = scmp.ne.s32.totalorder %s314, %s330
      %p332 = scmp.eq.s32.totalorder %s28, 0
      %p333 = por %p331, %p332
      %p334 = scmp.le.s32.totalorder 1, %s22
      %p335 = scmp.lt.s32.totalorder %s22, 3
      %p336 = pnand %p334, %p335
      %p337 = pneg %p336
      // Predicated region
      $region9: #{tpu_custom_call.1} parent=5 // pred_check
        _
      $region10: #{tpu_custom_call.1} parent=5 // pred_check_branch
        %339 = sbr.rel (%p336) target = $region12
      $region11: #{tpu_custom_call.1} parent=5 // pred_region
        %s340 = ssub.s32 %s22, 1
        // Predicated region
        $region13: #{tpu_custom_call.1} parent=11 // pred_check
          %p341 = pneg %p69
        $region14: #{tpu_custom_call.1} parent=11 // pred_check_branch
          %343 = sbr.rel (%p341) target = $region16
        $region15: #{tpu_custom_call.1} parent=11 // pred_region
          _
        $region16: #{tpu_custom_call.1} parent=11 // pred_fallthru
          _
        // Predicated region
        $region17: #{tpu_custom_call.1} parent=11 // pred_check
          %p344 = pneg %p90
        $region18: #{tpu_custom_call.1} parent=11 // pred_check_branch
          %346 = sbr.rel (%p344) target = $region20
        $region19: #{tpu_custom_call.1} parent=11 // pred_region
          _
        $region20: #{tpu_custom_call.1} parent=11 // pred_fallthru
          _
        // Predicated region
        $region21: #{tpu_custom_call.1} parent=11 // pred_check
          %p347 = pneg %p111
        $region22: #{tpu_custom_call.1} parent=11 // pred_check_branch
          %349 = sbr.rel (%p347) target = $region24
        $region23: #{tpu_custom_call.1} parent=11 // pred_region
          _
        $region24: #{tpu_custom_call.1} parent=11 // pred_fallthru
          _
        // Predicated region
        $region25: #{tpu_custom_call.1} parent=11 // pred_check
          %p350 = pneg %p132
        $region26: #{tpu_custom_call.1} parent=11 // pred_check_branch
          %352 = sbr.rel (%p350) target = $region28
        $region27: #{tpu_custom_call.1} parent=11 // pred_region
          _
        $region28: #{tpu_custom_call.1} parent=11 // pred_fallthru
          _
        // Predicated region
        $region29: #{tpu_custom_call.1} parent=11 // pred_check
          %p353 = pneg %p153
        $region30: #{tpu_custom_call.1} parent=11 // pred_check_branch
          %355 = sbr.rel (%p353) target = $region32
        $region31: #{tpu_custom_call.1} parent=11 // pred_region
          _
        $region32: #{tpu_custom_call.1} parent=11 // pred_fallthru
          _
        // Predicated region
        $region33: #{tpu_custom_call.1} parent=11 // pred_check
          %p356 = pneg %p174
        $region34: #{tpu_custom_call.1} parent=11 // pred_check_branch
          %358 = sbr.rel (%p356) target = $region36
        $region35: #{tpu_custom_call.1} parent=11 // pred_region
          _
        $region36: #{tpu_custom_call.1} parent=11 // pred_fallthru
          _
        // Predicated region
        $region37: #{tpu_custom_call.1} parent=11 // pred_check
          %p359 = pneg %p195
        $region38: #{tpu_custom_call.1} parent=11 // pred_check_branch
          %361 = sbr.rel (%p359) target = $region40
        $region39: #{tpu_custom_call.1} parent=11 // pred_region
          _
        $region40: #{tpu_custom_call.1} parent=11 // pred_fallthru
          _
        // Predicated region
        $region41: #{tpu_custom_call.1} parent=11 // pred_check
          %p362 = pneg %p216
        $region42: #{tpu_custom_call.1} parent=11 // pred_check_branch
          %364 = sbr.rel (%p362) target = $region44
        $region43: #{tpu_custom_call.1} parent=11 // pred_region
          _
        $region44: #{tpu_custom_call.1} parent=11 // pred_fallthru
          _
        // Predicated region
        $region45: #{tpu_custom_call.1} parent=11 // pred_check
          %p365 = pneg %p237
        $region46: #{tpu_custom_call.1} parent=11 // pred_check_branch
          %367 = sbr.rel (%p365) target = $region48
        $region47: #{tpu_custom_call.1} parent=11 // pred_region
          _
        $region48: #{tpu_custom_call.1} parent=11 // pred_fallthru
          _
        // Predicated region
        $region49: #{tpu_custom_call.1} parent=11 // pred_check
          %p368 = pneg %p258
        $region50: #{tpu_custom_call.1} parent=11 // pred_check_branch
          %370 = sbr.rel (%p368) target = $region52
        $region51: #{tpu_custom_call.1} parent=11 // pred_region
          _
        $region52: #{tpu_custom_call.1} parent=11 // pred_fallthru
          _
        // Predicated region
        $region53: #{tpu_custom_call.1} parent=11 // pred_check
          %p371 = pneg %p279
        $region54: #{tpu_custom_call.1} parent=11 // pred_check_branch
          %373 = sbr.rel (%p371) target = $region56
        $region55: #{tpu_custom_call.1} parent=11 // pred_region
          _
        $region56: #{tpu_custom_call.1} parent=11 // pred_fallthru
          _
        // Predicated region
        $region57: #{tpu_custom_call.1} parent=11 // pred_check
          %p374 = pneg %p300
        $region58: #{tpu_custom_call.1} parent=11 // pred_check_branch
          %376 = sbr.rel (%p374) target = $region60
        $region59: #{tpu_custom_call.1} parent=11 // pred_region
          _
        $region60: #{tpu_custom_call.1} parent=11 // pred_fallthru
          _
      $region12: #{tpu_custom_call.1} parent=5 // pred_fallthru
        _
      %p377 = scmp.lt.s32.totalorder %s22, 2
      // Predicated region
      $region61: #{tpu_custom_call.1} parent=5 // pred_check
        %p378 = pneg %p377
      $region62: #{tpu_custom_call.1} parent=5 // pred_check_branch
        %380 = sbr.rel (%p378) target = $region64
      $region63: #{tpu_custom_call.1} parent=5 // pred_region
        // Predicated region
        $region65: #{tpu_custom_call.1} parent=63 // pred_check
          %p381 = pneg %p42
        $region66: #{tpu_custom_call.1} parent=63 // pred_check_branch
          %383 = sbr.rel (%p381) target = $region68
        $region67: #{tpu_custom_call.1} parent=63 // pred_region
          %s384 = smul.u32 4, %s22
          %p385 = scmp.lt.s32.totalorder %s384, 7
          %s386 = scalar_select %p385, %s384, 7
          %s387 = smul.addr %s386, 6
          %s388 = smul.addr %s387, 4
          %s389 = scalar_lea.vmem %s0, %s388
          %s390 = smul.u32 4, %s22
        $region68: #{tpu_custom_call.1} parent=63 // pred_fallthru
          _
      $region64: #{tpu_custom_call.1} parent=5 // pred_fallthru
        _
      %p391 = scmp.le.s32.totalorder 1, %s22
      %p392 = scmp.lt.s32.totalorder %s22, 3
      %p393 = pnand %p391, %p392
      %p394 = pneg %p393
      // Predicated region
      $region69: #{tpu_custom_call.1} parent=5 // pred_check
        _
      $region70: #{tpu_custom_call.1} parent=5 // pred_check_branch
        %396 = sbr.rel (%p393) target = $region72
      $region71: #{tpu_custom_call.1} parent=5 // pred_region
        %s397 = ssub.s32 %s22, 1
        %s398 = smul.u32 4, %s27
        %p399 = scmp.lt.s32.totalorder %s398, 7
        %s400 = scalar_select %p399, %s398, 7
        %s401 = smul.addr %s400, 6
        %s402 = smul.addr %s401, 4
        %s403 = scalar_lea.vmem %s0, %s402
        %p404 = pneg %p48
        %p405 = pneg %p45
        %p406 = pneg %p69
        %p407 = pneg %p66
        %p408 = pneg %p90
        %p409 = pneg %p87
        %p410 = pneg %p111
        %p411 = pneg %p108
        %p412 = pneg %p132
        %p413 = pneg %p129
        %p414 = pneg %p153
        %p415 = pneg %p150
        %p416 = pneg %p174
        %p417 = pneg %p171
        %p418 = pneg %p195
        %p419 = pneg %p192
        %p420 = pneg %p216
        %p421 = pneg %p213
        %p422 = pneg %p237
        %p423 = pneg %p234
        %p424 = pneg %p258
        %p425 = pneg %p255
        %p426 = pneg %p279
        %p427 = pneg %p276
        %p428 = pneg %p300
        %p429 = pneg %p297
        %p430 = pneg %p326
        %p431 = pneg %p323
        %s432 = sand.u32 %s313, 1
        %s433 = scalar_lea.sflag [#allocation3], %s432
        %s434 = sand.u32 %s313, 1
        %s435 = smul.addr %s434, 2
        %s436 = scalar_lea.vmem [#allocation2], %s435
        %s437 = smul.u32 4, %s27
        %p438 = scmp.lt.s32.totalorder %s437, 7
        %s439 = scalar_select %p438, %s437, 7
        %s440 = smul.addr %s439, 6
        %s441 = smul.addr %s440, 4
        %s442 = scalar_lea.vmem %s0, %s441
        %s443 = smul.u32 4, %s27
        %v445 = vld [vmem:[%s442] sm:$0xff]
        %v446 = vld [vmem:[%s442 + $0x8] sm:$0xff]
        %v447 = vld [vmem:[%s442 + $0x10] sm:$0xff]
        %v448 = vld [vmem:[%s442 + $0x18] sm:$0xff]
        %v449 = vld [vmem:[%s442 + $0x20] sm:$0xff]
        %v450 = vld [vmem:[%s442 + $0x28] sm:$0xff]
        %v451 = vld [vmem:[%s442 + $0x30] sm:$0xff]
        %v452 = vld [vmem:[%s442 + $0x38] sm:$0xff]
        %v453 = vld [vmem:[%s442 + $0x40] sm:$0xff]
        %v454 = vld [vmem:[%s442 + $0x48] sm:$0xff]
        %v455 = vld [vmem:[%s442 + $0x50] sm:$0xff]
        %v456 = vld [vmem:[%s442 + $0x58] sm:$0xff]
        %v457 = vld [vmem:[%s1] sm:$0xf]
        %v458 = vld [vmem:[%s1 + $0x4] sm:$0xf]
        %v459 = vld [vmem:[%s1 + $0x8] sm:$0xf]
        %v460 = vld [vmem:[%s1 + $0xc] sm:$0xf]
        %v461 = vld [vmem:[%s1 + $0x10] sm:$0xf]
        %v462 = vld [vmem:[%s1 + $0x14] sm:$0xf]
        %v463 = vld [vmem:[%s1 + $0x18] sm:$0xf]
        %v464 = vld [vmem:[%s1 + $0x1c] sm:$0xf]
        %v465 = vld [vmem:[%s1 + $0x20] sm:$0xf]
        %v466 = vld [vmem:[%s1 + $0x24] sm:$0xf]
        %v467 = vld [vmem:[%s1 + $0x28] sm:$0xf]
        %v468 = vld [vmem:[%s1 + $0x2c] sm:$0xf]
        %v469 = vld [vmem:[%s1 + $0x30] sm:$0xf]
        %v470 = vld [vmem:[%s1 + $0x34] sm:$0xf]
        %v471 = vld [vmem:[%s1 + $0x38] sm:$0xf]
        %v472 = vld [vmem:[%s1 + $0x3c] sm:$0xf]
        %v473 = vld [vmem:[%s1 + $0x40] sm:$0xf]
        %v474 = vld [vmem:[%s1 + $0x44] sm:$0xf]
        %v475 = vld [vmem:[%s1 + $0x48] sm:$0xf]
        %v476 = vld [vmem:[%s1 + $0x4c] sm:$0xf]
        %v477 = vld [vmem:[%s1 + $0x50] sm:$0xf]
        %v478 = vld [vmem:[%s1 + $0x54] sm:$0xf]
        %v479 = vld [vmem:[%s1 + $0x58] sm:$0xf]
        %v480 = vld [vmem:[%s1 + $0x5c] sm:$0xf]
        %v481 = vld [vmem:[%s1 + $0x60] sm:$0xf]
        %v482 = vld [vmem:[%s1 + $0x64] sm:$0xf]
        %v483 = vld [vmem:[%s1 + $0x68] sm:$0xf]
        %v484 = vld [vmem:[%s1 + $0x6c] sm:$0xf]
        %v485 = vld [vmem:[%s1 + $0x70] sm:$0xf]
        %v486 = vld [vmem:[%s1 + $0x74] sm:$0xf]
        %v487 = vld [vmem:[%s1 + $0x78] sm:$0xf]
        %v488 = vld [vmem:[%s1 + $0x7c] sm:$0xf]
        %v489 = vld [vmem:[%s1 + $0x80] sm:$0xf]
        %v490 = vld [vmem:[%s1 + $0x84] sm:$0xf]
        %v491 = vld [vmem:[%s1 + $0x88] sm:$0xf]
        %v492 = vld [vmem:[%s1 + $0x8c] sm:$0xf]
        %v493 = vld [vmem:[%s1 + $0x90] sm:$0xf]
        %v494 = vld [vmem:[%s1 + $0x94] sm:$0xf]
        %v495 = vld [vmem:[%s1 + $0x98] sm:$0xf]
        %v496 = vld [vmem:[%s1 + $0x9c] sm:$0xf]
        %v497 = vld [vmem:[%s1 + $0xa0] sm:$0xf]
        %v498 = vld [vmem:[%s1 + $0xa4] sm:$0xf]
        %v499 = vld [vmem:[%s1 + $0xa8] sm:$0xf]
        %v500 = vld [vmem:[%s1 + $0xac] sm:$0xf]
        %v501 = vld [vmem:[%s1 + $0xb0] sm:$0xf]
        %v502 = vld [vmem:[%s1 + $0xb4] sm:$0xf]
        %v503 = vld [vmem:[%s1 + $0xb8] sm:$0xf]
        %v504 = vld [vmem:[%s1 + $0xbc] sm:$0xf]
        %v505 = vld [vmem:[%s1 + $0xc0] sm:$0xf]
        %v506 = vld [vmem:[%s1 + $0xc4] sm:$0xf]
        %v507 = vld [vmem:[%s1 + $0xc8] sm:$0xf]
        %v508 = vld [vmem:[%s1 + $0xcc] sm:$0xf]
        %v509 = vld [vmem:[%s1 + $0xd0] sm:$0xf]
        %v510 = vld [vmem:[%s1 + $0xd4] sm:$0xf]
        %v511 = vld [vmem:[%s1 + $0xd8] sm:$0xf]
        %v512 = vld [vmem:[%s1 + $0xdc] sm:$0xf]
        %v513 = vld [vmem:[%s1 + $0xe0] sm:$0xf]
        %v514 = vld [vmem:[%s1 + $0xe4] sm:$0xf]
        %v515 = vld [vmem:[%s1 + $0xe8] sm:$0xf]
        %v516 = vld [vmem:[%s1 + $0xec] sm:$0xf]
        %v517 = vld [vmem:[%s1 + $0xf0] sm:$0xf]
        %v518 = vld [vmem:[%s1 + $0xf4] sm:$0xf]
        %v519 = vld [vmem:[%s1 + $0xf8] sm:$0xf]
        %v520 = vld [vmem:[%s1 + $0xfc] sm:$0xf]
        %v521 = vld [vmem:[%s1 + $0x100] sm:$0xf]
        %v522 = vld [vmem:[%s1 + $0x104] sm:$0xf]
        %v523 = vld [vmem:[%s1 + $0x108] sm:$0xf]
        %v524 = vld [vmem:[%s1 + $0x10c] sm:$0xf]
        %v525 = vld [vmem:[%s1 + $0x110] sm:$0xf]
        %v526 = vld [vmem:[%s1 + $0x114] sm:$0xf]
        %v527 = vld [vmem:[%s1 + $0x118] sm:$0xf]
        %v528 = vld [vmem:[%s1 + $0x11c] sm:$0xf]
        %v529 = vld [vmem:[%s1 + $0x120] sm:$0xf]
        %v530 = vld [vmem:[%s1 + $0x124] sm:$0xf]
        %v531 = vld [vmem:[%s1 + $0x128] sm:$0xf]
        %v532 = vld [vmem:[%s1 + $0x12c] sm:$0xf]
        %v533 = vld [vmem:[%s1 + $0x130] sm:$0xf]
        %v534 = vld [vmem:[%s1 + $0x134] sm:$0xf]
        %v535 = vld [vmem:[%s1 + $0x138] sm:$0xf]
        %v536 = vld [vmem:[%s1 + $0x13c] sm:$0xf]
        %v537 = vld [vmem:[%s1 + $0x140] sm:$0xf]
        %v538 = vld [vmem:[%s1 + $0x144] sm:$0xf]
        %v539 = vld [vmem:[%s1 + $0x148] sm:$0xf]
        %v540 = vld [vmem:[%s1 + $0x14c] sm:$0xf]
        %v541 = vld [vmem:[%s1 + $0x150] sm:$0xf]
        %v542 = vld [vmem:[%s1 + $0x154] sm:$0xf]
        %v543 = vld [vmem:[%s1 + $0x158] sm:$0xf]
        %v544 = vld [vmem:[%s1 + $0x15c] sm:$0xf]
        %v545 = vld [vmem:[%s1 + $0x160] sm:$0xf]
        %v546 = vld [vmem:[%s1 + $0x164] sm:$0xf]
        %v547 = vld [vmem:[%s1 + $0x168] sm:$0xf]
        %v548 = vld [vmem:[%s1 + $0x16c] sm:$0xf]
        %v549 = vld [vmem:[%s1 + $0x170] sm:$0xf]
        %v550 = vld [vmem:[%s1 + $0x174] sm:$0xf]
        %v551 = vld [vmem:[%s1 + $0x178] sm:$0xf]
        %v552 = vld [vmem:[%s1 + $0x17c] sm:$0xf]
        %v553 = vld [vmem:[%s2] sm:$0x1]
        %v555 = vlaneseq
        %v556 = vshrl.u32 %v555, 7
        %v557 = vsub.s32 0, %v556
        %v558 = vrot.slane %v553, %v557
        %v572 = vunpack.c.l.b16 %v445
        %v573 = vunpack.c.h.b16 %v445
        %v574 = vunpack.c.l.b16 %v446
        %v575 = vunpack.c.h.b16 %v446
        %v576 = vunpack.c.l.b16 %v447
        %v577 = vunpack.c.h.b16 %v447
        %v578 = vunpack.c.l.b16 %v448
        %v579 = vunpack.c.h.b16 %v448
        %v580 = vunpack.c.l.b16 %v449
        %v581 = vunpack.c.h.b16 %v449
        %v582 = vunpack.c.l.b16 %v450
        %v583 = vunpack.c.h.b16 %v450
        %v584 = vunpack.c.l.b16 %v451
        %v585 = vunpack.c.h.b16 %v451
        %v586 = vunpack.c.l.b16 %v452
        %v587 = vunpack.c.h.b16 %v452
        %v588 = vunpack.c.l.b16 %v453
        %v589 = vunpack.c.h.b16 %v453
        %v590 = vunpack.c.l.b16 %v454
        %v591 = vunpack.c.h.b16 %v454
        %v592 = vunpack.c.l.b16 %v455
        %v593 = vunpack.c.h.b16 %v455
        %v594 = vunpack.c.l.b16 %v456
        %v595 = vunpack.c.h.b16 %v456
        %v596 = vpack.c.b16 %v578, %v572
        %v597 = vpack.c.b16 %v579, %v573
        %v598 = vpack.c.b16 %v580, %v574
        %v599 = vpack.c.b16 %v581, %v575
        %v600 = vpack.c.b16 %v582, %v576
        %v601 = vpack.c.b16 %v583, %v577
        %v602 = vpack.c.b16 %v590, %v584
        %v603 = vpack.c.b16 %v591, %v585
        %v604 = vpack.c.b16 %v592, %v586
        %v605 = vpack.c.b16 %v593, %v587
        %v606 = vpack.c.b16 %v594, %v588
        %v607 = vpack.c.b16 %v595, %v589
        %v716 = vunpack.c.l.b16 %v457
        %v717 = vunpack.c.l.b16 %v458
        %v718 = vunpack.c.l.b16 %v459
        %v719 = vunpack.c.l.b16 %v460
        %v720 = vunpack.c.l.b16 %v461
        %v721 = vunpack.c.l.b16 %v462
        %v722 = vunpack.c.l.b16 %v463
        %v723 = vunpack.c.l.b16 %v464
        %v724 = vunpack.c.l.b16 %v465
        %v725 = vunpack.c.l.b16 %v466
        %v726 = vunpack.c.l.b16 %v467
        %v727 = vunpack.c.l.b16 %v468
        %v728 = vunpack.c.l.b16 %v469
        %v729 = vunpack.c.l.b16 %v470
        %v730 = vunpack.c.l.b16 %v471
        %v731 = vunpack.c.l.b16 %v472
        %v732 = vunpack.c.l.b16 %v473
        %v733 = vunpack.c.l.b16 %v474
        %v734 = vunpack.c.l.b16 %v475
        %v735 = vunpack.c.l.b16 %v476
        %v736 = vunpack.c.l.b16 %v477
        %v737 = vunpack.c.l.b16 %v478
        %v738 = vunpack.c.l.b16 %v479
        %v739 = vunpack.c.l.b16 %v480
        %v740 = vunpack.c.l.b16 %v481
        %v741 = vunpack.c.l.b16 %v482
        %v742 = vunpack.c.l.b16 %v483
        %v743 = vunpack.c.l.b16 %v484
        %v744 = vunpack.c.l.b16 %v485
        %v745 = vunpack.c.l.b16 %v486
        %v746 = vunpack.c.l.b16 %v487
        %v747 = vunpack.c.l.b16 %v488
        %v748 = vunpack.c.l.b16 %v489
        %v749 = vunpack.c.l.b16 %v490
        %v750 = vunpack.c.l.b16 %v491
        %v751 = vunpack.c.l.b16 %v492
        %v752 = vunpack.c.l.b16 %v493
        %v753 = vunpack.c.l.b16 %v494
        %v754 = vunpack.c.l.b16 %v495
        %v755 = vunpack.c.l.b16 %v496
        %v756 = vunpack.c.l.b16 %v497
        %v757 = vunpack.c.l.b16 %v498
        %v758 = vunpack.c.l.b16 %v499
        %v759 = vunpack.c.l.b16 %v500
        %v760 = vunpack.c.l.b16 %v501
        %v761 = vunpack.c.l.b16 %v502
        %v762 = vunpack.c.l.b16 %v503
        %v763 = vunpack.c.l.b16 %v504
        %v764 = vunpack.c.l.b16 %v505
        %v765 = vunpack.c.l.b16 %v506
        %v766 = vunpack.c.l.b16 %v507
        %v767 = vunpack.c.l.b16 %v508
        %v768 = vunpack.c.l.b16 %v509
        %v769 = vunpack.c.l.b16 %v510
        %v770 = vunpack.c.l.b16 %v511
        %v771 = vunpack.c.l.b16 %v512
        %v772 = vunpack.c.l.b16 %v513
        %v773 = vunpack.c.l.b16 %v514
        %v774 = vunpack.c.l.b16 %v515
        %v775 = vunpack.c.l.b16 %v516
        %v776 = vunpack.c.l.b16 %v517
        %v777 = vunpack.c.l.b16 %v518
        %v778 = vunpack.c.l.b16 %v519
        %v779 = vunpack.c.l.b16 %v520
        %v780 = vunpack.c.l.b16 %v521
        %v781 = vunpack.c.l.b16 %v522
        %v782 = vunpack.c.l.b16 %v523
        %v783 = vunpack.c.l.b16 %v524
        %v784 = vunpack.c.l.b16 %v525
        %v785 = vunpack.c.l.b16 %v526
        %v786 = vunpack.c.l.b16 %v527
        %v787 = vunpack.c.l.b16 %v528
        %v788 = vunpack.c.l.b16 %v529
        %v789 = vunpack.c.l.b16 %v530
        %v790 = vunpack.c.l.b16 %v531
        %v791 = vunpack.c.l.b16 %v532
        %v792 = vunpack.c.l.b16 %v533
        %v793 = vunpack.c.l.b16 %v534
        %v794 = vunpack.c.l.b16 %v535
        %v795 = vunpack.c.l.b16 %v536
        %v796 = vunpack.c.l.b16 %v537
        %v797 = vunpack.c.l.b16 %v538
        %v798 = vunpack.c.l.b16 %v539
        %v799 = vunpack.c.l.b16 %v540
        %v800 = vunpack.c.l.b16 %v541
        %v801 = vunpack.c.l.b16 %v542
        %v802 = vunpack.c.l.b16 %v543
        %v803 = vunpack.c.l.b16 %v544
        %v804 = vunpack.c.l.b16 %v545
        %v805 = vunpack.c.l.b16 %v546
        %v806 = vunpack.c.l.b16 %v547
        %v807 = vunpack.c.l.b16 %v548
        %v808 = vunpack.c.l.b16 %v549
        %v809 = vunpack.c.l.b16 %v550
        %v810 = vunpack.c.l.b16 %v551
        %v811 = vunpack.c.l.b16 %v552
        %v812 = vpack.c.b16 %v717, %v716
        %v813 = vpack.c.b16 %v719, %v718
        %v814 = vpack.c.b16 %v721, %v720
        %v815 = vpack.c.b16 %v723, %v722
        %v816 = vpack.c.b16 %v725, %v724
        %v817 = vpack.c.b16 %v727, %v726
        %v818 = vpack.c.b16 %v729, %v728
        %v819 = vpack.c.b16 %v731, %v730
        %v820 = vpack.c.b16 %v733, %v732
        %v821 = vpack.c.b16 %v735, %v734
        %v822 = vpack.c.b16 %v737, %v736
        %v823 = vpack.c.b16 %v739, %v738
        %v824 = vpack.c.b16 %v741, %v740
        %v825 = vpack.c.b16 %v743, %v742
        %v826 = vpack.c.b16 %v745, %v744
        %v827 = vpack.c.b16 %v747, %v746
        %v828 = vpack.c.b16 %v749, %v748
        %v829 = vpack.c.b16 %v751, %v750
        %v830 = vpack.c.b16 %v753, %v752
        %v831 = vpack.c.b16 %v755, %v754
        %v832 = vpack.c.b16 %v757, %v756
        %v833 = vpack.c.b16 %v759, %v758
        %v834 = vpack.c.b16 %v761, %v760
        %v835 = vpack.c.b16 %v763, %v762
        %v836 = vpack.c.b16 %v765, %v764
        %v837 = vpack.c.b16 %v767, %v766
        %v838 = vpack.c.b16 %v769, %v768
        %v839 = vpack.c.b16 %v771, %v770
        %v840 = vpack.c.b16 %v773, %v772
        %v841 = vpack.c.b16 %v775, %v774
        %v842 = vpack.c.b16 %v777, %v776
        %v843 = vpack.c.b16 %v779, %v778
        %v844 = vpack.c.b16 %v781, %v780
        %v845 = vpack.c.b16 %v783, %v782
        %v846 = vpack.c.b16 %v785, %v784
        %v847 = vpack.c.b16 %v787, %v786
        %v848 = vpack.c.b16 %v789, %v788
        %v849 = vpack.c.b16 %v791, %v790
        %v850 = vpack.c.b16 %v793, %v792
        %v851 = vpack.c.b16 %v795, %v794
        %v852 = vpack.c.b16 %v797, %v796
        %v853 = vpack.c.b16 %v799, %v798
        %v854 = vpack.c.b16 %v801, %v800
        %v855 = vpack.c.b16 %v803, %v802
        %v856 = vpack.c.b16 %v805, %v804
        %v857 = vpack.c.b16 %v807, %v806
        %v858 = vpack.c.b16 %v809, %v808
        %v859 = vpack.c.b16 %v811, %v810
        %908 = vmatprep.subr.bf16.mxu0 0
        %909 = vmatpush1.bf16.msra.mxu0 %v819
        %910 = vmatprep.subr.bf16.mxu0 0
        %911 = vmatpush1.bf16.msra.mxu0 %v818
        %912 = vmatprep.subr.bf16.mxu0 0
        %913 = vmatpush1.bf16.msra.mxu0 %v817
        %914 = vmatprep.subr.bf16.mxu0 0
        %915 = vmatpush1.bf16.msra.mxu0 %v816
        %916 = vmatprep.subr.bf16.mxu0 0
        %917 = vmatpush1.bf16.msra.mxu0 %v815
        %918 = vmatprep.subr.bf16.mxu0 0
        %919 = vmatpush1.bf16.msra.mxu0 %v814
        %920 = vmatprep.subr.bf16.mxu0 0
        %921 = vmatpush1.bf16.msra.mxu0 %v813
        %922 = vmatprep.subr.bf16.mxu0 0
        %923 = vmatpush1.bf16.msra.mxu0 %v812
        %924 = vmatprep.subr.bf16.mxu0 0
        %925 = vmatpush2.bf16.msra.mxu0 %v827
        %926 = vmatprep.subr.bf16.mxu0 0
        %927 = vmatpush2.bf16.msra.mxu0 %v826
        %928 = vmatprep.subr.bf16.mxu0 0
        %929 = vmatpush2.bf16.msra.mxu0 %v825
        %930 = vmatprep.subr.bf16.mxu0 0
        %931 = vmatpush2.bf16.msra.mxu0 %v824
        %932 = vmatprep.subr.bf16.mxu0 0
        %933 = vmatpush2.bf16.msra.mxu0 %v823
        %934 = vmatprep.subr.bf16.mxu0 0
        %935 = vmatpush2.bf16.msra.mxu0 %v822
        %936 = vmatprep.subr.bf16.mxu0 0
        %937 = vmatpush2.bf16.msra.mxu0 %v821
        %938 = vmatprep.subr.bf16.mxu0 0
        %939 = vmatpush2.bf16.msra.mxu0 %v820
        %940 = vmatprep.mubr.bf16.mxu0 %v597
        %941 = vmatmul.mubr.bf16.gmra.mxu0 %v596
        %v942 = vpop.f32.mrf.mxu0
        %v943 = vadd.f32 %v558, %v942
        %v944 = vpop.f32.mrf.mxu0
        %v945 = vpop.f32.mrf.mxu0
        %v946 = vadd.f32 %v558, %v945
        %v947 = vpop.f32.mrf.mxu0
        %948 = vmatprep.mubr.bf16.mxu0 %v603
        %949 = vmatmul.mubr.bf16.gmra.mxu0 %v602
        %v950 = vpop.f32.mrf.mxu0
        %v951 = vadd.f32 %v558, %v950
        %v952 = vpop.f32.mrf.mxu0
        %v953 = vpop.f32.mrf.mxu0
        %v954 = vadd.f32 %v558, %v953
        %v955 = vpop.f32.mrf.mxu0
        %956 = vdwg.mxu0
        %957 = vmatprep.subr.bf16.mxu0 0
        %958 = vmatpush1.bf16.msra.mxu0 %v835
        %959 = vmatprep.subr.bf16.mxu0 0
        %960 = vmatpush1.bf16.msra.mxu0 %v834
        %961 = vmatprep.subr.bf16.mxu0 0
        %962 = vmatpush1.bf16.msra.mxu0 %v833
        %963 = vmatprep.subr.bf16.mxu0 0
        %964 = vmatpush1.bf16.msra.mxu0 %v832
        %965 = vmatprep.subr.bf16.mxu0 0
        %966 = vmatpush1.bf16.msra.mxu0 %v831
        %967 = vmatprep.subr.bf16.mxu0 0
        %968 = vmatpush1.bf16.msra.mxu0 %v830
        %969 = vmatprep.subr.bf16.mxu0 0
        %970 = vmatpush1.bf16.msra.mxu0 %v829
        %971 = vmatprep.subr.bf16.mxu0 0
        %972 = vmatpush1.bf16.msra.mxu0 %v828
        %973 = vmatprep.subr.bf16.mxu0 0
        %974 = vmatpush2.bf16.msra.mxu0 %v843
        %975 = vmatprep.subr.bf16.mxu0 0
        %976 = vmatpush2.bf16.msra.mxu0 %v842
        %977 = vmatprep.subr.bf16.mxu0 0
        %978 = vmatpush2.bf16.msra.mxu0 %v841
        %979 = vmatprep.subr.bf16.mxu0 0
        %980 = vmatpush2.bf16.msra.mxu0 %v840
        %981 = vmatprep.subr.bf16.mxu0 0
        %982 = vmatpush2.bf16.msra.mxu0 %v839
        %983 = vmatprep.subr.bf16.mxu0 0
        %984 = vmatpush2.bf16.msra.mxu0 %v838
        %985 = vmatprep.subr.bf16.mxu0 0
        %986 = vmatpush2.bf16.msra.mxu0 %v837
        %987 = vmatprep.subr.bf16.mxu0 0
        %988 = vmatpush2.bf16.msra.mxu0 %v836
        %989 = vmatprep.mubr.bf16.mxu0 %v599
        %990 = vmatmul.mubr.bf16.gmra.mxu0 %v598
        %v991 = vpop.f32.mrf.mxu0
        %v992 = vadd.f32 %v943, %v991
        %v993 = vpop.f32.mrf.mxu0
        %v994 = vpop.f32.mrf.mxu0
        %v995 = vadd.f32 %v946, %v994
        %v996 = vpop.f32.mrf.mxu0
        %997 = vmatprep.mubr.bf16.mxu0 %v605
        %998 = vmatmul.mubr.bf16.gmra.mxu0 %v604
        %v999 = vpop.f32.mrf.mxu0
        %v1000 = vadd.f32 %v951, %v999
        %v1001 = vpop.f32.mrf.mxu0
        %v1002 = vpop.f32.mrf.mxu0
        %v1003 = vadd.f32 %v954, %v1002
        %v1004 = vpop.f32.mrf.mxu0
        %1005 = vdwg.mxu0
        %1006 = vmatprep.subr.bf16.mxu0 0
        %1007 = vmatpush1.bf16.msra.mxu0 %v851
        %1008 = vmatprep.subr.bf16.mxu0 0
        %1009 = vmatpush1.bf16.msra.mxu0 %v850
        %1010 = vmatprep.subr.bf16.mxu0 0
        %1011 = vmatpush1.bf16.msra.mxu0 %v849
        %1012 = vmatprep.subr.bf16.mxu0 0
        %1013 = vmatpush1.bf16.msra.mxu0 %v848
        %1014 = vmatprep.subr.bf16.mxu0 0
        %1015 = vmatpush1.bf16.msra.mxu0 %v847
        %1016 = vmatprep.subr.bf16.mxu0 0
        %1017 = vmatpush1.bf16.msra.mxu0 %v846
        %1018 = vmatprep.subr.bf16.mxu0 0
        %1019 = vmatpush1.bf16.msra.mxu0 %v845
        %1020 = vmatprep.subr.bf16.mxu0 0
        %1021 = vmatpush1.bf16.msra.mxu0 %v844
        %1022 = vmatprep.subr.bf16.mxu0 0
        %1023 = vmatpush2.bf16.msra.mxu0 %v859
        %1024 = vmatprep.subr.bf16.mxu0 0
        %1025 = vmatpush2.bf16.msra.mxu0 %v858
        %1026 = vmatprep.subr.bf16.mxu0 0
        %1027 = vmatpush2.bf16.msra.mxu0 %v857
        %1028 = vmatprep.subr.bf16.mxu0 0
        %1029 = vmatpush2.bf16.msra.mxu0 %v856
        %1030 = vmatprep.subr.bf16.mxu0 0
        %1031 = vmatpush2.bf16.msra.mxu0 %v855
        %1032 = vmatprep.subr.bf16.mxu0 0
        %1033 = vmatpush2.bf16.msra.mxu0 %v854
        %1034 = vmatprep.subr.bf16.mxu0 0
        %1035 = vmatpush2.bf16.msra.mxu0 %v853
        %1036 = vmatprep.subr.bf16.mxu0 0
        %1037 = vmatpush2.bf16.msra.mxu0 %v852
        %1038 = vmatprep.mubr.bf16.mxu0 %v601
        %1039 = vmatmul.mubr.bf16.gmra.mxu0 %v600
        %v1040 = vpop.f32.mrf.mxu0
        %v1041 = vadd.f32 %v992, %v1040
        %v1042 = vpop.f32.mrf.mxu0
        %v1043 = vpop.f32.mrf.mxu0
        %v1044 = vadd.f32 %v995, %v1043
        %v1045 = vpop.f32.mrf.mxu0
        %1046 = vmatprep.mubr.bf16.mxu0 %v607
        %1047 = vmatmul.mubr.bf16.gmra.mxu0 %v606
        %v1048 = vpop.f32.mrf.mxu0
        %v1049 = vadd.f32 %v1000, %v1048
        %v1050 = vpop.f32.mrf.mxu0
        %v1051 = vpop.f32.mrf.mxu0
        %v1052 = vadd.f32 %v1003, %v1051
        %v1053 = vpop.f32.mrf.mxu0
        %1054 = vdwg.mxu0
        %v1055 = vld [vmem:[%s6] sm:$0x7f]
        %v1056 = vld [vmem:[%s3] sm:$0xff]
        %v1057 = vld [vmem:[%s3 + $0x8] sm:$0xff]
        %v1058 = vld [vmem:[%s3 + $0x10] sm:$0xff]
        %v1059 = vld [vmem:[%s3 + $0x18] sm:$0xff]
        %v1060 = vld [vmem:[%s3 + $0x20] sm:$0xff]
        %v1061 = vld [vmem:[%s3 + $0x28] sm:$0xff]
        %v1062 = vld [vmem:[%s3 + $0x30] sm:$0xff]
        %v1063 = vld [vmem:[%s3 + $0x38] sm:$0xff]
        %v1064 = vpack.c.bf16 %v1044, %v1041
        %v1065 = vpack.c.bf16 %v1052, %v1049
        %v1066 = vld [vmem:[%s4] sm:$0x3]
        %v1068 = vlaneseq
        %v1069 = vshrl.u32 %v1068, 7
        %v1070 = vsub.s32 0, %v1069
        %v1071 = vrot.slane %v1066, %v1070
        %v1072 = vlaneseq
        %v1073 = vshrl.u32 %v1072, 7
        %v1074 = vsub.s32 1, %v1073
        %v1075 = vrot.slane %v1066, %v1074
        %v1086 = vunpack.c.l.b16 %v1056
        %v1087 = vunpack.c.h.b16 %v1056
        %v1088 = vunpack.c.l.b16 %v1057
        %v1089 = vunpack.c.h.b16 %v1057
        %v1090 = vunpack.c.l.b16 %v1058
        %v1091 = vunpack.c.h.b16 %v1058
        %v1092 = vunpack.c.l.b16 %v1059
        %v1093 = vunpack.c.h.b16 %v1059
        %v1094 = vunpack.c.l.b16 %v1060
        %v1095 = vunpack.c.h.b16 %v1060
        %v1096 = vunpack.c.l.b16 %v1061
        %v1097 = vunpack.c.h.b16 %v1061
        %v1098 = vunpack.c.l.b16 %v1062
        %v1099 = vunpack.c.h.b16 %v1062
        %v1100 = vunpack.c.l.b16 %v1063
        %v1101 = vunpack.c.h.b16 %v1063
        %v1102 = vpack.c.b16 %v1088, %v1086
        %v1103 = vpack.c.b16 %v1089, %v1087
        %v1104 = vpack.c.b16 %v1092, %v1090
        %v1105 = vpack.c.b16 %v1093, %v1091
        %v1106 = vpack.c.b16 %v1096, %v1094
        %v1107 = vpack.c.b16 %v1097, %v1095
        %v1108 = vpack.c.b16 %v1100, %v1098
        %v1109 = vpack.c.b16 %v1101, %v1099
        %vm1118 = vcmask 523264
        %v1120 = vsel %vm1118, %v1064, 0
        %v1123 = vsel %vm1118, %v1065, 0
        %1125 = vmatprep.subr.bf16.mxu0 0
        %1126 = vmatpush1.bf16.msra.mxu0 0
        %1127 = vmatprep.subr.bf16.mxu0 0
        %1128 = vmatpush1.bf16.msra.mxu0 0
        %1129 = vmatprep.subr.bf16.mxu0 0
        %1130 = vmatpush1.bf16.msra.mxu0 0
        %1131 = vmatprep.subr.bf16.mxu0 0
        %1132 = vmatpush1.bf16.msra.mxu0 0
        %1133 = vmatprep.subr.bf16.mxu0 %v1109
        %1134 = vmatpush1.bf16.msra.mxu0 %v1108
        %1135 = vmatprep.subr.bf16.mxu0 %v1107
        %1136 = vmatpush1.bf16.msra.mxu0 %v1106
        %1137 = vmatprep.subr.bf16.mxu0 %v1105
        %1138 = vmatpush1.bf16.msra.mxu0 %v1104
        %1139 = vmatprep.subr.bf16.mxu0 %v1103
        %1140 = vmatpush1.bf16.msra.mxu0 %v1102
        %1141 = vmatprep.subr.bf16.mxu0 0
        %1142 = vmatpush2.bf16.msra.mxu0 0
        %1143 = vmatprep.subr.bf16.mxu0 0
        %1144 = vmatpush2.bf16.msra.mxu0 0
        %1145 = vmatprep.subr.bf16.mxu0 0
        %1146 = vmatpush2.bf16.msra.mxu0 0
        %1147 = vmatprep.subr.bf16.mxu0 0
        %1148 = vmatpush2.bf16.msra.mxu0 0
        %1149 = vmatprep.subr.bf16.mxu0 0
        %1150 = vmatpush2.bf16.msra.mxu0 0
        %1151 = vmatprep.subr.bf16.mxu0 0
        %1152 = vmatpush2.bf16.msra.mxu0 0
        %1153 = vmatprep.subr.bf16.mxu0 0
        %1154 = vmatpush2.bf16.msra.mxu0 0
        %1155 = vmatprep.subr.bf16.mxu0 0
        %1156 = vmatpush2.bf16.msra.mxu0 0
        %1157 = vmatprep.mubr.bf16.mxu0 0
        %1158 = vmatmul.mubr.bf16.gmra.mxu0 %v1120
        %v1159 = vpop.f32.mrf.mxu0
        %v1160 = vadd.f32 %v1071, %v1159
        %v1161 = vpop.f32.mrf.mxu0
        %v1162 = vadd.f32 %v1075, %v1161
        %v1163 = vpop.f32.mrf.mxu0
        %v1164 = vadd.f32 %v1071, %v1163
        %v1165 = vpop.f32.mrf.mxu0
        %v1166 = vadd.f32 %v1075, %v1165
        %1167 = vmatprep.mubr.bf16.mxu0 0
        %1168 = vmatmul.mubr.bf16.gmra.mxu0 %v1123
        %v1169 = vpop.f32.mrf.mxu0
        %v1170 = vadd.f32 %v1071, %v1169
        %v1171 = vpop.f32.mrf.mxu0
        %v1172 = vadd.f32 %v1075, %v1171
        %v1173 = vpop.f32.mrf.mxu0
        %v1174 = vadd.f32 %v1071, %v1173
        %v1175 = vpop.f32.mrf.mxu0
        %v1176 = vadd.f32 %v1075, %v1175
        %1177 = vdwg.mxu0
        %v1178 = vpack.c.bf16 %v1164, %v1160
        %v1179 = vpack.c.bf16 %v1174, %v1170
        %1181 = vrot.lane.b32.xlu0 %v1178, 64
        %v1182 = vpop.permute.xlu0 %1181
        %vm1183 = vcmask 130048
        %v1185 = vsel %vm1183, %v1178, 0
        %v1188 = vsel %vm1183, %v1182, 0
        %1190 = vmatprep.subr.bf16.mxu0 0
        %1191 = vmatpush1.bf16.xpose.msra.mxu0 0
        %1192 = vmatprep.subr.bf16.mxu0 0
        %1193 = vmatpush1.bf16.xpose.msra.mxu0 0
        %1194 = vmatprep.subr.bf16.mxu0 0
        %1195 = vmatpush1.bf16.xpose.msra.mxu0 0
        %1196 = vmatprep.subr.bf16.mxu0 0
        %1197 = vmatpush1.bf16.xpose.msra.mxu0 0
        %1198 = vmatprep.subr.bf16.mxu0 0
        %1199 = vmatpush1.bf16.xpose.msra.mxu0 0
        %1200 = vmatprep.subr.bf16.mxu0 0
        %1201 = vmatpush1.bf16.xpose.msra.mxu0 0
        %1202 = vmatprep.subr.bf16.mxu0 0
        %1203 = vmatpush1.bf16.xpose.msra.mxu0 0
        %1204 = vmatprep.subr.bf16.mxu0 0
        %1205 = vmatpush1.bf16.xpose.msra.mxu0 %v1188
        %1206 = vmatprep.subr.bf16.mxu0 0
        %1207 = vmatpush2.bf16.xpose.msra.mxu0 0
        %1208 = vmatprep.subr.bf16.mxu0 0
        %1209 = vmatpush2.bf16.xpose.msra.mxu0 0
        %1210 = vmatprep.subr.bf16.mxu0 0
        %1211 = vmatpush2.bf16.xpose.msra.mxu0 0
        %1212 = vmatprep.subr.bf16.mxu0 0
        %1213 = vmatpush2.bf16.xpose.msra.mxu0 0
        %1214 = vmatprep.subr.bf16.mxu0 0
        %1215 = vmatpush2.bf16.xpose.msra.mxu0 0
        %1216 = vmatprep.subr.bf16.mxu0 0
        %1217 = vmatpush2.bf16.xpose.msra.mxu0 0
        %1218 = vmatprep.subr.bf16.mxu0 0
        %1219 = vmatpush2.bf16.xpose.msra.mxu0 0
        %1220 = vmatprep.subr.bf16.mxu0 0
        %1221 = vmatpush2.bf16.xpose.msra.mxu0 0
        %1222 = vmatprep.mubr.bf16.mxu0 0
        %1223 = vmatmul.mubr.bf16.gmra.mxu0 %v1185
        %v1224 = vpop.f32.mrf.mxu0
        %v1225 = vadd.f32 0.0, %v1224
        %v1226 = vpop.f32.mrf.mxu0
        %v1227 = vpop.f32.mrf.mxu0
        %v1228 = vadd.f32 0.0, %v1227
        %v1229 = vpop.f32.mrf.mxu0
        %1230 = vdwg.mxu0
        %1232 = vrot.lane.b32.xlu0 %v1179, 64
        %v1233 = vpop.permute.xlu0 %1232
        %v1235 = vsel %vm1183, %v1179, 0
        %v1238 = vsel %vm1183, %v1233, 0
        %1240 = vmatprep.subr.bf16.mxu0 0
        %1241 = vmatpush1.bf16.xpose.msra.mxu0 0
        %1242 = vmatprep.subr.bf16.mxu0 0
        %1243 = vmatpush1.bf16.xpose.msra.mxu0 0
        %1244 = vmatprep.subr.bf16.mxu0 0
        %1245 = vmatpush1.bf16.xpose.msra.mxu0 0
        %1246 = vmatprep.subr.bf16.mxu0 0
        %1247 = vmatpush1.bf16.xpose.msra.mxu0 0
        %1248 = vmatprep.subr.bf16.mxu0 0
        %1249 = vmatpush1.bf16.xpose.msra.mxu0 0
        %1250 = vmatprep.subr.bf16.mxu0 0
        %1251 = vmatpush1.bf16.xpose.msra.mxu0 0
        %1252 = vmatprep.subr.bf16.mxu0 0
        %1253 = vmatpush1.bf16.xpose.msra.mxu0 0
        %1254 = vmatprep.subr.bf16.mxu0 0
        %1255 = vmatpush1.bf16.xpose.msra.mxu0 %v1238
        %1256 = vmatprep.subr.bf16.mxu0 0
        %1257 = vmatpush2.bf16.xpose.msra.mxu0 0
        %1258 = vmatprep.subr.bf16.mxu0 0
        %1259 = vmatpush2.bf16.xpose.msra.mxu0 0
        %1260 = vmatprep.subr.bf16.mxu0 0
        %1261 = vmatpush2.bf16.xpose.msra.mxu0 0
        %1262 = vmatprep.subr.bf16.mxu0 0
        %1263 = vmatpush2.bf16.xpose.msra.mxu0 0
        %1264 = vmatprep.subr.bf16.mxu0 0
        %1265 = vmatpush2.bf16.xpose.msra.mxu0 0
        %1266 = vmatprep.subr.bf16.mxu0 0
        %1267 = vmatpush2.bf16.xpose.msra.mxu0 0
        %1268 = vmatprep.subr.bf16.mxu0 0
        %1269 = vmatpush2.bf16.xpose.msra.mxu0 0
        %1270 = vmatprep.subr.bf16.mxu0 0
        %1271 = vmatpush2.bf16.xpose.msra.mxu0 0
        %1272 = vmatprep.mubr.bf16.mxu0 0
        %1273 = vmatmul.mubr.bf16.gmra.mxu0 %v1235
        %v1274 = vpop.f32.mrf.mxu0
        %v1275 = vadd.f32 0.0, %v1274
        %v1276 = vpop.f32.mrf.mxu0
        %v1277 = vpop.f32.mrf.mxu0
        %v1278 = vadd.f32 0.0, %v1277
        %v1279 = vpop.f32.mrf.mxu0
        %1280 = vdwg.mxu0
        %v1281 = vsel %vm1183, %v1225, -inf
        %1282 = vmax.xlane.f32.xlu0 %v1281
        %v1283 = vpop.xlane.xlu0 %1282
        %v1284 = vsel %vm1183, %v1228, -inf
        %1285 = vmax.xlane.f32.xlu0 %v1284
        %v1286 = vpop.xlane.xlu0 %1285
        %v1287 = vsel %vm1183, %v1275, -inf
        %1288 = vmax.xlane.f32.xlu0 %v1287
        %v1289 = vpop.xlane.xlu0 %1288
        %v1290 = vsel %vm1183, %v1278, -inf
        %1291 = vmax.xlane.f32.xlu0 %v1290
        %v1292 = vpop.xlane.xlu0 %1291
        %v1293 = vsub.f32 %v1225, %v1283
        %v1294 = vsub.f32 %v1228, %v1286
        %v1295 = vsub.f32 %v1275, %v1289
        %v1296 = vsub.f32 %v1278, %v1292
        %v1297 = vmul.f32 %v1293, 1.442695
        %v1298 = vpow.pop %v1297
        %v1299 = vmul.f32 %v1294, 1.442695
        %v1300 = vpow.pop %v1299
        %v1301 = vmul.f32 %v1295, 1.442695
        %v1302 = vpow.pop %v1301
        %v1303 = vmul.f32 %v1296, 1.442695
        %v1304 = vpow.pop %v1303
        %v1305 = vsel %vm1183, %v1298, 0.0
        %1306 = vadd.xlane.f32.xlu0 %v1305
        %v1307 = vpop.xlane.xlu0 %1306
        %v1308 = vsel %vm1183, %v1300, 0.0
        %1309 = vadd.xlane.f32.xlu0 %v1308
        %v1310 = vpop.xlane.xlu0 %1309
        %v1311 = vsel %vm1183, %v1302, 0.0
        %1312 = vadd.xlane.f32.xlu0 %v1311
        %v1313 = vpop.xlane.xlu0 %1312
        %v1314 = vsel %vm1183, %v1304, 0.0
        %1315 = vadd.xlane.f32.xlu0 %v1314
        %v1316 = vpop.xlane.xlu0 %1315
        %v1317 = vrcp.pop %v1307
        %v1318 = vrcp.pop %v1310
        %v1319 = vrcp.pop %v1313
        %v1320 = vrcp.pop %v1316
        %v1321 = vmul.f32 %v1298, %v1317
        %v1322 = vmul.f32 %v1300, %v1318
        %v1323 = vmul.f32 %v1302, %v1319
        %v1324 = vmul.f32 %v1304, %v1320
        %v1325 = vpack.c.bf16 %v1322, %v1321
        %v1326 = vpack.c.bf16 %v1324, %v1323
        %v1327 = vpack.c.bf16 %v1166, %v1162
        %v1328 = vpack.c.bf16 %v1176, %v1172
        %v1330 = vsel %vm1183, %v1325, 0
        %1332 = vmatprep.subr.bf16.mxu0 0
        %1333 = vmatpush1.bf16.msra.mxu0 0
        %1334 = vmatprep.subr.bf16.mxu0 0
        %1335 = vmatpush1.bf16.msra.mxu0 0
        %1336 = vmatprep.subr.bf16.mxu0 0
        %1337 = vmatpush1.bf16.msra.mxu0 0
        %1338 = vmatprep.subr.bf16.mxu0 0
        %1339 = vmatpush1.bf16.msra.mxu0 0
        %1340 = vmatprep.subr.bf16.mxu0 0
        %1341 = vmatpush1.bf16.msra.mxu0 0
        %1342 = vmatprep.subr.bf16.mxu0 0
        %1343 = vmatpush1.bf16.msra.mxu0 0
        %1344 = vmatprep.subr.bf16.mxu0 0
        %1345 = vmatpush1.bf16.msra.mxu0 0
        %1346 = vmatprep.subr.bf16.mxu0 0
        %1347 = vmatpush1.bf16.msra.mxu0 %v1327
        %1348 = vmatprep.subr.bf16.mxu0 0
        %1349 = vmatpush2.bf16.msra.mxu0 0
        %1350 = vmatprep.subr.bf16.mxu0 0
        %1351 = vmatpush2.bf16.msra.mxu0 0
        %1352 = vmatprep.subr.bf16.mxu0 0
        %1353 = vmatpush2.bf16.msra.mxu0 0
        %1354 = vmatprep.subr.bf16.mxu0 0
        %1355 = vmatpush2.bf16.msra.mxu0 0
        %1356 = vmatprep.subr.bf16.mxu0 0
        %1357 = vmatpush2.bf16.msra.mxu0 0
        %1358 = vmatprep.subr.bf16.mxu0 0
        %1359 = vmatpush2.bf16.msra.mxu0 0
        %1360 = vmatprep.subr.bf16.mxu0 0
        %1361 = vmatpush2.bf16.msra.mxu0 0
        %1362 = vmatprep.subr.bf16.mxu0 0
        %1363 = vmatpush2.bf16.msra.mxu0 0
        %1364 = vmatprep.mubr.bf16.mxu0 0
        %1365 = vmatmul.mubr.bf16.gmra.mxu0 %v1330
        %v1366 = vpop.f32.mrf.mxu0
        %v1367 = vadd.f32 0.0, %v1366
        %v1368 = vpop.f32.mrf.mxu0
        %v1369 = vpop.f32.mrf.mxu0
        %v1370 = vadd.f32 0.0, %v1369
        %v1371 = vpop.f32.mrf.mxu0
        %1372 = vdwg.mxu0
        %v1374 = vsel %vm1183, %v1326, 0
        %1376 = vmatprep.subr.bf16.mxu0 0
        %1377 = vmatpush1.bf16.msra.mxu0 0
        %1378 = vmatprep.subr.bf16.mxu0 0
        %1379 = vmatpush1.bf16.msra.mxu0 0
        %1380 = vmatprep.subr.bf16.mxu0 0
        %1381 = vmatpush1.bf16.msra.mxu0 0
        %1382 = vmatprep.subr.bf16.mxu0 0
        %1383 = vmatpush1.bf16.msra.mxu0 0
        %1384 = vmatprep.subr.bf16.mxu0 0
        %1385 = vmatpush1.bf16.msra.mxu0 0
        %1386 = vmatprep.subr.bf16.mxu0 0
        %1387 = vmatpush1.bf16.msra.mxu0 0
        %1388 = vmatprep.subr.bf16.mxu0 0
        %1389 = vmatpush1.bf16.msra.mxu0 0
        %1390 = vmatprep.subr.bf16.mxu0 0
        %1391 = vmatpush1.bf16.msra.mxu0 %v1328
        %1392 = vmatprep.subr.bf16.mxu0 0
        %1393 = vmatpush2.bf16.msra.mxu0 0
        %1394 = vmatprep.subr.bf16.mxu0 0
        %1395 = vmatpush2.bf16.msra.mxu0 0
        %1396 = vmatprep.subr.bf16.mxu0 0
        %1397 = vmatpush2.bf16.msra.mxu0 0
        %1398 = vmatprep.subr.bf16.mxu0 0
        %1399 = vmatpush2.bf16.msra.mxu0 0
        %1400 = vmatprep.subr.bf16.mxu0 0
        %1401 = vmatpush2.bf16.msra.mxu0 0
        %1402 = vmatprep.subr.bf16.mxu0 0
        %1403 = vmatpush2.bf16.msra.mxu0 0
        %1404 = vmatprep.subr.bf16.mxu0 0
        %1405 = vmatpush2.bf16.msra.mxu0 0
        %1406 = vmatprep.subr.bf16.mxu0 0
        %1407 = vmatpush2.bf16.msra.mxu0 0
        %1408 = vmatprep.mubr.bf16.mxu0 0
        %1409 = vmatmul.mubr.bf16.gmra.mxu0 %v1374
        %v1410 = vpop.f32.mrf.mxu0
        %v1411 = vadd.f32 0.0, %v1410
        %v1412 = vpop.f32.mrf.mxu0
        %v1413 = vpop.f32.mrf.mxu0
        %v1414 = vadd.f32 0.0, %v1413
        %v1415 = vpop.f32.mrf.mxu0
        %1416 = vdwg.mxu0
        %1417 = vrot.lane.b32.xlu0 %v1178, 112
        %v1418 = vpop.permute.xlu0 %1417
        %1419 = vrot.lane.b32.xlu0 %v1178, 48
        %v1420 = vpop.permute.xlu0 %1419
        %v1422 = vsel %vm1183, %v1418, 0
        %v1425 = vsel %vm1183, %v1420, 0
        %1427 = vmatprep.subr.bf16.mxu0 0
        %1428 = vmatpush1.bf16.xpose.msra.mxu0 0
        %1429 = vmatprep.subr.bf16.mxu0 0
        %1430 = vmatpush1.bf16.xpose.msra.mxu0 0
        %1431 = vmatprep.subr.bf16.mxu0 0
        %1432 = vmatpush1.bf16.xpose.msra.mxu0 0
        %1433 = vmatprep.subr.bf16.mxu0 0
        %1434 = vmatpush1.bf16.xpose.msra.mxu0 0
        %1435 = vmatprep.subr.bf16.mxu0 0
        %1436 = vmatpush1.bf16.xpose.msra.mxu0 0
        %1437 = vmatprep.subr.bf16.mxu0 0
        %1438 = vmatpush1.bf16.xpose.msra.mxu0 0
        %1439 = vmatprep.subr.bf16.mxu0 0
        %1440 = vmatpush1.bf16.xpose.msra.mxu0 0
        %1441 = vmatprep.subr.bf16.mxu0 0
        %1442 = vmatpush1.bf16.xpose.msra.mxu0 %v1425
        %1443 = vmatprep.subr.bf16.mxu0 0
        %1444 = vmatpush2.bf16.xpose.msra.mxu0 0
        %1445 = vmatprep.subr.bf16.mxu0 0
        %1446 = vmatpush2.bf16.xpose.msra.mxu0 0
        %1447 = vmatprep.subr.bf16.mxu0 0
        %1448 = vmatpush2.bf16.xpose.msra.mxu0 0
        %1449 = vmatprep.subr.bf16.mxu0 0
        %1450 = vmatpush2.bf16.xpose.msra.mxu0 0
        %1451 = vmatprep.subr.bf16.mxu0 0
        %1452 = vmatpush2.bf16.xpose.msra.mxu0 0
        %1453 = vmatprep.subr.bf16.mxu0 0
        %1454 = vmatpush2.bf16.xpose.msra.mxu0 0
        %1455 = vmatprep.subr.bf16.mxu0 0
        %1456 = vmatpush2.bf16.xpose.msra.mxu0 0
        %1457 = vmatprep.subr.bf16.mxu0 0
        %1458 = vmatpush2.bf16.xpose.msra.mxu0 0
        %1459 = vmatprep.mubr.bf16.mxu0 0
        %1460 = vmatmul.mubr.bf16.gmra.mxu0 %v1422
        %v1461 = vpop.f32.mrf.mxu0
        %v1462 = vadd.f32 0.0, %v1461
        %v1463 = vpop.f32.mrf.mxu0
        %v1464 = vpop.f32.mrf.mxu0
        %v1465 = vadd.f32 0.0, %v1464
        %v1466 = vpop.f32.mrf.mxu0
        %1467 = vdwg.mxu0
        %1468 = vrot.lane.b32.xlu0 %v1179, 112
        %v1469 = vpop.permute.xlu0 %1468
        %1470 = vrot.lane.b32.xlu0 %v1179, 48
        %v1471 = vpop.permute.xlu0 %1470
        %v1473 = vsel %vm1183, %v1469, 0
        %v1476 = vsel %vm1183, %v1471, 0
        %1478 = vmatprep.subr.bf16.mxu0 0
        %1479 = vmatpush1.bf16.xpose.msra.mxu0 0
        %1480 = vmatprep.subr.bf16.mxu0 0
        %1481 = vmatpush1.bf16.xpose.msra.mxu0 0
        %1482 = vmatprep.subr.bf16.mxu0 0
        %1483 = vmatpush1.bf16.xpose.msra.mxu0 0
        %1484 = vmatprep.subr.bf16.mxu0 0
        %1485 = vmatpush1.bf16.xpose.msra.mxu0 0
        %1486 = vmatprep.subr.bf16.mxu0 0
        %1487 = vmatpush1.bf16.xpose.msra.mxu0 0
        %1488 = vmatprep.subr.bf16.mxu0 0
        %1489 = vmatpush1.bf16.xpose.msra.mxu0 0
        %1490 = vmatprep.subr.bf16.mxu0 0
        %1491 = vmatpush1.bf16.xpose.msra.mxu0 0
        %1492 = vmatprep.subr.bf16.mxu0 0
        %1493 = vmatpush1.bf16.xpose.msra.mxu0 %v1476
        %1494 = vmatprep.subr.bf16.mxu0 0
        %1495 = vmatpush2.bf16.xpose.msra.mxu0 0
        %1496 = vmatprep.subr.bf16.mxu0 0
        %1497 = vmatpush2.bf16.xpose.msra.mxu0 0
        %1498 = vmatprep.subr.bf16.mxu0 0
        %1499 = vmatpush2.bf16.xpose.msra.mxu0 0
        %1500 = vmatprep.subr.bf16.mxu0 0
        %1501 = vmatpush2.bf16.xpose.msra.mxu0 0
        %1502 = vmatprep.subr.bf16.mxu0 0
        %1503 = vmatpush2.bf16.xpose.msra.mxu0 0
        %1504 = vmatprep.subr.bf16.mxu0 0
        %1505 = vmatpush2.bf16.xpose.msra.mxu0 0
        %1506 = vmatprep.subr.bf16.mxu0 0
        %1507 = vmatpush2.bf16.xpose.msra.mxu0 0
        %1508 = vmatprep.subr.bf16.mxu0 0
        %1509 = vmatpush2.bf16.xpose.msra.mxu0 0
        %1510 = vmatprep.mubr.bf16.mxu0 0
        %1511 = vmatmul.mubr.bf16.gmra.mxu0 %v1473
        %v1512 = vpop.f32.mrf.mxu0
        %v1513 = vadd.f32 0.0, %v1512
        %v1514 = vpop.f32.mrf.mxu0
        %v1515 = vpop.f32.mrf.mxu0
        %v1516 = vadd.f32 0.0, %v1515
        %v1517 = vpop.f32.mrf.mxu0
        %1518 = vdwg.mxu0
        %v1519 = vsel %vm1183, %v1462, -inf
        %1520 = vmax.xlane.f32.xlu0 %v1519
        %v1521 = vpop.xlane.xlu0 %1520
        %v1522 = vsel %vm1183, %v1465, -inf
        %1523 = vmax.xlane.f32.xlu0 %v1522
        %v1524 = vpop.xlane.xlu0 %1523
        %v1525 = vsel %vm1183, %v1513, -inf
        %1526 = vmax.xlane.f32.xlu0 %v1525
        %v1527 = vpop.xlane.xlu0 %1526
        %v1528 = vsel %vm1183, %v1516, -inf
        %1529 = vmax.xlane.f32.xlu0 %v1528
        %v1530 = vpop.xlane.xlu0 %1529
        %v1531 = vsub.f32 %v1462, %v1521
        %v1532 = vsub.f32 %v1465, %v1524
        %v1533 = vsub.f32 %v1513, %v1527
        %v1534 = vsub.f32 %v1516, %v1530
        %v1535 = vmul.f32 %v1531, 1.442695
        %v1536 = vpow.pop %v1535
        %v1537 = vmul.f32 %v1532, 1.442695
        %v1538 = vpow.pop %v1537
        %v1539 = vmul.f32 %v1533, 1.442695
        %v1540 = vpow.pop %v1539
        %v1541 = vmul.f32 %v1534, 1.442695
        %v1542 = vpow.pop %v1541
        %v1543 = vsel %vm1183, %v1536, 0.0
        %1544 = vadd.xlane.f32.xlu0 %v1543
        %v1545 = vpop.xlane.xlu0 %1544
        %v1546 = vsel %vm1183, %v1538, 0.0
        %1547 = vadd.xlane.f32.xlu0 %v1546
        %v1548 = vpop.xlane.xlu0 %1547
        %v1549 = vsel %vm1183, %v1540, 0.0
        %1550 = vadd.xlane.f32.xlu0 %v1549
        %v1551 = vpop.xlane.xlu0 %1550
        %v1552 = vsel %vm1183, %v1542, 0.0
        %1553 = vadd.xlane.f32.xlu0 %v1552
        %v1554 = vpop.xlane.xlu0 %1553
        %v1555 = vrcp.pop %v1545
        %v1556 = vrcp.pop %v1548
        %v1557 = vrcp.pop %v1551
        %v1558 = vrcp.pop %v1554
        %v1559 = vmul.f32 %v1536, %v1555
        %v1560 = vmul.f32 %v1538, %v1556
        %v1561 = vmul.f32 %v1540, %v1557
        %v1562 = vmul.f32 %v1542, %v1558
        %v1563 = vpack.c.bf16 %v1560, %v1559
        %v1564 = vpack.c.bf16 %v1562, %v1561
        %1566 = vrot.lane.b32.xlu0 %v1327, 112
        %v1567 = vpop.permute.xlu0 %1566
        %v1570 = vsel %vm1183, %v1563, 0
        %1572 = vmatprep.subr.bf16.mxu0 0
        %1573 = vmatpush1.bf16.msra.mxu0 0
        %1574 = vmatprep.subr.bf16.mxu0 0
        %1575 = vmatpush1.bf16.msra.mxu0 0
        %1576 = vmatprep.subr.bf16.mxu0 0
        %1577 = vmatpush1.bf16.msra.mxu0 0
        %1578 = vmatprep.subr.bf16.mxu0 0
        %1579 = vmatpush1.bf16.msra.mxu0 0
        %1580 = vmatprep.subr.bf16.mxu0 0
        %1581 = vmatpush1.bf16.msra.mxu0 0
        %1582 = vmatprep.subr.bf16.mxu0 0
        %1583 = vmatpush1.bf16.msra.mxu0 0
        %1584 = vmatprep.subr.bf16.mxu0 0
        %1585 = vmatpush1.bf16.msra.mxu0 0
        %1586 = vmatprep.subr.bf16.mxu0 0
        %1587 = vmatpush1.bf16.msra.mxu0 %v1567
        %1588 = vmatprep.subr.bf16.mxu0 0
        %1589 = vmatpush2.bf16.msra.mxu0 0
        %1590 = vmatprep.subr.bf16.mxu0 0
        %1591 = vmatpush2.bf16.msra.mxu0 0
        %1592 = vmatprep.subr.bf16.mxu0 0
        %1593 = vmatpush2.bf16.msra.mxu0 0
        %1594 = vmatprep.subr.bf16.mxu0 0
        %1595 = vmatpush2.bf16.msra.mxu0 0
        %1596 = vmatprep.subr.bf16.mxu0 0
        %1597 = vmatpush2.bf16.msra.mxu0 0
        %1598 = vmatprep.subr.bf16.mxu0 0
        %1599 = vmatpush2.bf16.msra.mxu0 0
        %1600 = vmatprep.subr.bf16.mxu0 0
        %1601 = vmatpush2.bf16.msra.mxu0 0
        %1602 = vmatprep.subr.bf16.mxu0 0
        %1603 = vmatpush2.bf16.msra.mxu0 0
        %1604 = vmatprep.mubr.bf16.mxu0 0
        %1605 = vmatmul.mubr.bf16.gmra.mxu0 %v1570
        %v1606 = vpop.f32.mrf.mxu0
        %v1607 = vadd.f32 0.0, %v1606
        %v1608 = vpop.f32.mrf.mxu0
        %v1609 = vpop.f32.mrf.mxu0
        %v1610 = vadd.f32 0.0, %v1609
        %v1611 = vpop.f32.mrf.mxu0
        %1612 = vdwg.mxu0
        %1614 = vrot.lane.b32.xlu0 %v1328, 112
        %v1615 = vpop.permute.xlu0 %1614
        %v1618 = vsel %vm1183, %v1564, 0
        %1620 = vmatprep.subr.bf16.mxu0 0
        %1621 = vmatpush1.bf16.msra.mxu0 0
        %1622 = vmatprep.subr.bf16.mxu0 0
        %1623 = vmatpush1.bf16.msra.mxu0 0
        %1624 = vmatprep.subr.bf16.mxu0 0
        %1625 = vmatpush1.bf16.msra.mxu0 0
        %1626 = vmatprep.subr.bf16.mxu0 0
        %1627 = vmatpush1.bf16.msra.mxu0 0
        %1628 = vmatprep.subr.bf16.mxu0 0
        %1629 = vmatpush1.bf16.msra.mxu0 0
        %1630 = vmatprep.subr.bf16.mxu0 0
        %1631 = vmatpush1.bf16.msra.mxu0 0
        %1632 = vmatprep.subr.bf16.mxu0 0
        %1633 = vmatpush1.bf16.msra.mxu0 0
        %1634 = vmatprep.subr.bf16.mxu0 0
        %1635 = vmatpush1.bf16.msra.mxu0 %v1615
        %1636 = vmatprep.subr.bf16.mxu0 0
        %1637 = vmatpush2.bf16.msra.mxu0 0
        %1638 = vmatprep.subr.bf16.mxu0 0
        %1639 = vmatpush2.bf16.msra.mxu0 0
        %1640 = vmatprep.subr.bf16.mxu0 0
        %1641 = vmatpush2.bf16.msra.mxu0 0
        %1642 = vmatprep.subr.bf16.mxu0 0
        %1643 = vmatpush2.bf16.msra.mxu0 0
        %1644 = vmatprep.subr.bf16.mxu0 0
        %1645 = vmatpush2.bf16.msra.mxu0 0
        %1646 = vmatprep.subr.bf16.mxu0 0
        %1647 = vmatpush2.bf16.msra.mxu0 0
        %1648 = vmatprep.subr.bf16.mxu0 0
        %1649 = vmatpush2.bf16.msra.mxu0 0
        %1650 = vmatprep.subr.bf16.mxu0 0
        %1651 = vmatpush2.bf16.msra.mxu0 0
        %1652 = vmatprep.mubr.bf16.mxu0 0
        %1653 = vmatmul.mubr.bf16.gmra.mxu0 %v1618
        %v1654 = vpop.f32.mrf.mxu0
        %v1655 = vadd.f32 0.0, %v1654
        %v1656 = vpop.f32.mrf.mxu0
        %v1657 = vpop.f32.mrf.mxu0
        %v1658 = vadd.f32 0.0, %v1657
        %v1659 = vpop.f32.mrf.mxu0
        %1660 = vdwg.mxu0
        %1661 = vrot.lane.b32.xlu0 %v1178, 96
        %v1662 = vpop.permute.xlu0 %1661
        %1663 = vrot.lane.b32.xlu0 %v1178, 32
        %v1664 = vpop.permute.xlu0 %1663
        %v1666 = vsel %vm1183, %v1662, 0
        %v1669 = vsel %vm1183, %v1664, 0
        %1671 = vmatprep.subr.bf16.mxu0 0
        %1672 = vmatpush1.bf16.xpose.msra.mxu0 0
        %1673 = vmatprep.subr.bf16.mxu0 0
        %1674 = vmatpush1.bf16.xpose.msra.mxu0 0
        %1675 = vmatprep.subr.bf16.mxu0 0
        %1676 = vmatpush1.bf16.xpose.msra.mxu0 0
        %1677 = vmatprep.subr.bf16.mxu0 0
        %1678 = vmatpush1.bf16.xpose.msra.mxu0 0
        %1679 = vmatprep.subr.bf16.mxu0 0
        %1680 = vmatpush1.bf16.xpose.msra.mxu0 0
        %1681 = vmatprep.subr.bf16.mxu0 0
        %1682 = vmatpush1.bf16.xpose.msra.mxu0 0
        %1683 = vmatprep.subr.bf16.mxu0 0
        %1684 = vmatpush1.bf16.xpose.msra.mxu0 0
        %1685 = vmatprep.subr.bf16.mxu0 0
        %1686 = vmatpush1.bf16.xpose.msra.mxu0 %v1669
        %1687 = vmatprep.subr.bf16.mxu0 0
        %1688 = vmatpush2.bf16.xpose.msra.mxu0 0
        %1689 = vmatprep.subr.bf16.mxu0 0
        %1690 = vmatpush2.bf16.xpose.msra.mxu0 0
        %1691 = vmatprep.subr.bf16.mxu0 0
        %1692 = vmatpush2.bf16.xpose.msra.mxu0 0
        %1693 = vmatprep.subr.bf16.mxu0 0
        %1694 = vmatpush2.bf16.xpose.msra.mxu0 0
        %1695 = vmatprep.subr.bf16.mxu0 0
        %1696 = vmatpush2.bf16.xpose.msra.mxu0 0
        %1697 = vmatprep.subr.bf16.mxu0 0
        %1698 = vmatpush2.bf16.xpose.msra.mxu0 0
        %1699 = vmatprep.subr.bf16.mxu0 0
        %1700 = vmatpush2.bf16.xpose.msra.mxu0 0
        %1701 = vmatprep.subr.bf16.mxu0 0
        %1702 = vmatpush2.bf16.xpose.msra.mxu0 0
        %1703 = vmatprep.mubr.bf16.mxu0 0
        %1704 = vmatmul.mubr.bf16.gmra.mxu0 %v1666
        %v1705 = vpop.f32.mrf.mxu0
        %v1706 = vadd.f32 0.0, %v1705
        %v1707 = vpop.f32.mrf.mxu0
        %v1708 = vpop.f32.mrf.mxu0
        %v1709 = vadd.f32 0.0, %v1708
        %v1710 = vpop.f32.mrf.mxu0
        %1711 = vdwg.mxu0
        %1712 = vrot.lane.b32.xlu0 %v1179, 96
        %v1713 = vpop.permute.xlu0 %1712
        %1714 = vrot.lane.b32.xlu0 %v1179, 32
        %v1715 = vpop.permute.xlu0 %1714
        %v1717 = vsel %vm1183, %v1713, 0
        %v1720 = vsel %vm1183, %v1715, 0
        %1722 = vmatprep.subr.bf16.mxu0 0
        %1723 = vmatpush1.bf16.xpose.msra.mxu0 0
        %1724 = vmatprep.subr.bf16.mxu0 0
        %1725 = vmatpush1.bf16.xpose.msra.mxu0 0
        %1726 = vmatprep.subr.bf16.mxu0 0
        %1727 = vmatpush1.bf16.xpose.msra.mxu0 0
        %1728 = vmatprep.subr.bf16.mxu0 0
        %1729 = vmatpush1.bf16.xpose.msra.mxu0 0
        %1730 = vmatprep.subr.bf16.mxu0 0
        %1731 = vmatpush1.bf16.xpose.msra.mxu0 0
        %1732 = vmatprep.subr.bf16.mxu0 0
        %1733 = vmatpush1.bf16.xpose.msra.mxu0 0
        %1734 = vmatprep.subr.bf16.mxu0 0
        %1735 = vmatpush1.bf16.xpose.msra.mxu0 0
        %1736 = vmatprep.subr.bf16.mxu0 0
        %1737 = vmatpush1.bf16.xpose.msra.mxu0 %v1720
        %1738 = vmatprep.subr.bf16.mxu0 0
        %1739 = vmatpush2.bf16.xpose.msra.mxu0 0
        %1740 = vmatprep.subr.bf16.mxu0 0
        %1741 = vmatpush2.bf16.xpose.msra.mxu0 0
        %1742 = vmatprep.subr.bf16.mxu0 0
        %1743 = vmatpush2.bf16.xpose.msra.mxu0 0
        %1744 = vmatprep.subr.bf16.mxu0 0
        %1745 = vmatpush2.bf16.xpose.msra.mxu0 0
        %1746 = vmatprep.subr.bf16.mxu0 0
        %1747 = vmatpush2.bf16.xpose.msra.mxu0 0
        %1748 = vmatprep.subr.bf16.mxu0 0
        %1749 = vmatpush2.bf16.xpose.msra.mxu0 0
        %1750 = vmatprep.subr.bf16.mxu0 0
        %1751 = vmatpush2.bf16.xpose.msra.mxu0 0
        %1752 = vmatprep.subr.bf16.mxu0 0
        %1753 = vmatpush2.bf16.xpose.msra.mxu0 0
        %1754 = vmatprep.mubr.bf16.mxu0 0
        %1755 = vmatmul.mubr.bf16.gmra.mxu0 %v1717
        %v1756 = vpop.f32.mrf.mxu0
        %v1757 = vadd.f32 0.0, %v1756
        %v1758 = vpop.f32.mrf.mxu0
        %v1759 = vpop.f32.mrf.mxu0
        %v1760 = vadd.f32 0.0, %v1759
        %v1761 = vpop.f32.mrf.mxu0
        %1762 = vdwg.mxu0
        %v1763 = vsel %vm1183, %v1706, -inf
        %1764 = vmax.xlane.f32.xlu0 %v1763
        %v1765 = vpop.xlane.xlu0 %1764
        %v1766 = vsel %vm1183, %v1709, -inf
        %1767 = vmax.xlane.f32.xlu0 %v1766
        %v1768 = vpop.xlane.xlu0 %1767
        %v1769 = vsel %vm1183, %v1757, -inf
        %1770 = vmax.xlane.f32.xlu0 %v1769
        %v1771 = vpop.xlane.xlu0 %1770
        %v1772 = vsel %vm1183, %v1760, -inf
        %1773 = vmax.xlane.f32.xlu0 %v1772
        %v1774 = vpop.xlane.xlu0 %1773
        %v1775 = vsub.f32 %v1706, %v1765
        %v1776 = vsub.f32 %v1709, %v1768
        %v1777 = vsub.f32 %v1757, %v1771
        %v1778 = vsub.f32 %v1760, %v1774
        %v1779 = vmul.f32 %v1775, 1.442695
        %v1780 = vpow.pop %v1779
        %v1781 = vmul.f32 %v1776, 1.442695
        %v1782 = vpow.pop %v1781
        %v1783 = vmul.f32 %v1777, 1.442695
        %v1784 = vpow.pop %v1783
        %v1785 = vmul.f32 %v1778, 1.442695
        %v1786 = vpow.pop %v1785
        %v1787 = vsel %vm1183, %v1780, 0.0
        %1788 = vadd.xlane.f32.xlu0 %v1787
        %v1789 = vpop.xlane.xlu0 %1788
        %v1790 = vsel %vm1183, %v1782, 0.0
        %1791 = vadd.xlane.f32.xlu0 %v1790
        %v1792 = vpop.xlane.xlu0 %1791
        %v1793 = vsel %vm1183, %v1784, 0.0
        %1794 = vadd.xlane.f32.xlu0 %v1793
        %v1795 = vpop.xlane.xlu0 %1794
        %v1796 = vsel %vm1183, %v1786, 0.0
        %1797 = vadd.xlane.f32.xlu0 %v1796
        %v1798 = vpop.xlane.xlu0 %1797
        %v1799 = vrcp.pop %v1789
        %v1800 = vrcp.pop %v1792
        %v1801 = vrcp.pop %v1795
        %v1802 = vrcp.pop %v1798
        %v1803 = vmul.f32 %v1780, %v1799
        %v1804 = vmul.f32 %v1782, %v1800
        %v1805 = vmul.f32 %v1784, %v1801
        %v1806 = vmul.f32 %v1786, %v1802
        %v1807 = vpack.c.bf16 %v1804, %v1803
        %v1808 = vpack.c.bf16 %v1806, %v1805
        %1809 = vrot.lane.b32.xlu0 %v1327, 96
        %v1810 = vpop.permute.xlu0 %1809
        %v1813 = vsel %vm1183, %v1807, 0
        %1815 = vmatprep.subr.bf16.mxu0 0
        %1816 = vmatpush1.bf16.msra.mxu0 0
        %1817 = vmatprep.subr.bf16.mxu0 0
        %1818 = vmatpush1.bf16.msra.mxu0 0
        %1819 = vmatprep.subr.bf16.mxu0 0
        %1820 = vmatpush1.bf16.msra.mxu0 0
        %1821 = vmatprep.subr.bf16.mxu0 0
        %1822 = vmatpush1.bf16.msra.mxu0 0
        %1823 = vmatprep.subr.bf16.mxu0 0
        %1824 = vmatpush1.bf16.msra.mxu0 0
        %1825 = vmatprep.subr.bf16.mxu0 0
        %1826 = vmatpush1.bf16.msra.mxu0 0
        %1827 = vmatprep.subr.bf16.mxu0 0
        %1828 = vmatpush1.bf16.msra.mxu0 0
        %1829 = vmatprep.subr.bf16.mxu0 0
        %1830 = vmatpush1.bf16.msra.mxu0 %v1810
        %1831 = vmatprep.subr.bf16.mxu0 0
        %1832 = vmatpush2.bf16.msra.mxu0 0
        %1833 = vmatprep.subr.bf16.mxu0 0
        %1834 = vmatpush2.bf16.msra.mxu0 0
        %1835 = vmatprep.subr.bf16.mxu0 0
        %1836 = vmatpush2.bf16.msra.mxu0 0
        %1837 = vmatprep.subr.bf16.mxu0 0
        %1838 = vmatpush2.bf16.msra.mxu0 0
        %1839 = vmatprep.subr.bf16.mxu0 0
        %1840 = vmatpush2.bf16.msra.mxu0 0
        %1841 = vmatprep.subr.bf16.mxu0 0
        %1842 = vmatpush2.bf16.msra.mxu0 0
        %1843 = vmatprep.subr.bf16.mxu0 0
        %1844 = vmatpush2.bf16.msra.mxu0 0
        %1845 = vmatprep.subr.bf16.mxu0 0
        %1846 = vmatpush2.bf16.msra.mxu0 0
        %1847 = vmatprep.mubr.bf16.mxu0 0
        %1848 = vmatmul.mubr.bf16.gmra.mxu0 %v1813
        %v1849 = vpop.f32.mrf.mxu0
        %v1850 = vadd.f32 0.0, %v1849
        %v1851 = vpop.f32.mrf.mxu0
        %v1852 = vpop.f32.mrf.mxu0
        %v1853 = vadd.f32 0.0, %v1852
        %v1854 = vpop.f32.mrf.mxu0
        %1855 = vdwg.mxu0
        %1856 = vrot.lane.b32.xlu0 %v1328, 96
        %v1857 = vpop.permute.xlu0 %1856
        %v1860 = vsel %vm1183, %v1808, 0
        %1862 = vmatprep.subr.bf16.mxu0 0
        %1863 = vmatpush1.bf16.msra.mxu0 0
        %1864 = vmatprep.subr.bf16.mxu0 0
        %1865 = vmatpush1.bf16.msra.mxu0 0
        %1866 = vmatprep.subr.bf16.mxu0 0
        %1867 = vmatpush1.bf16.msra.mxu0 0
        %1868 = vmatprep.subr.bf16.mxu0 0
        %1869 = vmatpush1.bf16.msra.mxu0 0
        %1870 = vmatprep.subr.bf16.mxu0 0
        %1871 = vmatpush1.bf16.msra.mxu0 0
        %1872 = vmatprep.subr.bf16.mxu0 0
        %1873 = vmatpush1.bf16.msra.mxu0 0
        %1874 = vmatprep.subr.bf16.mxu0 0
        %1875 = vmatpush1.bf16.msra.mxu0 0
        %1876 = vmatprep.subr.bf16.mxu0 0
        %1877 = vmatpush1.bf16.msra.mxu0 %v1857
        %1878 = vmatprep.subr.bf16.mxu0 0
        %1879 = vmatpush2.bf16.msra.mxu0 0
        %1880 = vmatprep.subr.bf16.mxu0 0
        %1881 = vmatpush2.bf16.msra.mxu0 0
        %1882 = vmatprep.subr.bf16.mxu0 0
        %1883 = vmatpush2.bf16.msra.mxu0 0
        %1884 = vmatprep.subr.bf16.mxu0 0
        %1885 = vmatpush2.bf16.msra.mxu0 0
        %1886 = vmatprep.subr.bf16.mxu0 0
        %1887 = vmatpush2.bf16.msra.mxu0 0
        %1888 = vmatprep.subr.bf16.mxu0 0
        %1889 = vmatpush2.bf16.msra.mxu0 0
        %1890 = vmatprep.subr.bf16.mxu0 0
        %1891 = vmatpush2.bf16.msra.mxu0 0
        %1892 = vmatprep.subr.bf16.mxu0 0
        %1893 = vmatpush2.bf16.msra.mxu0 0
        %1894 = vmatprep.mubr.bf16.mxu0 0
        %1895 = vmatmul.mubr.bf16.gmra.mxu0 %v1860
        %v1896 = vpop.f32.mrf.mxu0
        %v1897 = vadd.f32 0.0, %v1896
        %v1898 = vpop.f32.mrf.mxu0
        %v1899 = vpop.f32.mrf.mxu0
        %v1900 = vadd.f32 0.0, %v1899
        %v1901 = vpop.f32.mrf.mxu0
        %1902 = vdwg.mxu0
        %1903 = vrot.lane.b32.xlu0 %v1178, 80
        %v1904 = vpop.permute.xlu0 %1903
        %1905 = vrot.lane.b32.xlu0 %v1178, 16
        %v1906 = vpop.permute.xlu0 %1905
        %v1908 = vsel %vm1183, %v1904, 0
        %v1911 = vsel %vm1183, %v1906, 0
        %1913 = vmatprep.subr.bf16.mxu0 0
        %1914 = vmatpush1.bf16.xpose.msra.mxu0 0
        %1915 = vmatprep.subr.bf16.mxu0 0
        %1916 = vmatpush1.bf16.xpose.msra.mxu0 0
        %1917 = vmatprep.subr.bf16.mxu0 0
        %1918 = vmatpush1.bf16.xpose.msra.mxu0 0
        %1919 = vmatprep.subr.bf16.mxu0 0
        %1920 = vmatpush1.bf16.xpose.msra.mxu0 0
        %1921 = vmatprep.subr.bf16.mxu0 0
        %1922 = vmatpush1.bf16.xpose.msra.mxu0 0
        %1923 = vmatprep.subr.bf16.mxu0 0
        %1924 = vmatpush1.bf16.xpose.msra.mxu0 0
        %1925 = vmatprep.subr.bf16.mxu0 0
        %1926 = vmatpush1.bf16.xpose.msra.mxu0 0
        %1927 = vmatprep.subr.bf16.mxu0 0
        %1928 = vmatpush1.bf16.xpose.msra.mxu0 %v1911
        %1929 = vmatprep.subr.bf16.mxu0 0
        %1930 = vmatpush2.bf16.xpose.msra.mxu0 0
        %1931 = vmatprep.subr.bf16.mxu0 0
        %1932 = vmatpush2.bf16.xpose.msra.mxu0 0
        %1933 = vmatprep.subr.bf16.mxu0 0
        %1934 = vmatpush2.bf16.xpose.msra.mxu0 0
        %1935 = vmatprep.subr.bf16.mxu0 0
        %1936 = vmatpush2.bf16.xpose.msra.mxu0 0
        %1937 = vmatprep.subr.bf16.mxu0 0
        %1938 = vmatpush2.bf16.xpose.msra.mxu0 0
        %1939 = vmatprep.subr.bf16.mxu0 0
        %1940 = vmatpush2.bf16.xpose.msra.mxu0 0
        %1941 = vmatprep.subr.bf16.mxu0 0
        %1942 = vmatpush2.bf16.xpose.msra.mxu0 0
        %1943 = vmatprep.subr.bf16.mxu0 0
        %1944 = vmatpush2.bf16.xpose.msra.mxu0 0
        %1945 = vmatprep.mubr.bf16.mxu0 0
        %1946 = vmatmul.mubr.bf16.gmra.mxu0 %v1908
        %v1947 = vpop.f32.mrf.mxu0
        %v1948 = vadd.f32 0.0, %v1947
        %v1949 = vpop.f32.mrf.mxu0
        %v1950 = vpop.f32.mrf.mxu0
        %v1951 = vadd.f32 0.0, %v1950
        %v1952 = vpop.f32.mrf.mxu0
        %1953 = vdwg.mxu0
        %1954 = vrot.lane.b32.xlu0 %v1179, 80
        %v1955 = vpop.permute.xlu0 %1954
        %1956 = vrot.lane.b32.xlu0 %v1179, 16
        %v1957 = vpop.permute.xlu0 %1956
        %v1959 = vsel %vm1183, %v1955, 0
        %v1962 = vsel %vm1183, %v1957, 0
        %1964 = vmatprep.subr.bf16.mxu0 0
        %1965 = vmatpush1.bf16.xpose.msra.mxu0 0
        %1966 = vmatprep.subr.bf16.mxu0 0
        %1967 = vmatpush1.bf16.xpose.msra.mxu0 0
        %1968 = vmatprep.subr.bf16.mxu0 0
        %1969 = vmatpush1.bf16.xpose.msra.mxu0 0
        %1970 = vmatprep.subr.bf16.mxu0 0
        %1971 = vmatpush1.bf16.xpose.msra.mxu0 0
        %1972 = vmatprep.subr.bf16.mxu0 0
        %1973 = vmatpush1.bf16.xpose.msra.mxu0 0
        %1974 = vmatprep.subr.bf16.mxu0 0
        %1975 = vmatpush1.bf16.xpose.msra.mxu0 0
        %1976 = vmatprep.subr.bf16.mxu0 0
        %1977 = vmatpush1.bf16.xpose.msra.mxu0 0
        %1978 = vmatprep.subr.bf16.mxu0 0
        %1979 = vmatpush1.bf16.xpose.msra.mxu0 %v1962
        %1980 = vmatprep.subr.bf16.mxu0 0
        %1981 = vmatpush2.bf16.xpose.msra.mxu0 0
        %1982 = vmatprep.subr.bf16.mxu0 0
        %1983 = vmatpush2.bf16.xpose.msra.mxu0 0
        %1984 = vmatprep.subr.bf16.mxu0 0
        %1985 = vmatpush2.bf16.xpose.msra.mxu0 0
        %1986 = vmatprep.subr.bf16.mxu0 0
        %1987 = vmatpush2.bf16.xpose.msra.mxu0 0
        %1988 = vmatprep.subr.bf16.mxu0 0
        %1989 = vmatpush2.bf16.xpose.msra.mxu0 0
        %1990 = vmatprep.subr.bf16.mxu0 0
        %1991 = vmatpush2.bf16.xpose.msra.mxu0 0
        %1992 = vmatprep.subr.bf16.mxu0 0
        %1993 = vmatpush2.bf16.xpose.msra.mxu0 0
        %1994 = vmatprep.subr.bf16.mxu0 0
        %1995 = vmatpush2.bf16.xpose.msra.mxu0 0
        %1996 = vmatprep.mubr.bf16.mxu0 0
        %1997 = vmatmul.mubr.bf16.gmra.mxu0 %v1959
        %v1998 = vpop.f32.mrf.mxu0
        %v1999 = vadd.f32 0.0, %v1998
        %v2000 = vpop.f32.mrf.mxu0
        %v2001 = vpop.f32.mrf.mxu0
        %v2002 = vadd.f32 0.0, %v2001
        %v2003 = vpop.f32.mrf.mxu0
        %2004 = vdwg.mxu0
        %v2005 = vsel %vm1183, %v1948, -inf
        %2006 = vmax.xlane.f32.xlu0 %v2005
        %v2007 = vpop.xlane.xlu0 %2006
        %v2008 = vsel %vm1183, %v1951, -inf
        %2009 = vmax.xlane.f32.xlu0 %v2008
        %v2010 = vpop.xlane.xlu0 %2009
        %v2011 = vsel %vm1183, %v1999, -inf
        %2012 = vmax.xlane.f32.xlu0 %v2011
        %v2013 = vpop.xlane.xlu0 %2012
        %v2014 = vsel %vm1183, %v2002, -inf
        %2015 = vmax.xlane.f32.xlu0 %v2014
        %v2016 = vpop.xlane.xlu0 %2015
        %v2017 = vsub.f32 %v1948, %v2007
        %v2018 = vsub.f32 %v1951, %v2010
        %v2019 = vsub.f32 %v1999, %v2013
        %v2020 = vsub.f32 %v2002, %v2016
        %v2021 = vmul.f32 %v2017, 1.442695
        %v2022 = vpow.pop %v2021
        %v2023 = vmul.f32 %v2018, 1.442695
        %v2024 = vpow.pop %v2023
        %v2025 = vmul.f32 %v2019, 1.442695
        %v2026 = vpow.pop %v2025
        %v2027 = vmul.f32 %v2020, 1.442695
        %v2028 = vpow.pop %v2027
        %v2029 = vsel %vm1183, %v2022, 0.0
        %2030 = vadd.xlane.f32.xlu0 %v2029
        %v2031 = vpop.xlane.xlu0 %2030
        %v2032 = vsel %vm1183, %v2024, 0.0
        %2033 = vadd.xlane.f32.xlu0 %v2032
        %v2034 = vpop.xlane.xlu0 %2033
        %v2035 = vsel %vm1183, %v2026, 0.0
        %2036 = vadd.xlane.f32.xlu0 %v2035
        %v2037 = vpop.xlane.xlu0 %2036
        %v2038 = vsel %vm1183, %v2028, 0.0
        %2039 = vadd.xlane.f32.xlu0 %v2038
        %v2040 = vpop.xlane.xlu0 %2039
        %v2041 = vrcp.pop %v2031
        %v2042 = vrcp.pop %v2034
        %v2043 = vrcp.pop %v2037
        %v2044 = vrcp.pop %v2040
        %v2045 = vmul.f32 %v2022, %v2041
        %v2046 = vmul.f32 %v2024, %v2042
        %v2047 = vmul.f32 %v2026, %v2043
        %v2048 = vmul.f32 %v2028, %v2044
        %v2049 = vpack.c.bf16 %v2046, %v2045
        %v2050 = vpack.c.bf16 %v2048, %v2047
        %2051 = vrot.lane.b32.xlu0 %v1327, 80
        %v2052 = vpop.permute.xlu0 %2051
        %v2055 = vsel %vm1183, %v2049, 0
        %2057 = vmatprep.subr.bf16.mxu0 0
        %2058 = vmatpush1.bf16.msra.mxu0 0
        %2059 = vmatprep.subr.bf16.mxu0 0
        %2060 = vmatpush1.bf16.msra.mxu0 0
        %2061 = vmatprep.subr.bf16.mxu0 0
        %2062 = vmatpush1.bf16.msra.mxu0 0
        %2063 = vmatprep.subr.bf16.mxu0 0
        %2064 = vmatpush1.bf16.msra.mxu0 0
        %2065 = vmatprep.subr.bf16.mxu0 0
        %2066 = vmatpush1.bf16.msra.mxu0 0
        %2067 = vmatprep.subr.bf16.mxu0 0
        %2068 = vmatpush1.bf16.msra.mxu0 0
        %2069 = vmatprep.subr.bf16.mxu0 0
        %2070 = vmatpush1.bf16.msra.mxu0 0
        %2071 = vmatprep.subr.bf16.mxu0 0
        %2072 = vmatpush1.bf16.msra.mxu0 %v2052
        %2073 = vmatprep.subr.bf16.mxu0 0
        %2074 = vmatpush2.bf16.msra.mxu0 0
        %2075 = vmatprep.subr.bf16.mxu0 0
        %2076 = vmatpush2.bf16.msra.mxu0 0
        %2077 = vmatprep.subr.bf16.mxu0 0
        %2078 = vmatpush2.bf16.msra.mxu0 0
        %2079 = vmatprep.subr.bf16.mxu0 0
        %2080 = vmatpush2.bf16.msra.mxu0 0
        %2081 = vmatprep.subr.bf16.mxu0 0
        %2082 = vmatpush2.bf16.msra.mxu0 0
        %2083 = vmatprep.subr.bf16.mxu0 0
        %2084 = vmatpush2.bf16.msra.mxu0 0
        %2085 = vmatprep.subr.bf16.mxu0 0
        %2086 = vmatpush2.bf16.msra.mxu0 0
        %2087 = vmatprep.subr.bf16.mxu0 0
        %2088 = vmatpush2.bf16.msra.mxu0 0
        %2089 = vmatprep.mubr.bf16.mxu0 0
        %2090 = vmatmul.mubr.bf16.gmra.mxu0 %v2055
        %v2091 = vpop.f32.mrf.mxu0
        %v2092 = vadd.f32 0.0, %v2091
        %v2093 = vpop.f32.mrf.mxu0
        %v2094 = vpop.f32.mrf.mxu0
        %v2095 = vadd.f32 0.0, %v2094
        %v2096 = vpop.f32.mrf.mxu0
        %2097 = vdwg.mxu0
        %2098 = vrot.lane.b32.xlu0 %v1328, 80
        %v2099 = vpop.permute.xlu0 %2098
        %v2102 = vsel %vm1183, %v2050, 0
        %2104 = vmatprep.subr.bf16.mxu0 0
        %2105 = vmatpush1.bf16.msra.mxu0 0
        %2106 = vmatprep.subr.bf16.mxu0 0
        %2107 = vmatpush1.bf16.msra.mxu0 0
        %2108 = vmatprep.subr.bf16.mxu0 0
        %2109 = vmatpush1.bf16.msra.mxu0 0
        %2110 = vmatprep.subr.bf16.mxu0 0
        %2111 = vmatpush1.bf16.msra.mxu0 0
        %2112 = vmatprep.subr.bf16.mxu0 0
        %2113 = vmatpush1.bf16.msra.mxu0 0
        %2114 = vmatprep.subr.bf16.mxu0 0
        %2115 = vmatpush1.bf16.msra.mxu0 0
        %2116 = vmatprep.subr.bf16.mxu0 0
        %2117 = vmatpush1.bf16.msra.mxu0 0
        %2118 = vmatprep.subr.bf16.mxu0 0
        %2119 = vmatpush1.bf16.msra.mxu0 %v2099
        %2120 = vmatprep.subr.bf16.mxu0 0
        %2121 = vmatpush2.bf16.msra.mxu0 0
        %2122 = vmatprep.subr.bf16.mxu0 0
        %2123 = vmatpush2.bf16.msra.mxu0 0
        %2124 = vmatprep.subr.bf16.mxu0 0
        %2125 = vmatpush2.bf16.msra.mxu0 0
        %2126 = vmatprep.subr.bf16.mxu0 0
        %2127 = vmatpush2.bf16.msra.mxu0 0
        %2128 = vmatprep.subr.bf16.mxu0 0
        %2129 = vmatpush2.bf16.msra.mxu0 0
        %2130 = vmatprep.subr.bf16.mxu0 0
        %2131 = vmatpush2.bf16.msra.mxu0 0
        %2132 = vmatprep.subr.bf16.mxu0 0
        %2133 = vmatpush2.bf16.msra.mxu0 0
        %2134 = vmatprep.subr.bf16.mxu0 0
        %2135 = vmatpush2.bf16.msra.mxu0 0
        %2136 = vmatprep.mubr.bf16.mxu0 0
        %2137 = vmatmul.mubr.bf16.gmra.mxu0 %v2102
        %v2138 = vpop.f32.mrf.mxu0
        %v2139 = vadd.f32 0.0, %v2138
        %v2140 = vpop.f32.mrf.mxu0
        %v2141 = vpop.f32.mrf.mxu0
        %v2142 = vadd.f32 0.0, %v2141
        %v2143 = vpop.f32.mrf.mxu0
        %2144 = vdwg.mxu0
        %2149 = vrot.lane.b32.xlu0 %v1607, 16
        %v2150 = vpop.permute.xlu0 %2149
        %2151 = vrot.lane.b32.xlu0 %v1610, 16
        %v2152 = vpop.permute.xlu0 %2151
        %2153 = vrot.lane.b32.xlu0 %v1655, 16
        %v2154 = vpop.permute.xlu0 %2153
        %2155 = vrot.lane.b32.xlu0 %v1658, 16
        %v2156 = vpop.permute.xlu0 %2155
        %2165 = vrot.lane.b32.xlu0 %v1850, 32
        %v2166 = vpop.permute.xlu0 %2165
        %2167 = vrot.lane.b32.xlu0 %v1853, 32
        %v2168 = vpop.permute.xlu0 %2167
        %2169 = vrot.lane.b32.xlu0 %v1897, 32
        %v2170 = vpop.permute.xlu0 %2169
        %2171 = vrot.lane.b32.xlu0 %v1900, 32
        %v2172 = vpop.permute.xlu0 %2171
        %2181 = vrot.lane.b32.xlu0 %v2092, 48
        %v2182 = vpop.permute.xlu0 %2181
        %2183 = vrot.lane.b32.xlu0 %v2095, 48
        %v2184 = vpop.permute.xlu0 %2183
        %2185 = vrot.lane.b32.xlu0 %v2139, 48
        %v2186 = vpop.permute.xlu0 %2185
        %2187 = vrot.lane.b32.xlu0 %v2142, 48
        %v2188 = vpop.permute.xlu0 %2187
        %v2193 = vsel %vm1183, %v1367, %v2150
        %v2194 = vsel %vm1183, %v1370, %v2152
        %v2195 = vsel %vm1183, %v1411, %v2154
        %v2196 = vsel %vm1183, %v1414, %v2156
        %vm2197 = vcmask 261120
        %v2198 = vsel %vm2197, %v2193, %v2166
        %v2199 = vsel %vm2197, %v2194, %v2168
        %v2200 = vsel %vm2197, %v2195, %v2170
        %v2201 = vsel %vm2197, %v2196, %v2172
        %vm2202 = vcmask 392192
        %v2203 = vsel %vm2202, %v2198, %v2182
        %v2204 = vsel %vm2202, %v2199, %v2184
        %v2205 = vsel %vm2202, %v2200, %v2186
        %v2206 = vsel %vm2202, %v2201, %v2188
        %v2207 = vld [vmem:[%s5] sm:$0xf]
        %v2208 = vld [vmem:[%s5 + $0x4] sm:$0xf]
        %v2209 = vld [vmem:[%s5 + $0x8] sm:$0xf]
        %v2210 = vld [vmem:[%s5 + $0xc] sm:$0xf]
        %v2211 = vld [vmem:[%s5 + $0x10] sm:$0xf]
        %v2212 = vld [vmem:[%s5 + $0x14] sm:$0xf]
        %v2213 = vld [vmem:[%s5 + $0x18] sm:$0xf]
        %v2214 = vld [vmem:[%s5 + $0x1c] sm:$0xf]
        %v2215 = vpack.c.bf16 %v2204, %v2203
        %v2216 = vpack.c.bf16 %v2206, %v2205
        %v2217 = vlaneseq
        %v2218 = vshrl.u32 %v2217, 7
        %v2219 = vsub.s32 0, %v2218
        %v2220 = vrot.slane %v1055, %v2219
        %v2229 = vunpack.c.l.b16 %v2207
        %v2230 = vunpack.c.l.b16 %v2208
        %v2231 = vunpack.c.l.b16 %v2209
        %v2232 = vunpack.c.l.b16 %v2210
        %v2233 = vunpack.c.l.b16 %v2211
        %v2234 = vunpack.c.l.b16 %v2212
        %v2235 = vunpack.c.l.b16 %v2213
        %v2236 = vunpack.c.l.b16 %v2214
        %v2237 = vpack.c.b16 %v2230, %v2229
        %v2238 = vpack.c.b16 %v2232, %v2231
        %v2239 = vpack.c.b16 %v2234, %v2233
        %v2240 = vpack.c.b16 %v2236, %v2235
        %v2246 = vsel %vm1118, %v2215, 0
        %v2249 = vsel %vm1118, %v2216, 0
        %2251 = vmatprep.subr.bf16.mxu0 0
        %2252 = vmatpush1.bf16.msra.mxu0 0
        %2253 = vmatprep.subr.bf16.mxu0 0
        %2254 = vmatpush1.bf16.msra.mxu0 0
        %2255 = vmatprep.subr.bf16.mxu0 0
        %2256 = vmatpush1.bf16.msra.mxu0 0
        %2257 = vmatprep.subr.bf16.mxu0 0
        %2258 = vmatpush1.bf16.msra.mxu0 0
        %2259 = vmatprep.subr.bf16.mxu0 0
        %2260 = vmatpush1.bf16.msra.mxu0 %v2240
        %2261 = vmatprep.subr.bf16.mxu0 0
        %2262 = vmatpush1.bf16.msra.mxu0 %v2239
        %2263 = vmatprep.subr.bf16.mxu0 0
        %2264 = vmatpush1.bf16.msra.mxu0 %v2238
        %2265 = vmatprep.subr.bf16.mxu0 0
        %2266 = vmatpush1.bf16.msra.mxu0 %v2237
        %2267 = vmatprep.subr.bf16.mxu0 0
        %2268 = vmatpush2.bf16.msra.mxu0 0
        %2269 = vmatprep.subr.bf16.mxu0 0
        %2270 = vmatpush2.bf16.msra.mxu0 0
        %2271 = vmatprep.subr.bf16.mxu0 0
        %2272 = vmatpush2.bf16.msra.mxu0 0
        %2273 = vmatprep.subr.bf16.mxu0 0
        %2274 = vmatpush2.bf16.msra.mxu0 0
        %2275 = vmatprep.subr.bf16.mxu0 0
        %2276 = vmatpush2.bf16.msra.mxu0 0
        %2277 = vmatprep.subr.bf16.mxu0 0
        %2278 = vmatpush2.bf16.msra.mxu0 0
        %2279 = vmatprep.subr.bf16.mxu0 0
        %2280 = vmatpush2.bf16.msra.mxu0 0
        %2281 = vmatprep.subr.bf16.mxu0 0
        %2282 = vmatpush2.bf16.msra.mxu0 0
        %2283 = vmatprep.mubr.bf16.mxu0 0
        %2284 = vmatmul.mubr.bf16.gmra.mxu0 %v2246
        %v2285 = vpop.f32.mrf.mxu0
        %v2286 = vadd.f32 %v2220, %v2285
        %v2287 = vpop.f32.mrf.mxu0
        %v2288 = vpop.f32.mrf.mxu0
        %v2289 = vadd.f32 %v2220, %v2288
        %v2290 = vpop.f32.mrf.mxu0
        %2291 = vmatprep.mubr.bf16.mxu0 0
        %2292 = vmatmul.mubr.bf16.gmra.mxu0 %v2249
        %v2293 = vpop.f32.mrf.mxu0
        %v2294 = vadd.f32 %v2220, %v2293
        %v2295 = vpop.f32.mrf.mxu0
        %v2296 = vpop.f32.mrf.mxu0
        %v2297 = vadd.f32 %v2220, %v2296
        %v2298 = vpop.f32.mrf.mxu0
        %2299 = vdwg.mxu0
        %v2300 = vadd.f32 %v1041, %v2286
        %v2301 = vadd.f32 %v1044, %v2289
        %v2302 = vadd.f32 %v1049, %v2294
        %v2303 = vadd.f32 %v1052, %v2297
        %v2304 = vsel %vm1118, %v2300, 0.0
        %2305 = vadd.xlane.f32.xlu0 %v2304
        %v2306 = vpop.xlane.xlu0 %2305
        %v2307 = vsel %vm1118, %v2301, 0.0
        %2308 = vadd.xlane.f32.xlu0 %v2307
        %v2309 = vpop.xlane.xlu0 %2308
        %v2310 = vsel %vm1118, %v2302, 0.0
        %2311 = vadd.xlane.f32.xlu0 %v2310
        %v2312 = vpop.xlane.xlu0 %2311
        %v2313 = vsel %vm1118, %v2303, 0.0
        %2314 = vadd.xlane.f32.xlu0 %v2313
        %v2315 = vpop.xlane.xlu0 %2314
        %v2316 = vrcp.pop 64.0
        %v2317 = vmul.f32 %v2306, %v2316
        %v2318 = vmul.f32 %v2309, %v2316
        %v2319 = vmul.f32 %v2312, %v2316
        %v2320 = vmul.f32 %v2315, %v2316
        %v2321 = vsub.f32 %v2300, %v2317
        %v2322 = vsub.f32 %v2301, %v2318
        %v2323 = vsub.f32 %v2302, %v2319
        %v2324 = vsub.f32 %v2303, %v2320
        %v2325 = vmul.f32 %v2321, %v2321
        %v2326 = vmul.f32 %v2322, %v2322
        %v2327 = vmul.f32 %v2323, %v2323
        %v2328 = vmul.f32 %v2324, %v2324
        %v2329 = vsel %vm1118, %v2325, 0.0
        %2330 = vadd.xlane.f32.xlu0 %v2329
        %v2331 = vpop.xlane.xlu0 %2330
        %v2332 = vsel %vm1118, %v2326, 0.0
        %2333 = vadd.xlane.f32.xlu0 %v2332
        %v2334 = vpop.xlane.xlu0 %2333
        %v2335 = vsel %vm1118, %v2327, 0.0
        %2336 = vadd.xlane.f32.xlu0 %v2335
        %v2337 = vpop.xlane.xlu0 %2336
        %v2338 = vsel %vm1118, %v2328, 0.0
        %2339 = vadd.xlane.f32.xlu0 %v2338
        %v2340 = vpop.xlane.xlu0 %2339
        %v2341 = vmul.f32 %v2331, %v2316
        %v2342 = vmul.f32 %v2334, %v2316
        %v2343 = vmul.f32 %v2337, %v2316
        %v2344 = vmul.f32 %v2340, %v2316
        %v2345 = vadd.f32 %v2341, 1e-05
        %v2346 = vadd.f32 %v2342, 1e-05
        %v2347 = vadd.f32 %v2343, 1e-05
        %v2348 = vadd.f32 %v2344, 1e-05
        %v2349 = vrsqrt.pop %v2345
        %v2350 = vrsqrt.pop %v2346
        %v2351 = vrsqrt.pop %v2347
        %v2352 = vrsqrt.pop %v2348
        %v2353 = vmul.f32 %v2321, %v2349
        %v2354 = vmul.f32 %v2322, %v2350
        %v2355 = vmul.f32 %v2323, %v2351
        %v2356 = vmul.f32 %v2324, %v2352
        %v2357 = vlaneseq
        %v2358 = vshrl.u32 %v2357, 7
        %v2359 = vsub.s32 1, %v2358
        %v2360 = vrot.slane %v1055, %v2359
        %v2361 = vmul.f32 %v2353, %v2360
        %v2362 = vmul.f32 %v2354, %v2360
        %v2363 = vmul.f32 %v2355, %v2360
        %v2364 = vmul.f32 %v2356, %v2360
        %v2365 = vlaneseq
        %v2366 = vshrl.u32 %v2365, 7
        %v2367 = vsub.s32 2, %v2366
        %v2368 = vrot.slane %v1055, %v2367
        %v2369 = vadd.f32 %v2361, %v2368
        %v2370 = vadd.f32 %v2362, %v2368
        %v2371 = vadd.f32 %v2363, %v2368
        %v2372 = vadd.f32 %v2364, %v2368
        %s2373 = scalar_lea.vmem %s5, 32
        %v2374 = vld [vmem:[%s2373] sm:$0xf]
        %v2375 = vld [vmem:[%s2373 + $0x4] sm:$0xf]
        %v2376 = vld [vmem:[%s2373 + $0x8] sm:$0xf]
        %v2377 = vld [vmem:[%s2373 + $0xc] sm:$0xf]
        %v2378 = vld [vmem:[%s2373 + $0x10] sm:$0xf]
        %v2379 = vld [vmem:[%s2373 + $0x14] sm:$0xf]
        %v2380 = vld [vmem:[%s2373 + $0x18] sm:$0xf]
        %v2381 = vld [vmem:[%s2373 + $0x1c] sm:$0xf]
        %v2382 = vpack.c.bf16 %v2370, %v2369
        %v2383 = vpack.c.bf16 %v2372, %v2371
        %v2384 = vlaneseq
        %v2385 = vshrl.u32 %v2384, 7
        %v2386 = vsub.s32 3, %v2385
        %v2387 = vrot.slane %v1055, %v2386
        %v2396 = vunpack.c.l.b16 %v2374
        %v2397 = vunpack.c.l.b16 %v2375
        %v2398 = vunpack.c.l.b16 %v2376
        %v2399 = vunpack.c.l.b16 %v2377
        %v2400 = vunpack.c.l.b16 %v2378
        %v2401 = vunpack.c.l.b16 %v2379
        %v2402 = vunpack.c.l.b16 %v2380
        %v2403 = vunpack.c.l.b16 %v2381
        %v2404 = vpack.c.b16 %v2397, %v2396
        %v2405 = vpack.c.b16 %v2399, %v2398
        %v2406 = vpack.c.b16 %v2401, %v2400
        %v2407 = vpack.c.b16 %v2403, %v2402
        %v2413 = vsel %vm1118, %v2382, 0
        %v2416 = vsel %vm1118, %v2383, 0
        %2418 = vmatprep.subr.bf16.mxu0 0
        %2419 = vmatpush1.bf16.msra.mxu0 0
        %2420 = vmatprep.subr.bf16.mxu0 0
        %2421 = vmatpush1.bf16.msra.mxu0 0
        %2422 = vmatprep.subr.bf16.mxu0 0
        %2423 = vmatpush1.bf16.msra.mxu0 0
        %2424 = vmatprep.subr.bf16.mxu0 0
        %2425 = vmatpush1.bf16.msra.mxu0 0
        %2426 = vmatprep.subr.bf16.mxu0 0
        %2427 = vmatpush1.bf16.msra.mxu0 %v2407
        %2428 = vmatprep.subr.bf16.mxu0 0
        %2429 = vmatpush1.bf16.msra.mxu0 %v2406
        %2430 = vmatprep.subr.bf16.mxu0 0
        %2431 = vmatpush1.bf16.msra.mxu0 %v2405
        %2432 = vmatprep.subr.bf16.mxu0 0
        %2433 = vmatpush1.bf16.msra.mxu0 %v2404
        %2434 = vmatprep.subr.bf16.mxu0 0
        %2435 = vmatpush2.bf16.msra.mxu0 0
        %2436 = vmatprep.subr.bf16.mxu0 0
        %2437 = vmatpush2.bf16.msra.mxu0 0
        %2438 = vmatprep.subr.bf16.mxu0 0
        %2439 = vmatpush2.bf16.msra.mxu0 0
        %2440 = vmatprep.subr.bf16.mxu0 0
        %2441 = vmatpush2.bf16.msra.mxu0 0
        %2442 = vmatprep.subr.bf16.mxu0 0
        %2443 = vmatpush2.bf16.msra.mxu0 0
        %2444 = vmatprep.subr.bf16.mxu0 0
        %2445 = vmatpush2.bf16.msra.mxu0 0
        %2446 = vmatprep.subr.bf16.mxu0 0
        %2447 = vmatpush2.bf16.msra.mxu0 0
        %2448 = vmatprep.subr.bf16.mxu0 0
        %2449 = vmatpush2.bf16.msra.mxu0 0
        %2450 = vmatprep.mubr.bf16.mxu0 0
        %2451 = vmatmul.mubr.bf16.gmra.mxu0 %v2413
        %v2452 = vpop.f32.mrf.mxu0
        %v2453 = vadd.f32 %v2387, %v2452
        %v2454 = vpop.f32.mrf.mxu0
        %v2455 = vpop.f32.mrf.mxu0
        %v2456 = vadd.f32 %v2387, %v2455
        %v2457 = vpop.f32.mrf.mxu0
        %2458 = vmatprep.mubr.bf16.mxu0 0
        %2459 = vmatmul.mubr.bf16.gmra.mxu0 %v2416
        %v2460 = vpop.f32.mrf.mxu0
        %v2461 = vadd.f32 %v2387, %v2460
        %v2462 = vpop.f32.mrf.mxu0
        %v2463 = vpop.f32.mrf.mxu0
        %v2464 = vadd.f32 %v2387, %v2463
        %v2465 = vpop.f32.mrf.mxu0
        %2466 = vdwg.mxu0
        %v2467 = vmul.f32 %v2453, 0.5
        %v2468 = vmul.f32 %v2456, 0.5
        %v2469 = vmul.f32 %v2461, 0.5
        %v2470 = vmul.f32 %v2464, 0.5
        %v2471 = vmul.f32 %v2453, 0.044715
        %v2472 = vmul.f32 %v2456, 0.044715
        %v2473 = vmul.f32 %v2461, 0.044715
        %v2474 = vmul.f32 %v2464, 0.044715
        %v2475 = vmul.f32 %v2471, %v2453
        %v2476 = vmul.f32 %v2472, %v2456
        %v2477 = vmul.f32 %v2473, %v2461
        %v2478 = vmul.f32 %v2474, %v2464
        %v2479 = vmul.f32 %v2475, %v2453
        %v2480 = vmul.f32 %v2476, %v2456
        %v2481 = vmul.f32 %v2477, %v2461
        %v2482 = vmul.f32 %v2478, %v2464
        %v2483 = vadd.f32 %v2453, %v2479
        %v2484 = vadd.f32 %v2456, %v2480
        %v2485 = vadd.f32 %v2461, %v2481
        %v2486 = vadd.f32 %v2464, %v2482
        %v2487 = vmul.f32 %v2483, 0.7978846
        %v2488 = vmul.f32 %v2484, 0.7978846
        %v2489 = vmul.f32 %v2485, 0.7978846
        %v2490 = vmul.f32 %v2486, 0.7978846
        %v2491 = vtanh.pop %v2487
        %v2492 = vtanh.pop %v2488
        %v2493 = vtanh.pop %v2489
        %v2494 = vtanh.pop %v2490
        %v2495 = vadd.f32 %v2491, 1.0
        %v2496 = vadd.f32 %v2492, 1.0
        %v2497 = vadd.f32 %v2493, 1.0
        %v2498 = vadd.f32 %v2494, 1.0
        %v2499 = vmul.f32 %v2467, %v2495
        %v2500 = vmul.f32 %v2468, %v2496
        %v2501 = vmul.f32 %v2469, %v2497
        %v2502 = vmul.f32 %v2470, %v2498
        %s2503 = scalar_lea.vmem %s5, 64
        %v2504 = vld [vmem:[%s2503] sm:$0xf]
        %v2505 = vld [vmem:[%s2503 + $0x4] sm:$0xf]
        %v2506 = vld [vmem:[%s2503 + $0x8] sm:$0xf]
        %v2507 = vld [vmem:[%s2503 + $0xc] sm:$0xf]
        %v2508 = vld [vmem:[%s2503 + $0x10] sm:$0xf]
        %v2509 = vld [vmem:[%s2503 + $0x14] sm:$0xf]
        %v2510 = vld [vmem:[%s2503 + $0x18] sm:$0xf]
        %v2511 = vld [vmem:[%s2503 + $0x1c] sm:$0xf]
        %v2512 = vpack.c.bf16 %v2500, %v2499
        %v2513 = vpack.c.bf16 %v2502, %v2501
        %v2514 = vlaneseq
        %v2515 = vshrl.u32 %v2514, 7
        %v2516 = vsub.s32 4, %v2515
        %v2517 = vrot.slane %v1055, %v2516
        %v2526 = vunpack.c.l.b16 %v2504
        %v2527 = vunpack.c.l.b16 %v2505
        %v2528 = vunpack.c.l.b16 %v2506
        %v2529 = vunpack.c.l.b16 %v2507
        %v2530 = vunpack.c.l.b16 %v2508
        %v2531 = vunpack.c.l.b16 %v2509
        %v2532 = vunpack.c.l.b16 %v2510
        %v2533 = vunpack.c.l.b16 %v2511
        %v2534 = vpack.c.b16 %v2527, %v2526
        %v2535 = vpack.c.b16 %v2529, %v2528
        %v2536 = vpack.c.b16 %v2531, %v2530
        %v2537 = vpack.c.b16 %v2533, %v2532
        %v2543 = vsel %vm1118, %v2512, 0
        %v2546 = vsel %vm1118, %v2513, 0
        %2548 = vmatprep.subr.bf16.mxu0 0
        %2549 = vmatpush1.bf16.msra.mxu0 0
        %2550 = vmatprep.subr.bf16.mxu0 0
        %2551 = vmatpush1.bf16.msra.mxu0 0
        %2552 = vmatprep.subr.bf16.mxu0 0
        %2553 = vmatpush1.bf16.msra.mxu0 0
        %2554 = vmatprep.subr.bf16.mxu0 0
        %2555 = vmatpush1.bf16.msra.mxu0 0
        %2556 = vmatprep.subr.bf16.mxu0 0
        %2557 = vmatpush1.bf16.msra.mxu0 %v2537
        %2558 = vmatprep.subr.bf16.mxu0 0
        %2559 = vmatpush1.bf16.msra.mxu0 %v2536
        %2560 = vmatprep.subr.bf16.mxu0 0
        %2561 = vmatpush1.bf16.msra.mxu0 %v2535
        %2562 = vmatprep.subr.bf16.mxu0 0
        %2563 = vmatpush1.bf16.msra.mxu0 %v2534
        %2564 = vmatprep.subr.bf16.mxu0 0
        %2565 = vmatpush2.bf16.msra.mxu0 0
        %2566 = vmatprep.subr.bf16.mxu0 0
        %2567 = vmatpush2.bf16.msra.mxu0 0
        %2568 = vmatprep.subr.bf16.mxu0 0
        %2569 = vmatpush2.bf16.msra.mxu0 0
        %2570 = vmatprep.subr.bf16.mxu0 0
        %2571 = vmatpush2.bf16.msra.mxu0 0
        %2572 = vmatprep.subr.bf16.mxu0 0
        %2573 = vmatpush2.bf16.msra.mxu0 0
        %2574 = vmatprep.subr.bf16.mxu0 0
        %2575 = vmatpush2.bf16.msra.mxu0 0
        %2576 = vmatprep.subr.bf16.mxu0 0
        %2577 = vmatpush2.bf16.msra.mxu0 0
        %2578 = vmatprep.subr.bf16.mxu0 0
        %2579 = vmatpush2.bf16.msra.mxu0 0
        %2580 = vmatprep.mubr.bf16.mxu0 0
        %2581 = vmatmul.mubr.bf16.gmra.mxu0 %v2543
        %v2582 = vpop.f32.mrf.mxu0
        %v2583 = vadd.f32 %v2517, %v2582
        %v2584 = vpop.f32.mrf.mxu0
        %v2585 = vpop.f32.mrf.mxu0
        %v2586 = vadd.f32 %v2517, %v2585
        %v2587 = vpop.f32.mrf.mxu0
        %2588 = vmatprep.mubr.bf16.mxu0 0
        %2589 = vmatmul.mubr.bf16.gmra.mxu0 %v2546
        %v2590 = vpop.f32.mrf.mxu0
        %v2591 = vadd.f32 %v2517, %v2590
        %v2592 = vpop.f32.mrf.mxu0
        %v2593 = vpop.f32.mrf.mxu0
        %v2594 = vadd.f32 %v2517, %v2593
        %v2595 = vpop.f32.mrf.mxu0
        %2596 = vdwg.mxu0
        %v2597 = vadd.f32 %v2369, %v2583
        %v2598 = vadd.f32 %v2370, %v2586
        %v2599 = vadd.f32 %v2371, %v2591
        %v2600 = vadd.f32 %v2372, %v2594
        %v2601 = vsel %vm1118, %v2597, 0.0
        %2602 = vadd.xlane.f32.xlu0 %v2601
        %v2603 = vpop.xlane.xlu0 %2602
        %v2604 = vsel %vm1118, %v2598, 0.0
        %2605 = vadd.xlane.f32.xlu0 %v2604
        %v2606 = vpop.xlane.xlu0 %2605
        %v2607 = vsel %vm1118, %v2599, 0.0
        %2608 = vadd.xlane.f32.xlu0 %v2607
        %v2609 = vpop.xlane.xlu0 %2608
        %v2610 = vsel %vm1118, %v2600, 0.0
        %2611 = vadd.xlane.f32.xlu0 %v2610
        %v2612 = vpop.xlane.xlu0 %2611
        %v2613 = vmul.f32 %v2603, %v2316
        %v2614 = vmul.f32 %v2606, %v2316
        %v2615 = vmul.f32 %v2609, %v2316
        %v2616 = vmul.f32 %v2612, %v2316
        %v2617 = vsub.f32 %v2597, %v2613
        %v2618 = vsub.f32 %v2598, %v2614
        %v2619 = vsub.f32 %v2599, %v2615
        %v2620 = vsub.f32 %v2600, %v2616
        %v2621 = vmul.f32 %v2617, %v2617
        %v2622 = vmul.f32 %v2618, %v2618
        %v2623 = vmul.f32 %v2619, %v2619
        %v2624 = vmul.f32 %v2620, %v2620
        %v2625 = vsel %vm1118, %v2621, 0.0
        %2626 = vadd.xlane.f32.xlu0 %v2625
        %v2627 = vpop.xlane.xlu0 %2626
        %v2628 = vsel %vm1118, %v2622, 0.0
        %2629 = vadd.xlane.f32.xlu0 %v2628
        %v2630 = vpop.xlane.xlu0 %2629
        %v2631 = vsel %vm1118, %v2623, 0.0
        %2632 = vadd.xlane.f32.xlu0 %v2631
        %v2633 = vpop.xlane.xlu0 %2632
        %v2634 = vsel %vm1118, %v2624, 0.0
        %2635 = vadd.xlane.f32.xlu0 %v2634
        %v2636 = vpop.xlane.xlu0 %2635
        %v2637 = vmul.f32 %v2627, %v2316
        %v2638 = vmul.f32 %v2630, %v2316
        %v2639 = vmul.f32 %v2633, %v2316
        %v2640 = vmul.f32 %v2636, %v2316
        %v2641 = vadd.f32 %v2637, 1e-05
        %v2642 = vadd.f32 %v2638, 1e-05
        %v2643 = vadd.f32 %v2639, 1e-05
        %v2644 = vadd.f32 %v2640, 1e-05
        %v2645 = vrsqrt.pop %v2641
        %v2646 = vrsqrt.pop %v2642
        %v2647 = vrsqrt.pop %v2643
        %v2648 = vrsqrt.pop %v2644
        %v2649 = vmul.f32 %v2617, %v2645
        %v2650 = vmul.f32 %v2618, %v2646
        %v2651 = vmul.f32 %v2619, %v2647
        %v2652 = vmul.f32 %v2620, %v2648
        %v2653 = vlaneseq
        %v2654 = vshrl.u32 %v2653, 7
        %v2655 = vsub.s32 5, %v2654
        %v2656 = vrot.slane %v1055, %v2655
        %v2657 = vmul.f32 %v2649, %v2656
        %v2658 = vmul.f32 %v2650, %v2656
        %v2659 = vmul.f32 %v2651, %v2656
        %v2660 = vmul.f32 %v2652, %v2656
        %v2661 = vlaneseq
        %v2662 = vshrl.u32 %v2661, 7
        %v2663 = vsub.s32 6, %v2662
        %v2664 = vrot.slane %v1055, %v2663
        %v2665 = vadd.f32 %v2657, %v2664
        %v2666 = vadd.f32 %v2658, %v2664
        %v2667 = vadd.f32 %v2659, %v2664
        %v2668 = vadd.f32 %v2660, %v2664
        %s2669 = scalar_lea.vmem %s6, 8
        %v2670 = vld [vmem:[%s2669] sm:$0x7f]
        %s2671 = scalar_lea.vmem %s3, 64
        %v2672 = vld [vmem:[%s2671] sm:$0xff]
        %v2673 = vld [vmem:[%s2671 + $0x8] sm:$0xff]
        %v2674 = vld [vmem:[%s2671 + $0x10] sm:$0xff]
        %v2675 = vld [vmem:[%s2671 + $0x18] sm:$0xff]
        %v2676 = vld [vmem:[%s2671 + $0x20] sm:$0xff]
        %v2677 = vld [vmem:[%s2671 + $0x28] sm:$0xff]
        %v2678 = vld [vmem:[%s2671 + $0x30] sm:$0xff]
        %v2679 = vld [vmem:[%s2671 + $0x38] sm:$0xff]
        %v2680 = vpack.c.bf16 %v2666, %v2665
        %v2681 = vpack.c.bf16 %v2668, %v2667
        %s2682 = scalar_lea.vmem %s4, 2
        %v2683 = vld [vmem:[%s2682] sm:$0x3]
        %v2685 = vlaneseq
        %v2686 = vshrl.u32 %v2685, 7
        %v2687 = vsub.s32 0, %v2686
        %v2688 = vrot.slane %v2683, %v2687
        %v2689 = vlaneseq
        %v2690 = vshrl.u32 %v2689, 7
        %v2691 = vsub.s32 1, %v2690
        %v2692 = vrot.slane %v2683, %v2691
        %v2703 = vunpack.c.l.b16 %v2672
        %v2704 = vunpack.c.h.b16 %v2672
        %v2705 = vunpack.c.l.b16 %v2673
        %v2706 = vunpack.c.h.b16 %v2673
        %v2707 = vunpack.c.l.b16 %v2674
        %v2708 = vunpack.c.h.b16 %v2674
        %v2709 = vunpack.c.l.b16 %v2675
        %v2710 = vunpack.c.h.b16 %v2675
        %v2711 = vunpack.c.l.b16 %v2676
        %v2712 = vunpack.c.h.b16 %v2676
        %v2713 = vunpack.c.l.b16 %v2677
        %v2714 = vunpack.c.h.b16 %v2677
        %v2715 = vunpack.c.l.b16 %v2678
        %v2716 = vunpack.c.h.b16 %v2678
        %v2717 = vunpack.c.l.b16 %v2679
        %v2718 = vunpack.c.h.b16 %v2679
        %v2719 = vpack.c.b16 %v2705, %v2703
        %v2720 = vpack.c.b16 %v2706, %v2704
        %v2721 = vpack.c.b16 %v2709, %v2707
        %v2722 = vpack.c.b16 %v2710, %v2708
        %v2723 = vpack.c.b16 %v2713, %v2711
        %v2724 = vpack.c.b16 %v2714, %v2712
        %v2725 = vpack.c.b16 %v2717, %v2715
        %v2726 = vpack.c.b16 %v2718, %v2716
        %v2736 = vsel %vm1118, %v2680, 0
        %v2739 = vsel %vm1118, %v2681, 0
        %2741 = vmatprep.subr.bf16.mxu0 0
        %2742 = vmatpush1.bf16.msra.mxu0 0
        %2743 = vmatprep.subr.bf16.mxu0 0
        %2744 = vmatpush1.bf16.msra.mxu0 0
        %2745 = vmatprep.subr.bf16.mxu0 0
        %2746 = vmatpush1.bf16.msra.mxu0 0
        %2747 = vmatprep.subr.bf16.mxu0 0
        %2748 = vmatpush1.bf16.msra.mxu0 0
        %2749 = vmatprep.subr.bf16.mxu0 %v2726
        %2750 = vmatpush1.bf16.msra.mxu0 %v2725
        %2751 = vmatprep.subr.bf16.mxu0 %v2724
        %2752 = vmatpush1.bf16.msra.mxu0 %v2723
        %2753 = vmatprep.subr.bf16.mxu0 %v2722
        %2754 = vmatpush1.bf16.msra.mxu0 %v2721
        %2755 = vmatprep.subr.bf16.mxu0 %v2720
        %2756 = vmatpush1.bf16.msra.mxu0 %v2719
        %2757 = vmatprep.subr.bf16.mxu0 0
        %2758 = vmatpush2.bf16.msra.mxu0 0
        %2759 = vmatprep.subr.bf16.mxu0 0
        %2760 = vmatpush2.bf16.msra.mxu0 0
        %2761 = vmatprep.subr.bf16.mxu0 0
        %2762 = vmatpush2.bf16.msra.mxu0 0
        %2763 = vmatprep.subr.bf16.mxu0 0
        %2764 = vmatpush2.bf16.msra.mxu0 0
        %2765 = vmatprep.subr.bf16.mxu0 0
        %2766 = vmatpush2.bf16.msra.mxu0 0
        %2767 = vmatprep.subr.bf16.mxu0 0
        %2768 = vmatpush2.bf16.msra.mxu0 0
        %2769 = vmatprep.subr.bf16.mxu0 0
        %2770 = vmatpush2.bf16.msra.mxu0 0
        %2771 = vmatprep.subr.bf16.mxu0 0
        %2772 = vmatpush2.bf16.msra.mxu0 0
        %2773 = vmatprep.mubr.bf16.mxu0 0
        %2774 = vmatmul.mubr.bf16.gmra.mxu0 %v2736
        %v2775 = vpop.f32.mrf.mxu0
        %v2776 = vadd.f32 %v2688, %v2775
        %v2777 = vpop.f32.mrf.mxu0
        %v2778 = vadd.f32 %v2692, %v2777
        %v2779 = vpop.f32.mrf.mxu0
        %v2780 = vadd.f32 %v2688, %v2779
        %v2781 = vpop.f32.mrf.mxu0
        %v2782 = vadd.f32 %v2692, %v2781
        %2783 = vmatprep.mubr.bf16.mxu0 0
        %2784 = vmatmul.mubr.bf16.gmra.mxu0 %v2739
        %v2785 = vpop.f32.mrf.mxu0
        %v2786 = vadd.f32 %v2688, %v2785
        %v2787 = vpop.f32.mrf.mxu0
        %v2788 = vadd.f32 %v2692, %v2787
        %v2789 = vpop.f32.mrf.mxu0
        %v2790 = vadd.f32 %v2688, %v2789
        %v2791 = vpop.f32.mrf.mxu0
        %v2792 = vadd.f32 %v2692, %v2791
        %2793 = vdwg.mxu0
        %v2794 = vpack.c.bf16 %v2780, %v2776
        %v2795 = vpack.c.bf16 %v2790, %v2786
        %2797 = vrot.lane.b32.xlu0 %v2794, 64
        %v2798 = vpop.permute.xlu0 %2797
        %v2800 = vsel %vm1183, %v2794, 0
        %v2803 = vsel %vm1183, %v2798, 0
        %2805 = vmatprep.subr.bf16.mxu0 0
        %2806 = vmatpush1.bf16.xpose.msra.mxu0 0
        %2807 = vmatprep.subr.bf16.mxu0 0
        %2808 = vmatpush1.bf16.xpose.msra.mxu0 0
        %2809 = vmatprep.subr.bf16.mxu0 0
        %2810 = vmatpush1.bf16.xpose.msra.mxu0 0
        %2811 = vmatprep.subr.bf16.mxu0 0
        %2812 = vmatpush1.bf16.xpose.msra.mxu0 0
        %2813 = vmatprep.subr.bf16.mxu0 0
        %2814 = vmatpush1.bf16.xpose.msra.mxu0 0
        %2815 = vmatprep.subr.bf16.mxu0 0
        %2816 = vmatpush1.bf16.xpose.msra.mxu0 0
        %2817 = vmatprep.subr.bf16.mxu0 0
        %2818 = vmatpush1.bf16.xpose.msra.mxu0 0
        %2819 = vmatprep.subr.bf16.mxu0 0
        %2820 = vmatpush1.bf16.xpose.msra.mxu0 %v2803
        %2821 = vmatprep.subr.bf16.mxu0 0
        %2822 = vmatpush2.bf16.xpose.msra.mxu0 0
        %2823 = vmatprep.subr.bf16.mxu0 0
        %2824 = vmatpush2.bf16.xpose.msra.mxu0 0
        %2825 = vmatprep.subr.bf16.mxu0 0
        %2826 = vmatpush2.bf16.xpose.msra.mxu0 0
        %2827 = vmatprep.subr.bf16.mxu0 0
        %2828 = vmatpush2.bf16.xpose.msra.mxu0 0
        %2829 = vmatprep.subr.bf16.mxu0 0
        %2830 = vmatpush2.bf16.xpose.msra.mxu0 0
        %2831 = vmatprep.subr.bf16.mxu0 0
        %2832 = vmatpush2.bf16.xpose.msra.mxu0 0
        %2833 = vmatprep.subr.bf16.mxu0 0
        %2834 = vmatpush2.bf16.xpose.msra.mxu0 0
        %2835 = vmatprep.subr.bf16.mxu0 0
        %2836 = vmatpush2.bf16.xpose.msra.mxu0 0
        %2837 = vmatprep.mubr.bf16.mxu0 0
        %2838 = vmatmul.mubr.bf16.gmra.mxu0 %v2800
        %v2839 = vpop.f32.mrf.mxu0
        %v2840 = vadd.f32 0.0, %v2839
        %v2841 = vpop.f32.mrf.mxu0
        %v2842 = vpop.f32.mrf.mxu0
        %v2843 = vadd.f32 0.0, %v2842
        %v2844 = vpop.f32.mrf.mxu0
        %2845 = vdwg.mxu0
        %2847 = vrot.lane.b32.xlu0 %v2795, 64
        %v2848 = vpop.permute.xlu0 %2847
        %v2850 = vsel %vm1183, %v2795, 0
        %v2853 = vsel %vm1183, %v2848, 0
        %2855 = vmatprep.subr.bf16.mxu0 0
        %2856 = vmatpush1.bf16.xpose.msra.mxu0 0
        %2857 = vmatprep.subr.bf16.mxu0 0
        %2858 = vmatpush1.bf16.xpose.msra.mxu0 0
        %2859 = vmatprep.subr.bf16.mxu0 0
        %2860 = vmatpush1.bf16.xpose.msra.mxu0 0
        %2861 = vmatprep.subr.bf16.mxu0 0
        %2862 = vmatpush1.bf16.xpose.msra.mxu0 0
        %2863 = vmatprep.subr.bf16.mxu0 0
        %2864 = vmatpush1.bf16.xpose.msra.mxu0 0
        %2865 = vmatprep.subr.bf16.mxu0 0
        %2866 = vmatpush1.bf16.xpose.msra.mxu0 0
        %2867 = vmatprep.subr.bf16.mxu0 0
        %2868 = vmatpush1.bf16.xpose.msra.mxu0 0
        %2869 = vmatprep.subr.bf16.mxu0 0
        %2870 = vmatpush1.bf16.xpose.msra.mxu0 %v2853
        %2871 = vmatprep.subr.bf16.mxu0 0
        %2872 = vmatpush2.bf16.xpose.msra.mxu0 0
        %2873 = vmatprep.subr.bf16.mxu0 0
        %2874 = vmatpush2.bf16.xpose.msra.mxu0 0
        %2875 = vmatprep.subr.bf16.mxu0 0
        %2876 = vmatpush2.bf16.xpose.msra.mxu0 0
        %2877 = vmatprep.subr.bf16.mxu0 0
        %2878 = vmatpush2.bf16.xpose.msra.mxu0 0
        %2879 = vmatprep.subr.bf16.mxu0 0
        %2880 = vmatpush2.bf16.xpose.msra.mxu0 0
        %2881 = vmatprep.subr.bf16.mxu0 0
        %2882 = vmatpush2.bf16.xpose.msra.mxu0 0
        %2883 = vmatprep.subr.bf16.mxu0 0
        %2884 = vmatpush2.bf16.xpose.msra.mxu0 0
        %2885 = vmatprep.subr.bf16.mxu0 0
        %2886 = vmatpush2.bf16.xpose.msra.mxu0 0
        %2887 = vmatprep.mubr.bf16.mxu0 0
        %2888 = vmatmul.mubr.bf16.gmra.mxu0 %v2850
        %v2889 = vpop.f32.mrf.mxu0
        %v2890 = vadd.f32 0.0, %v2889
        %v2891 = vpop.f32.mrf.mxu0
        %v2892 = vpop.f32.mrf.mxu0
        %v2893 = vadd.f32 0.0, %v2892
        %v2894 = vpop.f32.mrf.mxu0
        %2895 = vdwg.mxu0
        %v2896 = vsel %vm1183, %v2840, -inf
        %2897 = vmax.xlane.f32.xlu0 %v2896
        %v2898 = vpop.xlane.xlu0 %2897
        %v2899 = vsel %vm1183, %v2843, -inf
        %2900 = vmax.xlane.f32.xlu0 %v2899
        %v2901 = vpop.xlane.xlu0 %2900
        %v2902 = vsel %vm1183, %v2890, -inf
        %2903 = vmax.xlane.f32.xlu0 %v2902
        %v2904 = vpop.xlane.xlu0 %2903
        %v2905 = vsel %vm1183, %v2893, -inf
        %2906 = vmax.xlane.f32.xlu0 %v2905
        %v2907 = vpop.xlane.xlu0 %2906
        %v2908 = vsub.f32 %v2840, %v2898
        %v2909 = vsub.f32 %v2843, %v2901
        %v2910 = vsub.f32 %v2890, %v2904
        %v2911 = vsub.f32 %v2893, %v2907
        %v2912 = vmul.f32 %v2908, 1.442695
        %v2913 = vpow.pop %v2912
        %v2914 = vmul.f32 %v2909, 1.442695
        %v2915 = vpow.pop %v2914
        %v2916 = vmul.f32 %v2910, 1.442695
        %v2917 = vpow.pop %v2916
        %v2918 = vmul.f32 %v2911, 1.442695
        %v2919 = vpow.pop %v2918
        %v2920 = vsel %vm1183, %v2913, 0.0
        %2921 = vadd.xlane.f32.xlu0 %v2920
        %v2922 = vpop.xlane.xlu0 %2921
        %v2923 = vsel %vm1183, %v2915, 0.0
        %2924 = vadd.xlane.f32.xlu0 %v2923
        %v2925 = vpop.xlane.xlu0 %2924
        %v2926 = vsel %vm1183, %v2917, 0.0
        %2927 = vadd.xlane.f32.xlu0 %v2926
        %v2928 = vpop.xlane.xlu0 %2927
        %v2929 = vsel %vm1183, %v2919, 0.0
        %2930 = vadd.xlane.f32.xlu0 %v2929
        %v2931 = vpop.xlane.xlu0 %2930
        %v2932 = vrcp.pop %v2922
        %v2933 = vrcp.pop %v2925
        %v2934 = vrcp.pop %v2928
        %v2935 = vrcp.pop %v2931
        %v2936 = vmul.f32 %v2913, %v2932
        %v2937 = vmul.f32 %v2915, %v2933
        %v2938 = vmul.f32 %v2917, %v2934
        %v2939 = vmul.f32 %v2919, %v2935
        %v2940 = vpack.c.bf16 %v2937, %v2936
        %v2941 = vpack.c.bf16 %v2939, %v2938
        %v2942 = vpack.c.bf16 %v2782, %v2778
        %v2943 = vpack.c.bf16 %v2792, %v2788
        %v2945 = vsel %vm1183, %v2940, 0
        %2947 = vmatprep.subr.bf16.mxu0 0
        %2948 = vmatpush1.bf16.msra.mxu0 0
        %2949 = vmatprep.subr.bf16.mxu0 0
        %2950 = vmatpush1.bf16.msra.mxu0 0
        %2951 = vmatprep.subr.bf16.mxu0 0
        %2952 = vmatpush1.bf16.msra.mxu0 0
        %2953 = vmatprep.subr.bf16.mxu0 0
        %2954 = vmatpush1.bf16.msra.mxu0 0
        %2955 = vmatprep.subr.bf16.mxu0 0
        %2956 = vmatpush1.bf16.msra.mxu0 0
        %2957 = vmatprep.subr.bf16.mxu0 0
        %2958 = vmatpush1.bf16.msra.mxu0 0
        %2959 = vmatprep.subr.bf16.mxu0 0
        %2960 = vmatpush1.bf16.msra.mxu0 0
        %2961 = vmatprep.subr.bf16.mxu0 0
        %2962 = vmatpush1.bf16.msra.mxu0 %v2942
        %2963 = vmatprep.subr.bf16.mxu0 0
        %2964 = vmatpush2.bf16.msra.mxu0 0
        %2965 = vmatprep.subr.bf16.mxu0 0
        %2966 = vmatpush2.bf16.msra.mxu0 0
        %2967 = vmatprep.subr.bf16.mxu0 0
        %2968 = vmatpush2.bf16.msra.mxu0 0
        %2969 = vmatprep.subr.bf16.mxu0 0
        %2970 = vmatpush2.bf16.msra.mxu0 0
        %2971 = vmatprep.subr.bf16.mxu0 0
        %2972 = vmatpush2.bf16.msra.mxu0 0
        %2973 = vmatprep.subr.bf16.mxu0 0
        %2974 = vmatpush2.bf16.msra.mxu0 0
        %2975 = vmatprep.subr.bf16.mxu0 0
        %2976 = vmatpush2.bf16.msra.mxu0 0
        %2977 = vmatprep.subr.bf16.mxu0 0
        %2978 = vmatpush2.bf16.msra.mxu0 0
        %2979 = vmatprep.mubr.bf16.mxu0 0
        %2980 = vmatmul.mubr.bf16.gmra.mxu0 %v2945
        %v2981 = vpop.f32.mrf.mxu0
        %v2982 = vadd.f32 0.0, %v2981
        %v2983 = vpop.f32.mrf.mxu0
        %v2984 = vpop.f32.mrf.mxu0
        %v2985 = vadd.f32 0.0, %v2984
        %v2986 = vpop.f32.mrf.mxu0
        %2987 = vdwg.mxu0
        %v2989 = vsel %vm1183, %v2941, 0
        %2991 = vmatprep.subr.bf16.mxu0 0
        %2992 = vmatpush1.bf16.msra.mxu0 0
        %2993 = vmatprep.subr.bf16.mxu0 0
        %2994 = vmatpush1.bf16.msra.mxu0 0
        %2995 = vmatprep.subr.bf16.mxu0 0
        %2996 = vmatpush1.bf16.msra.mxu0 0
        %2997 = vmatprep.subr.bf16.mxu0 0
        %2998 = vmatpush1.bf16.msra.mxu0 0
        %2999 = vmatprep.subr.bf16.mxu0 0
        %3000 = vmatpush1.bf16.msra.mxu0 0
        %3001 = vmatprep.subr.bf16.mxu0 0
        %3002 = vmatpush1.bf16.msra.mxu0 0
        %3003 = vmatprep.subr.bf16.mxu0 0
        %3004 = vmatpush1.bf16.msra.mxu0 0
        %3005 = vmatprep.subr.bf16.mxu0 0
        %3006 = vmatpush1.bf16.msra.mxu0 %v2943
        %3007 = vmatprep.subr.bf16.mxu0 0
        %3008 = vmatpush2.bf16.msra.mxu0 0
        %3009 = vmatprep.subr.bf16.mxu0 0
        %3010 = vmatpush2.bf16.msra.mxu0 0
        %3011 = vmatprep.subr.bf16.mxu0 0
        %3012 = vmatpush2.bf16.msra.mxu0 0
        %3013 = vmatprep.subr.bf16.mxu0 0
        %3014 = vmatpush2.bf16.msra.mxu0 0
        %3015 = vmatprep.subr.bf16.mxu0 0
        %3016 = vmatpush2.bf16.msra.mxu0 0
        %3017 = vmatprep.subr.bf16.mxu0 0
        %3018 = vmatpush2.bf16.msra.mxu0 0
        %3019 = vmatprep.subr.bf16.mxu0 0
        %3020 = vmatpush2.bf16.msra.mxu0 0
        %3021 = vmatprep.subr.bf16.mxu0 0
        %3022 = vmatpush2.bf16.msra.mxu0 0
        %3023 = vmatprep.mubr.bf16.mxu0 0
        %3024 = vmatmul.mubr.bf16.gmra.mxu0 %v2989
        %v3025 = vpop.f32.mrf.mxu0
        %v3026 = vadd.f32 0.0, %v3025
        %v3027 = vpop.f32.mrf.mxu0
        %v3028 = vpop.f32.mrf.mxu0
        %v3029 = vadd.f32 0.0, %v3028
        %v3030 = vpop.f32.mrf.mxu0
        %3031 = vdwg.mxu0
        %3032 = vrot.lane.b32.xlu0 %v2794, 112
        %v3033 = vpop.permute.xlu0 %3032
        %3034 = vrot.lane.b32.xlu0 %v2794, 48
        %v3035 = vpop.permute.xlu0 %3034
        %v3037 = vsel %vm1183, %v3033, 0
        %v3040 = vsel %vm1183, %v3035, 0
        %3042 = vmatprep.subr.bf16.mxu0 0
        %3043 = vmatpush1.bf16.xpose.msra.mxu0 0
        %3044 = vmatprep.subr.bf16.mxu0 0
        %3045 = vmatpush1.bf16.xpose.msra.mxu0 0
        %3046 = vmatprep.subr.bf16.mxu0 0
        %3047 = vmatpush1.bf16.xpose.msra.mxu0 0
        %3048 = vmatprep.subr.bf16.mxu0 0
        %3049 = vmatpush1.bf16.xpose.msra.mxu0 0
        %3050 = vmatprep.subr.bf16.mxu0 0
        %3051 = vmatpush1.bf16.xpose.msra.mxu0 0
        %3052 = vmatprep.subr.bf16.mxu0 0
        %3053 = vmatpush1.bf16.xpose.msra.mxu0 0
        %3054 = vmatprep.subr.bf16.mxu0 0
        %3055 = vmatpush1.bf16.xpose.msra.mxu0 0
        %3056 = vmatprep.subr.bf16.mxu0 0
        %3057 = vmatpush1.bf16.xpose.msra.mxu0 %v3040
        %3058 = vmatprep.subr.bf16.mxu0 0
        %3059 = vmatpush2.bf16.xpose.msra.mxu0 0
        %3060 = vmatprep.subr.bf16.mxu0 0
        %3061 = vmatpush2.bf16.xpose.msra.mxu0 0
        %3062 = vmatprep.subr.bf16.mxu0 0
        %3063 = vmatpush2.bf16.xpose.msra.mxu0 0
        %3064 = vmatprep.subr.bf16.mxu0 0
        %3065 = vmatpush2.bf16.xpose.msra.mxu0 0
        %3066 = vmatprep.subr.bf16.mxu0 0
        %3067 = vmatpush2.bf16.xpose.msra.mxu0 0
        %3068 = vmatprep.subr.bf16.mxu0 0
        %3069 = vmatpush2.bf16.xpose.msra.mxu0 0
        %3070 = vmatprep.subr.bf16.mxu0 0
        %3071 = vmatpush2.bf16.xpose.msra.mxu0 0
        %3072 = vmatprep.subr.bf16.mxu0 0
        %3073 = vmatpush2.bf16.xpose.msra.mxu0 0
        %3074 = vmatprep.mubr.bf16.mxu0 0
        %3075 = vmatmul.mubr.bf16.gmra.mxu0 %v3037
        %v3076 = vpop.f32.mrf.mxu0
        %v3077 = vadd.f32 0.0, %v3076
        %v3078 = vpop.f32.mrf.mxu0
        %v3079 = vpop.f32.mrf.mxu0
        %v3080 = vadd.f32 0.0, %v3079
        %v3081 = vpop.f32.mrf.mxu0
        %3082 = vdwg.mxu0
        %3083 = vrot.lane.b32.xlu0 %v2795, 112
        %v3084 = vpop.permute.xlu0 %3083
        %3085 = vrot.lane.b32.xlu0 %v2795, 48
        %v3086 = vpop.permute.xlu0 %3085
        %v3088 = vsel %vm1183, %v3084, 0
        %v3091 = vsel %vm1183, %v3086, 0
        %3093 = vmatprep.subr.bf16.mxu0 0
        %3094 = vmatpush1.bf16.xpose.msra.mxu0 0
        %3095 = vmatprep.subr.bf16.mxu0 0
        %3096 = vmatpush1.bf16.xpose.msra.mxu0 0
        %3097 = vmatprep.subr.bf16.mxu0 0
        %3098 = vmatpush1.bf16.xpose.msra.mxu0 0
        %3099 = vmatprep.subr.bf16.mxu0 0
        %3100 = vmatpush1.bf16.xpose.msra.mxu0 0
        %3101 = vmatprep.subr.bf16.mxu0 0
        %3102 = vmatpush1.bf16.xpose.msra.mxu0 0
        %3103 = vmatprep.subr.bf16.mxu0 0
        %3104 = vmatpush1.bf16.xpose.msra.mxu0 0
        %3105 = vmatprep.subr.bf16.mxu0 0
        %3106 = vmatpush1.bf16.xpose.msra.mxu0 0
        %3107 = vmatprep.subr.bf16.mxu0 0
        %3108 = vmatpush1.bf16.xpose.msra.mxu0 %v3091
        %3109 = vmatprep.subr.bf16.mxu0 0
        %3110 = vmatpush2.bf16.xpose.msra.mxu0 0
        %3111 = vmatprep.subr.bf16.mxu0 0
        %3112 = vmatpush2.bf16.xpose.msra.mxu0 0
        %3113 = vmatprep.subr.bf16.mxu0 0
        %3114 = vmatpush2.bf16.xpose.msra.mxu0 0
        %3115 = vmatprep.subr.bf16.mxu0 0
        %3116 = vmatpush2.bf16.xpose.msra.mxu0 0
        %3117 = vmatprep.subr.bf16.mxu0 0
        %3118 = vmatpush2.bf16.xpose.msra.mxu0 0
        %3119 = vmatprep.subr.bf16.mxu0 0
        %3120 = vmatpush2.bf16.xpose.msra.mxu0 0
        %3121 = vmatprep.subr.bf16.mxu0 0
        %3122 = vmatpush2.bf16.xpose.msra.mxu0 0
        %3123 = vmatprep.subr.bf16.mxu0 0
        %3124 = vmatpush2.bf16.xpose.msra.mxu0 0
        %3125 = vmatprep.mubr.bf16.mxu0 0
        %3126 = vmatmul.mubr.bf16.gmra.mxu0 %v3088
        %v3127 = vpop.f32.mrf.mxu0
        %v3128 = vadd.f32 0.0, %v3127
        %v3129 = vpop.f32.mrf.mxu0
        %v3130 = vpop.f32.mrf.mxu0
        %v3131 = vadd.f32 0.0, %v3130
        %v3132 = vpop.f32.mrf.mxu0
        %3133 = vdwg.mxu0
        %v3134 = vsel %vm1183, %v3077, -inf
        %3135 = vmax.xlane.f32.xlu0 %v3134
        %v3136 = vpop.xlane.xlu0 %3135
        %v3137 = vsel %vm1183, %v3080, -inf
        %3138 = vmax.xlane.f32.xlu0 %v3137
        %v3139 = vpop.xlane.xlu0 %3138
        %v3140 = vsel %vm1183, %v3128, -inf
        %3141 = vmax.xlane.f32.xlu0 %v3140
        %v3142 = vpop.xlane.xlu0 %3141
        %v3143 = vsel %vm1183, %v3131, -inf
        %3144 = vmax.xlane.f32.xlu0 %v3143
        %v3145 = vpop.xlane.xlu0 %3144
        %v3146 = vsub.f32 %v3077, %v3136
        %v3147 = vsub.f32 %v3080, %v3139
        %v3148 = vsub.f32 %v3128, %v3142
        %v3149 = vsub.f32 %v3131, %v3145
        %v3150 = vmul.f32 %v3146, 1.442695
        %v3151 = vpow.pop %v3150
        %v3152 = vmul.f32 %v3147, 1.442695
        %v3153 = vpow.pop %v3152
        %v3154 = vmul.f32 %v3148, 1.442695
        %v3155 = vpow.pop %v3154
        %v3156 = vmul.f32 %v3149, 1.442695
        %v3157 = vpow.pop %v3156
        %v3158 = vsel %vm1183, %v3151, 0.0
        %3159 = vadd.xlane.f32.xlu0 %v3158
        %v3160 = vpop.xlane.xlu0 %3159
        %v3161 = vsel %vm1183, %v3153, 0.0
        %3162 = vadd.xlane.f32.xlu0 %v3161
        %v3163 = vpop.xlane.xlu0 %3162
        %v3164 = vsel %vm1183, %v3155, 0.0
        %3165 = vadd.xlane.f32.xlu0 %v3164
        %v3166 = vpop.xlane.xlu0 %3165
        %v3167 = vsel %vm1183, %v3157, 0.0
        %3168 = vadd.xlane.f32.xlu0 %v3167
        %v3169 = vpop.xlane.xlu0 %3168
        %v3170 = vrcp.pop %v3160
        %v3171 = vrcp.pop %v3163
        %v3172 = vrcp.pop %v3166
        %v3173 = vrcp.pop %v3169
        %v3174 = vmul.f32 %v3151, %v3170
        %v3175 = vmul.f32 %v3153, %v3171
        %v3176 = vmul.f32 %v3155, %v3172
        %v3177 = vmul.f32 %v3157, %v3173
        %v3178 = vpack.c.bf16 %v3175, %v3174
        %v3179 = vpack.c.bf16 %v3177, %v3176
        %3181 = vrot.lane.b32.xlu0 %v2942, 112
        %v3182 = vpop.permute.xlu0 %3181
        %v3185 = vsel %vm1183, %v3178, 0
        %3187 = vmatprep.subr.bf16.mxu0 0
        %3188 = vmatpush1.bf16.msra.mxu0 0
        %3189 = vmatprep.subr.bf16.mxu0 0
        %3190 = vmatpush1.bf16.msra.mxu0 0
        %3191 = vmatprep.subr.bf16.mxu0 0
        %3192 = vmatpush1.bf16.msra.mxu0 0
        %3193 = vmatprep.subr.bf16.mxu0 0
        %3194 = vmatpush1.bf16.msra.mxu0 0
        %3195 = vmatprep.subr.bf16.mxu0 0
        %3196 = vmatpush1.bf16.msra.mxu0 0
        %3197 = vmatprep.subr.bf16.mxu0 0
        %3198 = vmatpush1.bf16.msra.mxu0 0
        %3199 = vmatprep.subr.bf16.mxu0 0
        %3200 = vmatpush1.bf16.msra.mxu0 0
        %3201 = vmatprep.subr.bf16.mxu0 0
        %3202 = vmatpush1.bf16.msra.mxu0 %v3182
        %3203 = vmatprep.subr.bf16.mxu0 0
        %3204 = vmatpush2.bf16.msra.mxu0 0
        %3205 = vmatprep.subr.bf16.mxu0 0
        %3206 = vmatpush2.bf16.msra.mxu0 0
        %3207 = vmatprep.subr.bf16.mxu0 0
        %3208 = vmatpush2.bf16.msra.mxu0 0
        %3209 = vmatprep.subr.bf16.mxu0 0
        %3210 = vmatpush2.bf16.msra.mxu0 0
        %3211 = vmatprep.subr.bf16.mxu0 0
        %3212 = vmatpush2.bf16.msra.mxu0 0
        %3213 = vmatprep.subr.bf16.mxu0 0
        %3214 = vmatpush2.bf16.msra.mxu0 0
        %3215 = vmatprep.subr.bf16.mxu0 0
        %3216 = vmatpush2.bf16.msra.mxu0 0
        %3217 = vmatprep.subr.bf16.mxu0 0
        %3218 = vmatpush2.bf16.msra.mxu0 0
        %3219 = vmatprep.mubr.bf16.mxu0 0
        %3220 = vmatmul.mubr.bf16.gmra.mxu0 %v3185
        %v3221 = vpop.f32.mrf.mxu0
        %v3222 = vadd.f32 0.0, %v3221
        %v3223 = vpop.f32.mrf.mxu0
        %v3224 = vpop.f32.mrf.mxu0
        %v3225 = vadd.f32 0.0, %v3224
        %v3226 = vpop.f32.mrf.mxu0
        %3227 = vdwg.mxu0
        %3229 = vrot.lane.b32.xlu0 %v2943, 112
        %v3230 = vpop.permute.xlu0 %3229
        %v3233 = vsel %vm1183, %v3179, 0
        %3235 = vmatprep.subr.bf16.mxu0 0
        %3236 = vmatpush1.bf16.msra.mxu0 0
        %3237 = vmatprep.subr.bf16.mxu0 0
        %3238 = vmatpush1.bf16.msra.mxu0 0
        %3239 = vmatprep.subr.bf16.mxu0 0
        %3240 = vmatpush1.bf16.msra.mxu0 0
        %3241 = vmatprep.subr.bf16.mxu0 0
        %3242 = vmatpush1.bf16.msra.mxu0 0
        %3243 = vmatprep.subr.bf16.mxu0 0
        %3244 = vmatpush1.bf16.msra.mxu0 0
        %3245 = vmatprep.subr.bf16.mxu0 0
        %3246 = vmatpush1.bf16.msra.mxu0 0
        %3247 = vmatprep.subr.bf16.mxu0 0
        %3248 = vmatpush1.bf16.msra.mxu0 0
        %3249 = vmatprep.subr.bf16.mxu0 0
        %3250 = vmatpush1.bf16.msra.mxu0 %v3230
        %3251 = vmatprep.subr.bf16.mxu0 0
        %3252 = vmatpush2.bf16.msra.mxu0 0
        %3253 = vmatprep.subr.bf16.mxu0 0
        %3254 = vmatpush2.bf16.msra.mxu0 0
        %3255 = vmatprep.subr.bf16.mxu0 0
        %3256 = vmatpush2.bf16.msra.mxu0 0
        %3257 = vmatprep.subr.bf16.mxu0 0
        %3258 = vmatpush2.bf16.msra.mxu0 0
        %3259 = vmatprep.subr.bf16.mxu0 0
        %3260 = vmatpush2.bf16.msra.mxu0 0
        %3261 = vmatprep.subr.bf16.mxu0 0
        %3262 = vmatpush2.bf16.msra.mxu0 0
        %3263 = vmatprep.subr.bf16.mxu0 0
        %3264 = vmatpush2.bf16.msra.mxu0 0
        %3265 = vmatprep.subr.bf16.mxu0 0
        %3266 = vmatpush2.bf16.msra.mxu0 0
        %3267 = vmatprep.mubr.bf16.mxu0 0
        %3268 = vmatmul.mubr.bf16.gmra.mxu0 %v3233
        %v3269 = vpop.f32.mrf.mxu0
        %v3270 = vadd.f32 0.0, %v3269
        %v3271 = vpop.f32.mrf.mxu0
        %v3272 = vpop.f32.mrf.mxu0
        %v3273 = vadd.f32 0.0, %v3272
        %v3274 = vpop.f32.mrf.mxu0
        %3275 = vdwg.mxu0
        %3276 = vrot.lane.b32.xlu0 %v2794, 96
        %v3277 = vpop.permute.xlu0 %3276
        %3278 = vrot.lane.b32.xlu0 %v2794, 32
        %v3279 = vpop.permute.xlu0 %3278
        %v3281 = vsel %vm1183, %v3277, 0
        %v3284 = vsel %vm1183, %v3279, 0
        %3286 = vmatprep.subr.bf16.mxu0 0
        %3287 = vmatpush1.bf16.xpose.msra.mxu0 0
        %3288 = vmatprep.subr.bf16.mxu0 0
        %3289 = vmatpush1.bf16.xpose.msra.mxu0 0
        %3290 = vmatprep.subr.bf16.mxu0 0
        %3291 = vmatpush1.bf16.xpose.msra.mxu0 0
        %3292 = vmatprep.subr.bf16.mxu0 0
        %3293 = vmatpush1.bf16.xpose.msra.mxu0 0
        %3294 = vmatprep.subr.bf16.mxu0 0
        %3295 = vmatpush1.bf16.xpose.msra.mxu0 0
        %3296 = vmatprep.subr.bf16.mxu0 0
        %3297 = vmatpush1.bf16.xpose.msra.mxu0 0
        %3298 = vmatprep.subr.bf16.mxu0 0
        %3299 = vmatpush1.bf16.xpose.msra.mxu0 0
        %3300 = vmatprep.subr.bf16.mxu0 0
        %3301 = vmatpush1.bf16.xpose.msra.mxu0 %v3284
        %3302 = vmatprep.subr.bf16.mxu0 0
        %3303 = vmatpush2.bf16.xpose.msra.mxu0 0
        %3304 = vmatprep.subr.bf16.mxu0 0
        %3305 = vmatpush2.bf16.xpose.msra.mxu0 0
        %3306 = vmatprep.subr.bf16.mxu0 0
        %3307 = vmatpush2.bf16.xpose.msra.mxu0 0
        %3308 = vmatprep.subr.bf16.mxu0 0
        %3309 = vmatpush2.bf16.xpose.msra.mxu0 0
        %3310 = vmatprep.subr.bf16.mxu0 0
        %3311 = vmatpush2.bf16.xpose.msra.mxu0 0
        %3312 = vmatprep.subr.bf16.mxu0 0
        %3313 = vmatpush2.bf16.xpose.msra.mxu0 0
        %3314 = vmatprep.subr.bf16.mxu0 0
        %3315 = vmatpush2.bf16.xpose.msra.mxu0 0
        %3316 = vmatprep.subr.bf16.mxu0 0
        %3317 = vmatpush2.bf16.xpose.msra.mxu0 0
        %3318 = vmatprep.mubr.bf16.mxu0 0
        %3319 = vmatmul.mubr.bf16.gmra.mxu0 %v3281
        %v3320 = vpop.f32.mrf.mxu0
        %v3321 = vadd.f32 0.0, %v3320
        %v3322 = vpop.f32.mrf.mxu0
        %v3323 = vpop.f32.mrf.mxu0
        %v3324 = vadd.f32 0.0, %v3323
        %v3325 = vpop.f32.mrf.mxu0
        %3326 = vdwg.mxu0
        %3327 = vrot.lane.b32.xlu0 %v2795, 96
        %v3328 = vpop.permute.xlu0 %3327
        %3329 = vrot.lane.b32.xlu0 %v2795, 32
        %v3330 = vpop.permute.xlu0 %3329
        %v3332 = vsel %vm1183, %v3328, 0
        %v3335 = vsel %vm1183, %v3330, 0
        %3337 = vmatprep.subr.bf16.mxu0 0
        %3338 = vmatpush1.bf16.xpose.msra.mxu0 0
        %3339 = vmatprep.subr.bf16.mxu0 0
        %3340 = vmatpush1.bf16.xpose.msra.mxu0 0
        %3341 = vmatprep.subr.bf16.mxu0 0
        %3342 = vmatpush1.bf16.xpose.msra.mxu0 0
        %3343 = vmatprep.subr.bf16.mxu0 0
        %3344 = vmatpush1.bf16.xpose.msra.mxu0 0
        %3345 = vmatprep.subr.bf16.mxu0 0
        %3346 = vmatpush1.bf16.xpose.msra.mxu0 0
        %3347 = vmatprep.subr.bf16.mxu0 0
        %3348 = vmatpush1.bf16.xpose.msra.mxu0 0
        %3349 = vmatprep.subr.bf16.mxu0 0
        %3350 = vmatpush1.bf16.xpose.msra.mxu0 0
        %3351 = vmatprep.subr.bf16.mxu0 0
        %3352 = vmatpush1.bf16.xpose.msra.mxu0 %v3335
        %3353 = vmatprep.subr.bf16.mxu0 0
        %3354 = vmatpush2.bf16.xpose.msra.mxu0 0
        %3355 = vmatprep.subr.bf16.mxu0 0
        %3356 = vmatpush2.bf16.xpose.msra.mxu0 0
        %3357 = vmatprep.subr.bf16.mxu0 0
        %3358 = vmatpush2.bf16.xpose.msra.mxu0 0
        %3359 = vmatprep.subr.bf16.mxu0 0
        %3360 = vmatpush2.bf16.xpose.msra.mxu0 0
        %3361 = vmatprep.subr.bf16.mxu0 0
        %3362 = vmatpush2.bf16.xpose.msra.mxu0 0
        %3363 = vmatprep.subr.bf16.mxu0 0
        %3364 = vmatpush2.bf16.xpose.msra.mxu0 0
        %3365 = vmatprep.subr.bf16.mxu0 0
        %3366 = vmatpush2.bf16.xpose.msra.mxu0 0
        %3367 = vmatprep.subr.bf16.mxu0 0
        %3368 = vmatpush2.bf16.xpose.msra.mxu0 0
        %3369 = vmatprep.mubr.bf16.mxu0 0
        %3370 = vmatmul.mubr.bf16.gmra.mxu0 %v3332
        %v3371 = vpop.f32.mrf.mxu0
        %v3372 = vadd.f32 0.0, %v3371
        %v3373 = vpop.f32.mrf.mxu0
        %v3374 = vpop.f32.mrf.mxu0
        %v3375 = vadd.f32 0.0, %v3374
        %v3376 = vpop.f32.mrf.mxu0
        %3377 = vdwg.mxu0
        %v3378 = vsel %vm1183, %v3321, -inf
        %3379 = vmax.xlane.f32.xlu0 %v3378
        %v3380 = vpop.xlane.xlu0 %3379
        %v3381 = vsel %vm1183, %v3324, -inf
        %3382 = vmax.xlane.f32.xlu0 %v3381
        %v3383 = vpop.xlane.xlu0 %3382
        %v3384 = vsel %vm1183, %v3372, -inf
        %3385 = vmax.xlane.f32.xlu0 %v3384
        %v3386 = vpop.xlane.xlu0 %3385
        %v3387 = vsel %vm1183, %v3375, -inf
        %3388 = vmax.xlane.f32.xlu0 %v3387
        %v3389 = vpop.xlane.xlu0 %3388
        %v3390 = vsub.f32 %v3321, %v3380
        %v3391 = vsub.f32 %v3324, %v3383
        %v3392 = vsub.f32 %v3372, %v3386
        %v3393 = vsub.f32 %v3375, %v3389
        %v3394 = vmul.f32 %v3390, 1.442695
        %v3395 = vpow.pop %v3394
        %v3396 = vmul.f32 %v3391, 1.442695
        %v3397 = vpow.pop %v3396
        %v3398 = vmul.f32 %v3392, 1.442695
        %v3399 = vpow.pop %v3398
        %v3400 = vmul.f32 %v3393, 1.442695
        %v3401 = vpow.pop %v3400
        %v3402 = vsel %vm1183, %v3395, 0.0
        %3403 = vadd.xlane.f32.xlu0 %v3402
        %v3404 = vpop.xlane.xlu0 %3403
        %v3405 = vsel %vm1183, %v3397, 0.0
        %3406 = vadd.xlane.f32.xlu0 %v3405
        %v3407 = vpop.xlane.xlu0 %3406
        %v3408 = vsel %vm1183, %v3399, 0.0
        %3409 = vadd.xlane.f32.xlu0 %v3408
        %v3410 = vpop.xlane.xlu0 %3409
        %v3411 = vsel %vm1183, %v3401, 0.0
        %3412 = vadd.xlane.f32.xlu0 %v3411
        %v3413 = vpop.xlane.xlu0 %3412
        %v3414 = vrcp.pop %v3404
        %v3415 = vrcp.pop %v3407
        %v3416 = vrcp.pop %v3410
        %v3417 = vrcp.pop %v3413
        %v3418 = vmul.f32 %v3395, %v3414
        %v3419 = vmul.f32 %v3397, %v3415
        %v3420 = vmul.f32 %v3399, %v3416
        %v3421 = vmul.f32 %v3401, %v3417
        %v3422 = vpack.c.bf16 %v3419, %v3418
        %v3423 = vpack.c.bf16 %v3421, %v3420
        %3424 = vrot.lane.b32.xlu0 %v2942, 96
        %v3425 = vpop.permute.xlu0 %3424
        %v3428 = vsel %vm1183, %v3422, 0
        %3430 = vmatprep.subr.bf16.mxu0 0
        %3431 = vmatpush1.bf16.msra.mxu0 0
        %3432 = vmatprep.subr.bf16.mxu0 0
        %3433 = vmatpush1.bf16.msra.mxu0 0
        %3434 = vmatprep.subr.bf16.mxu0 0
        %3435 = vmatpush1.bf16.msra.mxu0 0
        %3436 = vmatprep.subr.bf16.mxu0 0
        %3437 = vmatpush1.bf16.msra.mxu0 0
        %3438 = vmatprep.subr.bf16.mxu0 0
        %3439 = vmatpush1.bf16.msra.mxu0 0
        %3440 = vmatprep.subr.bf16.mxu0 0
        %3441 = vmatpush1.bf16.msra.mxu0 0
        %3442 = vmatprep.subr.bf16.mxu0 0
        %3443 = vmatpush1.bf16.msra.mxu0 0
        %3444 = vmatprep.subr.bf16.mxu0 0
        %3445 = vmatpush1.bf16.msra.mxu0 %v3425
        %3446 = vmatprep.subr.bf16.mxu0 0
        %3447 = vmatpush2.bf16.msra.mxu0 0
        %3448 = vmatprep.subr.bf16.mxu0 0
        %3449 = vmatpush2.bf16.msra.mxu0 0
        %3450 = vmatprep.subr.bf16.mxu0 0
        %3451 = vmatpush2.bf16.msra.mxu0 0
        %3452 = vmatprep.subr.bf16.mxu0 0
        %3453 = vmatpush2.bf16.msra.mxu0 0
        %3454 = vmatprep.subr.bf16.mxu0 0
        %3455 = vmatpush2.bf16.msra.mxu0 0
        %3456 = vmatprep.subr.bf16.mxu0 0
        %3457 = vmatpush2.bf16.msra.mxu0 0
        %3458 = vmatprep.subr.bf16.mxu0 0
        %3459 = vmatpush2.bf16.msra.mxu0 0
        %3460 = vmatprep.subr.bf16.mxu0 0
        %3461 = vmatpush2.bf16.msra.mxu0 0
        %3462 = vmatprep.mubr.bf16.mxu0 0
        %3463 = vmatmul.mubr.bf16.gmra.mxu0 %v3428
        %v3464 = vpop.f32.mrf.mxu0
        %v3465 = vadd.f32 0.0, %v3464
        %v3466 = vpop.f32.mrf.mxu0
        %v3467 = vpop.f32.mrf.mxu0
        %v3468 = vadd.f32 0.0, %v3467
        %v3469 = vpop.f32.mrf.mxu0
        %3470 = vdwg.mxu0
        %3471 = vrot.lane.b32.xlu0 %v2943, 96
        %v3472 = vpop.permute.xlu0 %3471
        %v3475 = vsel %vm1183, %v3423, 0
        %3477 = vmatprep.subr.bf16.mxu0 0
        %3478 = vmatpush1.bf16.msra.mxu0 0
        %3479 = vmatprep.subr.bf16.mxu0 0
        %3480 = vmatpush1.bf16.msra.mxu0 0
        %3481 = vmatprep.subr.bf16.mxu0 0
        %3482 = vmatpush1.bf16.msra.mxu0 0
        %3483 = vmatprep.subr.bf16.mxu0 0
        %3484 = vmatpush1.bf16.msra.mxu0 0
        %3485 = vmatprep.subr.bf16.mxu0 0
        %3486 = vmatpush1.bf16.msra.mxu0 0
        %3487 = vmatprep.subr.bf16.mxu0 0
        %3488 = vmatpush1.bf16.msra.mxu0 0
        %3489 = vmatprep.subr.bf16.mxu0 0
        %3490 = vmatpush1.bf16.msra.mxu0 0
        %3491 = vmatprep.subr.bf16.mxu0 0
        %3492 = vmatpush1.bf16.msra.mxu0 %v3472
        %3493 = vmatprep.subr.bf16.mxu0 0
        %3494 = vmatpush2.bf16.msra.mxu0 0
        %3495 = vmatprep.subr.bf16.mxu0 0
        %3496 = vmatpush2.bf16.msra.mxu0 0
        %3497 = vmatprep.subr.bf16.mxu0 0
        %3498 = vmatpush2.bf16.msra.mxu0 0
        %3499 = vmatprep.subr.bf16.mxu0 0
        %3500 = vmatpush2.bf16.msra.mxu0 0
        %3501 = vmatprep.subr.bf16.mxu0 0
        %3502 = vmatpush2.bf16.msra.mxu0 0
        %3503 = vmatprep.subr.bf16.mxu0 0
        %3504 = vmatpush2.bf16.msra.mxu0 0
        %3505 = vmatprep.subr.bf16.mxu0 0
        %3506 = vmatpush2.bf16.msra.mxu0 0
        %3507 = vmatprep.subr.bf16.mxu0 0
        %3508 = vmatpush2.bf16.msra.mxu0 0
        %3509 = vmatprep.mubr.bf16.mxu0 0
        %3510 = vmatmul.mubr.bf16.gmra.mxu0 %v3475
        %v3511 = vpop.f32.mrf.mxu0
        %v3512 = vadd.f32 0.0, %v3511
        %v3513 = vpop.f32.mrf.mxu0
        %v3514 = vpop.f32.mrf.mxu0
        %v3515 = vadd.f32 0.0, %v3514
        %v3516 = vpop.f32.mrf.mxu0
        %3517 = vdwg.mxu0
        %3518 = vrot.lane.b32.xlu0 %v2794, 80
        %v3519 = vpop.permute.xlu0 %3518
        %3520 = vrot.lane.b32.xlu0 %v2794, 16
        %v3521 = vpop.permute.xlu0 %3520
        %v3523 = vsel %vm1183, %v3519, 0
        %v3526 = vsel %vm1183, %v3521, 0
        %3528 = vmatprep.subr.bf16.mxu0 0
        %3529 = vmatpush1.bf16.xpose.msra.mxu0 0
        %3530 = vmatprep.subr.bf16.mxu0 0
        %3531 = vmatpush1.bf16.xpose.msra.mxu0 0
        %3532 = vmatprep.subr.bf16.mxu0 0
        %3533 = vmatpush1.bf16.xpose.msra.mxu0 0
        %3534 = vmatprep.subr.bf16.mxu0 0
        %3535 = vmatpush1.bf16.xpose.msra.mxu0 0
        %3536 = vmatprep.subr.bf16.mxu0 0
        %3537 = vmatpush1.bf16.xpose.msra.mxu0 0
        %3538 = vmatprep.subr.bf16.mxu0 0
        %3539 = vmatpush1.bf16.xpose.msra.mxu0 0
        %3540 = vmatprep.subr.bf16.mxu0 0
        %3541 = vmatpush1.bf16.xpose.msra.mxu0 0
        %3542 = vmatprep.subr.bf16.mxu0 0
        %3543 = vmatpush1.bf16.xpose.msra.mxu0 %v3526
        %3544 = vmatprep.subr.bf16.mxu0 0
        %3545 = vmatpush2.bf16.xpose.msra.mxu0 0
        %3546 = vmatprep.subr.bf16.mxu0 0
        %3547 = vmatpush2.bf16.xpose.msra.mxu0 0
        %3548 = vmatprep.subr.bf16.mxu0 0
        %3549 = vmatpush2.bf16.xpose.msra.mxu0 0
        %3550 = vmatprep.subr.bf16.mxu0 0
        %3551 = vmatpush2.bf16.xpose.msra.mxu0 0
        %3552 = vmatprep.subr.bf16.mxu0 0
        %3553 = vmatpush2.bf16.xpose.msra.mxu0 0
        %3554 = vmatprep.subr.bf16.mxu0 0
        %3555 = vmatpush2.bf16.xpose.msra.mxu0 0
        %3556 = vmatprep.subr.bf16.mxu0 0
        %3557 = vmatpush2.bf16.xpose.msra.mxu0 0
        %3558 = vmatprep.subr.bf16.mxu0 0
        %3559 = vmatpush2.bf16.xpose.msra.mxu0 0
        %3560 = vmatprep.mubr.bf16.mxu0 0
        %3561 = vmatmul.mubr.bf16.gmra.mxu0 %v3523
        %v3562 = vpop.f32.mrf.mxu0
        %v3563 = vadd.f32 0.0, %v3562
        %v3564 = vpop.f32.mrf.mxu0
        %v3565 = vpop.f32.mrf.mxu0
        %v3566 = vadd.f32 0.0, %v3565
        %v3567 = vpop.f32.mrf.mxu0
        %3568 = vdwg.mxu0
        %3569 = vrot.lane.b32.xlu0 %v2795, 80
        %v3570 = vpop.permute.xlu0 %3569
        %3571 = vrot.lane.b32.xlu0 %v2795, 16
        %v3572 = vpop.permute.xlu0 %3571
        %v3574 = vsel %vm1183, %v3570, 0
        %v3577 = vsel %vm1183, %v3572, 0
        %3579 = vmatprep.subr.bf16.mxu0 0
        %3580 = vmatpush1.bf16.xpose.msra.mxu0 0
        %3581 = vmatprep.subr.bf16.mxu0 0
        %3582 = vmatpush1.bf16.xpose.msra.mxu0 0
        %3583 = vmatprep.subr.bf16.mxu0 0
        %3584 = vmatpush1.bf16.xpose.msra.mxu0 0
        %3585 = vmatprep.subr.bf16.mxu0 0
        %3586 = vmatpush1.bf16.xpose.msra.mxu0 0
        %3587 = vmatprep.subr.bf16.mxu0 0
        %3588 = vmatpush1.bf16.xpose.msra.mxu0 0
        %3589 = vmatprep.subr.bf16.mxu0 0
        %3590 = vmatpush1.bf16.xpose.msra.mxu0 0
        %3591 = vmatprep.subr.bf16.mxu0 0
        %3592 = vmatpush1.bf16.xpose.msra.mxu0 0
        %3593 = vmatprep.subr.bf16.mxu0 0
        %3594 = vmatpush1.bf16.xpose.msra.mxu0 %v3577
        %3595 = vmatprep.subr.bf16.mxu0 0
        %3596 = vmatpush2.bf16.xpose.msra.mxu0 0
        %3597 = vmatprep.subr.bf16.mxu0 0
        %3598 = vmatpush2.bf16.xpose.msra.mxu0 0
        %3599 = vmatprep.subr.bf16.mxu0 0
        %3600 = vmatpush2.bf16.xpose.msra.mxu0 0
        %3601 = vmatprep.subr.bf16.mxu0 0
        %3602 = vmatpush2.bf16.xpose.msra.mxu0 0
        %3603 = vmatprep.subr.bf16.mxu0 0
        %3604 = vmatpush2.bf16.xpose.msra.mxu0 0
        %3605 = vmatprep.subr.bf16.mxu0 0
        %3606 = vmatpush2.bf16.xpose.msra.mxu0 0
        %3607 = vmatprep.subr.bf16.mxu0 0
        %3608 = vmatpush2.bf16.xpose.msra.mxu0 0
        %3609 = vmatprep.subr.bf16.mxu0 0
        %3610 = vmatpush2.bf16.xpose.msra.mxu0 0
        %3611 = vmatprep.mubr.bf16.mxu0 0
        %3612 = vmatmul.mubr.bf16.gmra.mxu0 %v3574
        %v3613 = vpop.f32.mrf.mxu0
        %v3614 = vadd.f32 0.0, %v3613
        %v3615 = vpop.f32.mrf.mxu0
        %v3616 = vpop.f32.mrf.mxu0
        %v3617 = vadd.f32 0.0, %v3616
        %v3618 = vpop.f32.mrf.mxu0
        %3619 = vdwg.mxu0
        %v3620 = vsel %vm1183, %v3563, -inf
        %3621 = vmax.xlane.f32.xlu0 %v3620
        %v3622 = vpop.xlane.xlu0 %3621
        %v3623 = vsel %vm1183, %v3566, -inf
        %3624 = vmax.xlane.f32.xlu0 %v3623
        %v3625 = vpop.xlane.xlu0 %3624
        %v3626 = vsel %vm1183, %v3614, -inf
        %3627 = vmax.xlane.f32.xlu0 %v3626
        %v3628 = vpop.xlane.xlu0 %3627
        %v3629 = vsel %vm1183, %v3617, -inf
        %3630 = vmax.xlane.f32.xlu0 %v3629
        %v3631 = vpop.xlane.xlu0 %3630
        %v3632 = vsub.f32 %v3563, %v3622
        %v3633 = vsub.f32 %v3566, %v3625
        %v3634 = vsub.f32 %v3614, %v3628
        %v3635 = vsub.f32 %v3617, %v3631
        %v3636 = vmul.f32 %v3632, 1.442695
        %v3637 = vpow.pop %v3636
        %v3638 = vmul.f32 %v3633, 1.442695
        %v3639 = vpow.pop %v3638
        %v3640 = vmul.f32 %v3634, 1.442695
        %v3641 = vpow.pop %v3640
        %v3642 = vmul.f32 %v3635, 1.442695
        %v3643 = vpow.pop %v3642
        %v3644 = vsel %vm1183, %v3637, 0.0
        %3645 = vadd.xlane.f32.xlu0 %v3644
        %v3646 = vpop.xlane.xlu0 %3645
        %v3647 = vsel %vm1183, %v3639, 0.0
        %3648 = vadd.xlane.f32.xlu0 %v3647
        %v3649 = vpop.xlane.xlu0 %3648
        %v3650 = vsel %vm1183, %v3641, 0.0
        %3651 = vadd.xlane.f32.xlu0 %v3650
        %v3652 = vpop.xlane.xlu0 %3651
        %v3653 = vsel %vm1183, %v3643, 0.0
        %3654 = vadd.xlane.f32.xlu0 %v3653
        %v3655 = vpop.xlane.xlu0 %3654
        %v3656 = vrcp.pop %v3646
        %v3657 = vrcp.pop %v3649
        %v3658 = vrcp.pop %v3652
        %v3659 = vrcp.pop %v3655
        %v3660 = vmul.f32 %v3637, %v3656
        %v3661 = vmul.f32 %v3639, %v3657
        %v3662 = vmul.f32 %v3641, %v3658
        %v3663 = vmul.f32 %v3643, %v3659
        %v3664 = vpack.c.bf16 %v3661, %v3660
        %v3665 = vpack.c.bf16 %v3663, %v3662
        %3666 = vrot.lane.b32.xlu0 %v2942, 80
        %v3667 = vpop.permute.xlu0 %3666
        %v3670 = vsel %vm1183, %v3664, 0
        %3672 = vmatprep.subr.bf16.mxu0 0
        %3673 = vmatpush1.bf16.msra.mxu0 0
        %3674 = vmatprep.subr.bf16.mxu0 0
        %3675 = vmatpush1.bf16.msra.mxu0 0
        %3676 = vmatprep.subr.bf16.mxu0 0
        %3677 = vmatpush1.bf16.msra.mxu0 0
        %3678 = vmatprep.subr.bf16.mxu0 0
        %3679 = vmatpush1.bf16.msra.mxu0 0
        %3680 = vmatprep.subr.bf16.mxu0 0
        %3681 = vmatpush1.bf16.msra.mxu0 0
        %3682 = vmatprep.subr.bf16.mxu0 0
        %3683 = vmatpush1.bf16.msra.mxu0 0
        %3684 = vmatprep.subr.bf16.mxu0 0
        %3685 = vmatpush1.bf16.msra.mxu0 0
        %3686 = vmatprep.subr.bf16.mxu0 0
        %3687 = vmatpush1.bf16.msra.mxu0 %v3667
        %3688 = vmatprep.subr.bf16.mxu0 0
        %3689 = vmatpush2.bf16.msra.mxu0 0
        %3690 = vmatprep.subr.bf16.mxu0 0
        %3691 = vmatpush2.bf16.msra.mxu0 0
        %3692 = vmatprep.subr.bf16.mxu0 0
        %3693 = vmatpush2.bf16.msra.mxu0 0
        %3694 = vmatprep.subr.bf16.mxu0 0
        %3695 = vmatpush2.bf16.msra.mxu0 0
        %3696 = vmatprep.subr.bf16.mxu0 0
        %3697 = vmatpush2.bf16.msra.mxu0 0
        %3698 = vmatprep.subr.bf16.mxu0 0
        %3699 = vmatpush2.bf16.msra.mxu0 0
        %3700 = vmatprep.subr.bf16.mxu0 0
        %3701 = vmatpush2.bf16.msra.mxu0 0
        %3702 = vmatprep.subr.bf16.mxu0 0
        %3703 = vmatpush2.bf16.msra.mxu0 0
        %3704 = vmatprep.mubr.bf16.mxu0 0
        %3705 = vmatmul.mubr.bf16.gmra.mxu0 %v3670
        %v3706 = vpop.f32.mrf.mxu0
        %v3707 = vadd.f32 0.0, %v3706
        %v3708 = vpop.f32.mrf.mxu0
        %v3709 = vpop.f32.mrf.mxu0
        %v3710 = vadd.f32 0.0, %v3709
        %v3711 = vpop.f32.mrf.mxu0
        %3712 = vdwg.mxu0
        %3713 = vrot.lane.b32.xlu0 %v2943, 80
        %v3714 = vpop.permute.xlu0 %3713
        %v3717 = vsel %vm1183, %v3665, 0
        %3719 = vmatprep.subr.bf16.mxu0 0
        %3720 = vmatpush1.bf16.msra.mxu0 0
        %3721 = vmatprep.subr.bf16.mxu0 0
        %3722 = vmatpush1.bf16.msra.mxu0 0
        %3723 = vmatprep.subr.bf16.mxu0 0
        %3724 = vmatpush1.bf16.msra.mxu0 0
        %3725 = vmatprep.subr.bf16.mxu0 0
        %3726 = vmatpush1.bf16.msra.mxu0 0
        %3727 = vmatprep.subr.bf16.mxu0 0
        %3728 = vmatpush1.bf16.msra.mxu0 0
        %3729 = vmatprep.subr.bf16.mxu0 0
        %3730 = vmatpush1.bf16.msra.mxu0 0
        %3731 = vmatprep.subr.bf16.mxu0 0
        %3732 = vmatpush1.bf16.msra.mxu0 0
        %3733 = vmatprep.subr.bf16.mxu0 0
        %3734 = vmatpush1.bf16.msra.mxu0 %v3714
        %3735 = vmatprep.subr.bf16.mxu0 0
        %3736 = vmatpush2.bf16.msra.mxu0 0
        %3737 = vmatprep.subr.bf16.mxu0 0
        %3738 = vmatpush2.bf16.msra.mxu0 0
        %3739 = vmatprep.subr.bf16.mxu0 0
        %3740 = vmatpush2.bf16.msra.mxu0 0
        %3741 = vmatprep.subr.bf16.mxu0 0
        %3742 = vmatpush2.bf16.msra.mxu0 0
        %3743 = vmatprep.subr.bf16.mxu0 0
        %3744 = vmatpush2.bf16.msra.mxu0 0
        %3745 = vmatprep.subr.bf16.mxu0 0
        %3746 = vmatpush2.bf16.msra.mxu0 0
        %3747 = vmatprep.subr.bf16.mxu0 0
        %3748 = vmatpush2.bf16.msra.mxu0 0
        %3749 = vmatprep.subr.bf16.mxu0 0
        %3750 = vmatpush2.bf16.msra.mxu0 0
        %3751 = vmatprep.mubr.bf16.mxu0 0
        %3752 = vmatmul.mubr.bf16.gmra.mxu0 %v3717
        %v3753 = vpop.f32.mrf.mxu0
        %v3754 = vadd.f32 0.0, %v3753
        %v3755 = vpop.f32.mrf.mxu0
        %v3756 = vpop.f32.mrf.mxu0
        %v3757 = vadd.f32 0.0, %v3756
        %v3758 = vpop.f32.mrf.mxu0
        %3759 = vdwg.mxu0
        %3764 = vrot.lane.b32.xlu0 %v3222, 16
        %v3765 = vpop.permute.xlu0 %3764
        %3766 = vrot.lane.b32.xlu0 %v3225, 16
        %v3767 = vpop.permute.xlu0 %3766
        %3768 = vrot.lane.b32.xlu0 %v3270, 16
        %v3769 = vpop.permute.xlu0 %3768
        %3770 = vrot.lane.b32.xlu0 %v3273, 16
        %v3771 = vpop.permute.xlu0 %3770
        %3780 = vrot.lane.b32.xlu0 %v3465, 32
        %v3781 = vpop.permute.xlu0 %3780
        %3782 = vrot.lane.b32.xlu0 %v3468, 32
        %v3783 = vpop.permute.xlu0 %3782
        %3784 = vrot.lane.b32.xlu0 %v3512, 32
        %v3785 = vpop.permute.xlu0 %3784
        %3786 = vrot.lane.b32.xlu0 %v3515, 32
        %v3787 = vpop.permute.xlu0 %3786
        %3796 = vrot.lane.b32.xlu0 %v3707, 48
        %v3797 = vpop.permute.xlu0 %3796
        %3798 = vrot.lane.b32.xlu0 %v3710, 48
        %v3799 = vpop.permute.xlu0 %3798
        %3800 = vrot.lane.b32.xlu0 %v3754, 48
        %v3801 = vpop.permute.xlu0 %3800
        %3802 = vrot.lane.b32.xlu0 %v3757, 48
        %v3803 = vpop.permute.xlu0 %3802
        %v3808 = vsel %vm1183, %v2982, %v3765
        %v3809 = vsel %vm1183, %v2985, %v3767
        %v3810 = vsel %vm1183, %v3026, %v3769
        %v3811 = vsel %vm1183, %v3029, %v3771
        %v3812 = vsel %vm2197, %v3808, %v3781
        %v3813 = vsel %vm2197, %v3809, %v3783
        %v3814 = vsel %vm2197, %v3810, %v3785
        %v3815 = vsel %vm2197, %v3811, %v3787
        %v3816 = vsel %vm2202, %v3812, %v3797
        %v3817 = vsel %vm2202, %v3813, %v3799
        %v3818 = vsel %vm2202, %v3814, %v3801
        %v3819 = vsel %vm2202, %v3815, %v3803
        %s3820 = scalar_lea.vmem %s5, 96
        %v3821 = vld [vmem:[%s3820] sm:$0xf]
        %v3822 = vld [vmem:[%s3820 + $0x4] sm:$0xf]
        %v3823 = vld [vmem:[%s3820 + $0x8] sm:$0xf]
        %v3824 = vld [vmem:[%s3820 + $0xc] sm:$0xf]
        %v3825 = vld [vmem:[%s3820 + $0x10] sm:$0xf]
        %v3826 = vld [vmem:[%s3820 + $0x14] sm:$0xf]
        %v3827 = vld [vmem:[%s3820 + $0x18] sm:$0xf]
        %v3828 = vld [vmem:[%s3820 + $0x1c] sm:$0xf]
        %v3829 = vpack.c.bf16 %v3817, %v3816
        %v3830 = vpack.c.bf16 %v3819, %v3818
        %v3831 = vlaneseq
        %v3832 = vshrl.u32 %v3831, 7
        %v3833 = vsub.s32 0, %v3832
        %v3834 = vrot.slane %v2670, %v3833
        %v3843 = vunpack.c.l.b16 %v3821
        %v3844 = vunpack.c.l.b16 %v3822
        %v3845 = vunpack.c.l.b16 %v3823
        %v3846 = vunpack.c.l.b16 %v3824
        %v3847 = vunpack.c.l.b16 %v3825
        %v3848 = vunpack.c.l.b16 %v3826
        %v3849 = vunpack.c.l.b16 %v3827
        %v3850 = vunpack.c.l.b16 %v3828
        %v3851 = vpack.c.b16 %v3844, %v3843
        %v3852 = vpack.c.b16 %v3846, %v3845
        %v3853 = vpack.c.b16 %v3848, %v3847
        %v3854 = vpack.c.b16 %v3850, %v3849
        %v3860 = vsel %vm1118, %v3829, 0
        %v3863 = vsel %vm1118, %v3830, 0
        %3865 = vmatprep.subr.bf16.mxu0 0
        %3866 = vmatpush1.bf16.msra.mxu0 0
        %3867 = vmatprep.subr.bf16.mxu0 0
        %3868 = vmatpush1.bf16.msra.mxu0 0
        %3869 = vmatprep.subr.bf16.mxu0 0
        %3870 = vmatpush1.bf16.msra.mxu0 0
        %3871 = vmatprep.subr.bf16.mxu0 0
        %3872 = vmatpush1.bf16.msra.mxu0 0
        %3873 = vmatprep.subr.bf16.mxu0 0
        %3874 = vmatpush1.bf16.msra.mxu0 %v3854
        %3875 = vmatprep.subr.bf16.mxu0 0
        %3876 = vmatpush1.bf16.msra.mxu0 %v3853
        %3877 = vmatprep.subr.bf16.mxu0 0
        %3878 = vmatpush1.bf16.msra.mxu0 %v3852
        %3879 = vmatprep.subr.bf16.mxu0 0
        %3880 = vmatpush1.bf16.msra.mxu0 %v3851
        %3881 = vmatprep.subr.bf16.mxu0 0
        %3882 = vmatpush2.bf16.msra.mxu0 0
        %3883 = vmatprep.subr.bf16.mxu0 0
        %3884 = vmatpush2.bf16.msra.mxu0 0
        %3885 = vmatprep.subr.bf16.mxu0 0
        %3886 = vmatpush2.bf16.msra.mxu0 0
        %3887 = vmatprep.subr.bf16.mxu0 0
        %3888 = vmatpush2.bf16.msra.mxu0 0
        %3889 = vmatprep.subr.bf16.mxu0 0
        %3890 = vmatpush2.bf16.msra.mxu0 0
        %3891 = vmatprep.subr.bf16.mxu0 0
        %3892 = vmatpush2.bf16.msra.mxu0 0
        %3893 = vmatprep.subr.bf16.mxu0 0
        %3894 = vmatpush2.bf16.msra.mxu0 0
        %3895 = vmatprep.subr.bf16.mxu0 0
        %3896 = vmatpush2.bf16.msra.mxu0 0
        %3897 = vmatprep.mubr.bf16.mxu0 0
        %3898 = vmatmul.mubr.bf16.gmra.mxu0 %v3860
        %v3899 = vpop.f32.mrf.mxu0
        %v3900 = vadd.f32 %v3834, %v3899
        %v3901 = vpop.f32.mrf.mxu0
        %v3902 = vpop.f32.mrf.mxu0
        %v3903 = vadd.f32 %v3834, %v3902
        %v3904 = vpop.f32.mrf.mxu0
        %3905 = vmatprep.mubr.bf16.mxu0 0
        %3906 = vmatmul.mubr.bf16.gmra.mxu0 %v3863
        %v3907 = vpop.f32.mrf.mxu0
        %v3908 = vadd.f32 %v3834, %v3907
        %v3909 = vpop.f32.mrf.mxu0
        %v3910 = vpop.f32.mrf.mxu0
        %v3911 = vadd.f32 %v3834, %v3910
        %v3912 = vpop.f32.mrf.mxu0
        %3913 = vdwg.mxu0
        %v3914 = vadd.f32 %v2665, %v3900
        %v3915 = vadd.f32 %v2666, %v3903
        %v3916 = vadd.f32 %v2667, %v3908
        %v3917 = vadd.f32 %v2668, %v3911
        %v3918 = vsel %vm1118, %v3914, 0.0
        %3919 = vadd.xlane.f32.xlu0 %v3918
        %v3920 = vpop.xlane.xlu0 %3919
        %v3921 = vsel %vm1118, %v3915, 0.0
        %3922 = vadd.xlane.f32.xlu0 %v3921
        %v3923 = vpop.xlane.xlu0 %3922
        %v3924 = vsel %vm1118, %v3916, 0.0
        %3925 = vadd.xlane.f32.xlu0 %v3924
        %v3926 = vpop.xlane.xlu0 %3925
        %v3927 = vsel %vm1118, %v3917, 0.0
        %3928 = vadd.xlane.f32.xlu0 %v3927
        %v3929 = vpop.xlane.xlu0 %3928
        %v3930 = vmul.f32 %v3920, %v2316
        %v3931 = vmul.f32 %v3923, %v2316
        %v3932 = vmul.f32 %v3926, %v2316
        %v3933 = vmul.f32 %v3929, %v2316
        %v3934 = vsub.f32 %v3914, %v3930
        %v3935 = vsub.f32 %v3915, %v3931
        %v3936 = vsub.f32 %v3916, %v3932
        %v3937 = vsub.f32 %v3917, %v3933
        %v3938 = vmul.f32 %v3934, %v3934
        %v3939 = vmul.f32 %v3935, %v3935
        %v3940 = vmul.f32 %v3936, %v3936
        %v3941 = vmul.f32 %v3937, %v3937
        %v3942 = vsel %vm1118, %v3938, 0.0
        %3943 = vadd.xlane.f32.xlu0 %v3942
        %v3944 = vpop.xlane.xlu0 %3943
        %v3945 = vsel %vm1118, %v3939, 0.0
        %3946 = vadd.xlane.f32.xlu0 %v3945
        %v3947 = vpop.xlane.xlu0 %3946
        %v3948 = vsel %vm1118, %v3940, 0.0
        %3949 = vadd.xlane.f32.xlu0 %v3948
        %v3950 = vpop.xlane.xlu0 %3949
        %v3951 = vsel %vm1118, %v3941, 0.0
        %3952 = vadd.xlane.f32.xlu0 %v3951
        %v3953 = vpop.xlane.xlu0 %3952
        %v3954 = vmul.f32 %v3944, %v2316
        %v3955 = vmul.f32 %v3947, %v2316
        %v3956 = vmul.f32 %v3950, %v2316
        %v3957 = vmul.f32 %v3953, %v2316
        %v3958 = vadd.f32 %v3954, 1e-05
        %v3959 = vadd.f32 %v3955, 1e-05
        %v3960 = vadd.f32 %v3956, 1e-05
        %v3961 = vadd.f32 %v3957, 1e-05
        %v3962 = vrsqrt.pop %v3958
        %v3963 = vrsqrt.pop %v3959
        %v3964 = vrsqrt.pop %v3960
        %v3965 = vrsqrt.pop %v3961
        %v3966 = vmul.f32 %v3934, %v3962
        %v3967 = vmul.f32 %v3935, %v3963
        %v3968 = vmul.f32 %v3936, %v3964
        %v3969 = vmul.f32 %v3937, %v3965
        %v3970 = vlaneseq
        %v3971 = vshrl.u32 %v3970, 7
        %v3972 = vsub.s32 1, %v3971
        %v3973 = vrot.slane %v2670, %v3972
        %v3974 = vmul.f32 %v3966, %v3973
        %v3975 = vmul.f32 %v3967, %v3973
        %v3976 = vmul.f32 %v3968, %v3973
        %v3977 = vmul.f32 %v3969, %v3973
        %v3978 = vlaneseq
        %v3979 = vshrl.u32 %v3978, 7
        %v3980 = vsub.s32 2, %v3979
        %v3981 = vrot.slane %v2670, %v3980
        %v3982 = vadd.f32 %v3974, %v3981
        %v3983 = vadd.f32 %v3975, %v3981
        %v3984 = vadd.f32 %v3976, %v3981
        %v3985 = vadd.f32 %v3977, %v3981
        %s3986 = scalar_lea.vmem %s5, 128
        %v3987 = vld [vmem:[%s3986] sm:$0xf]
        %v3988 = vld [vmem:[%s3986 + $0x4] sm:$0xf]
        %v3989 = vld [vmem:[%s3986 + $0x8] sm:$0xf]
        %v3990 = vld [vmem:[%s3986 + $0xc] sm:$0xf]
        %v3991 = vld [vmem:[%s3986 + $0x10] sm:$0xf]
        %v3992 = vld [vmem:[%s3986 + $0x14] sm:$0xf]
        %v3993 = vld [vmem:[%s3986 + $0x18] sm:$0xf]
        %v3994 = vld [vmem:[%s3986 + $0x1c] sm:$0xf]
        %v3995 = vpack.c.bf16 %v3983, %v3982
        %v3996 = vpack.c.bf16 %v3985, %v3984
        %v3997 = vlaneseq
        %v3998 = vshrl.u32 %v3997, 7
        %v3999 = vsub.s32 3, %v3998
        %v4000 = vrot.slane %v2670, %v3999
        %v4009 = vunpack.c.l.b16 %v3987
        %v4010 = vunpack.c.l.b16 %v3988
        %v4011 = vunpack.c.l.b16 %v3989
        %v4012 = vunpack.c.l.b16 %v3990
        %v4013 = vunpack.c.l.b16 %v3991
        %v4014 = vunpack.c.l.b16 %v3992
        %v4015 = vunpack.c.l.b16 %v3993
        %v4016 = vunpack.c.l.b16 %v3994
        %v4017 = vpack.c.b16 %v4010, %v4009
        %v4018 = vpack.c.b16 %v4012, %v4011
        %v4019 = vpack.c.b16 %v4014, %v4013
        %v4020 = vpack.c.b16 %v4016, %v4015
        %v4026 = vsel %vm1118, %v3995, 0
        %v4029 = vsel %vm1118, %v3996, 0
        %4031 = vmatprep.subr.bf16.mxu0 0
        %4032 = vmatpush1.bf16.msra.mxu0 0
        %4033 = vmatprep.subr.bf16.mxu0 0
        %4034 = vmatpush1.bf16.msra.mxu0 0
        %4035 = vmatprep.subr.bf16.mxu0 0
        %4036 = vmatpush1.bf16.msra.mxu0 0
        %4037 = vmatprep.subr.bf16.mxu0 0
        %4038 = vmatpush1.bf16.msra.mxu0 0
        %4039 = vmatprep.subr.bf16.mxu0 0
        %4040 = vmatpush1.bf16.msra.mxu0 %v4020
        %4041 = vmatprep.subr.bf16.mxu0 0
        %4042 = vmatpush1.bf16.msra.mxu0 %v4019
        %4043 = vmatprep.subr.bf16.mxu0 0
        %4044 = vmatpush1.bf16.msra.mxu0 %v4018
        %4045 = vmatprep.subr.bf16.mxu0 0
        %4046 = vmatpush1.bf16.msra.mxu0 %v4017
        %4047 = vmatprep.subr.bf16.mxu0 0
        %4048 = vmatpush2.bf16.msra.mxu0 0
        %4049 = vmatprep.subr.bf16.mxu0 0
        %4050 = vmatpush2.bf16.msra.mxu0 0
        %4051 = vmatprep.subr.bf16.mxu0 0
        %4052 = vmatpush2.bf16.msra.mxu0 0
        %4053 = vmatprep.subr.bf16.mxu0 0
        %4054 = vmatpush2.bf16.msra.mxu0 0
        %4055 = vmatprep.subr.bf16.mxu0 0
        %4056 = vmatpush2.bf16.msra.mxu0 0
        %4057 = vmatprep.subr.bf16.mxu0 0
        %4058 = vmatpush2.bf16.msra.mxu0 0
        %4059 = vmatprep.subr.bf16.mxu0 0
        %4060 = vmatpush2.bf16.msra.mxu0 0
        %4061 = vmatprep.subr.bf16.mxu0 0
        %4062 = vmatpush2.bf16.msra.mxu0 0
        %4063 = vmatprep.mubr.bf16.mxu0 0
        %4064 = vmatmul.mubr.bf16.gmra.mxu0 %v4026
        %v4065 = vpop.f32.mrf.mxu0
        %v4066 = vadd.f32 %v4000, %v4065
        %v4067 = vpop.f32.mrf.mxu0
        %v4068 = vpop.f32.mrf.mxu0
        %v4069 = vadd.f32 %v4000, %v4068
        %v4070 = vpop.f32.mrf.mxu0
        %4071 = vmatprep.mubr.bf16.mxu0 0
        %4072 = vmatmul.mubr.bf16.gmra.mxu0 %v4029
        %v4073 = vpop.f32.mrf.mxu0
        %v4074 = vadd.f32 %v4000, %v4073
        %v4075 = vpop.f32.mrf.mxu0
        %v4076 = vpop.f32.mrf.mxu0
        %v4077 = vadd.f32 %v4000, %v4076
        %v4078 = vpop.f32.mrf.mxu0
        %4079 = vdwg.mxu0
        %v4080 = vmul.f32 %v4066, 0.5
        %v4081 = vmul.f32 %v4069, 0.5
        %v4082 = vmul.f32 %v4074, 0.5
        %v4083 = vmul.f32 %v4077, 0.5
        %v4084 = vmul.f32 %v4066, 0.044715
        %v4085 = vmul.f32 %v4069, 0.044715
        %v4086 = vmul.f32 %v4074, 0.044715
        %v4087 = vmul.f32 %v4077, 0.044715
        %v4088 = vmul.f32 %v4084, %v4066
        %v4089 = vmul.f32 %v4085, %v4069
        %v4090 = vmul.f32 %v4086, %v4074
        %v4091 = vmul.f32 %v4087, %v4077
        %v4092 = vmul.f32 %v4088, %v4066
        %v4093 = vmul.f32 %v4089, %v4069
        %v4094 = vmul.f32 %v4090, %v4074
        %v4095 = vmul.f32 %v4091, %v4077
        %v4096 = vadd.f32 %v4066, %v4092
        %v4097 = vadd.f32 %v4069, %v4093
        %v4098 = vadd.f32 %v4074, %v4094
        %v4099 = vadd.f32 %v4077, %v4095
        %v4100 = vmul.f32 %v4096, 0.7978846
        %v4101 = vmul.f32 %v4097, 0.7978846
        %v4102 = vmul.f32 %v4098, 0.7978846
        %v4103 = vmul.f32 %v4099, 0.7978846
        %v4104 = vtanh.pop %v4100
        %v4105 = vtanh.pop %v4101
        %v4106 = vtanh.pop %v4102
        %v4107 = vtanh.pop %v4103
        %v4108 = vadd.f32 %v4104, 1.0
        %v4109 = vadd.f32 %v4105, 1.0
        %v4110 = vadd.f32 %v4106, 1.0
        %v4111 = vadd.f32 %v4107, 1.0
        %v4112 = vmul.f32 %v4080, %v4108
        %v4113 = vmul.f32 %v4081, %v4109
        %v4114 = vmul.f32 %v4082, %v4110
        %v4115 = vmul.f32 %v4083, %v4111
        %s4116 = scalar_lea.vmem %s5, 160
        %v4117 = vld [vmem:[%s4116] sm:$0xf]
        %v4118 = vld [vmem:[%s4116 + $0x4] sm:$0xf]
        %v4119 = vld [vmem:[%s4116 + $0x8] sm:$0xf]
        %v4120 = vld [vmem:[%s4116 + $0xc] sm:$0xf]
        %v4121 = vld [vmem:[%s4116 + $0x10] sm:$0xf]
        %v4122 = vld [vmem:[%s4116 + $0x14] sm:$0xf]
        %v4123 = vld [vmem:[%s4116 + $0x18] sm:$0xf]
        %v4124 = vld [vmem:[%s4116 + $0x1c] sm:$0xf]
        %v4125 = vpack.c.bf16 %v4113, %v4112
        %v4126 = vpack.c.bf16 %v4115, %v4114
        %v4127 = vlaneseq
        %v4128 = vshrl.u32 %v4127, 7
        %v4129 = vsub.s32 4, %v4128
        %v4130 = vrot.slane %v2670, %v4129
        %v4139 = vunpack.c.l.b16 %v4117
        %v4140 = vunpack.c.l.b16 %v4118
        %v4141 = vunpack.c.l.b16 %v4119
        %v4142 = vunpack.c.l.b16 %v4120
        %v4143 = vunpack.c.l.b16 %v4121
        %v4144 = vunpack.c.l.b16 %v4122
        %v4145 = vunpack.c.l.b16 %v4123
        %v4146 = vunpack.c.l.b16 %v4124
        %v4147 = vpack.c.b16 %v4140, %v4139
        %v4148 = vpack.c.b16 %v4142, %v4141
        %v4149 = vpack.c.b16 %v4144, %v4143
        %v4150 = vpack.c.b16 %v4146, %v4145
        %v4156 = vsel %vm1118, %v4125, 0
        %v4159 = vsel %vm1118, %v4126, 0
        %4161 = vmatprep.subr.bf16.mxu0 0
        %4162 = vmatpush1.bf16.msra.mxu0 0
        %4163 = vmatprep.subr.bf16.mxu0 0
        %4164 = vmatpush1.bf16.msra.mxu0 0
        %4165 = vmatprep.subr.bf16.mxu0 0
        %4166 = vmatpush1.bf16.msra.mxu0 0
        %4167 = vmatprep.subr.bf16.mxu0 0
        %4168 = vmatpush1.bf16.msra.mxu0 0
        %4169 = vmatprep.subr.bf16.mxu0 0
        %4170 = vmatpush1.bf16.msra.mxu0 %v4150
        %4171 = vmatprep.subr.bf16.mxu0 0
        %4172 = vmatpush1.bf16.msra.mxu0 %v4149
        %4173 = vmatprep.subr.bf16.mxu0 0
        %4174 = vmatpush1.bf16.msra.mxu0 %v4148
        %4175 = vmatprep.subr.bf16.mxu0 0
        %4176 = vmatpush1.bf16.msra.mxu0 %v4147
        %4177 = vmatprep.subr.bf16.mxu0 0
        %4178 = vmatpush2.bf16.msra.mxu0 0
        %4179 = vmatprep.subr.bf16.mxu0 0
        %4180 = vmatpush2.bf16.msra.mxu0 0
        %4181 = vmatprep.subr.bf16.mxu0 0
        %4182 = vmatpush2.bf16.msra.mxu0 0
        %4183 = vmatprep.subr.bf16.mxu0 0
        %4184 = vmatpush2.bf16.msra.mxu0 0
        %4185 = vmatprep.subr.bf16.mxu0 0
        %4186 = vmatpush2.bf16.msra.mxu0 0
        %4187 = vmatprep.subr.bf16.mxu0 0
        %4188 = vmatpush2.bf16.msra.mxu0 0
        %4189 = vmatprep.subr.bf16.mxu0 0
        %4190 = vmatpush2.bf16.msra.mxu0 0
        %4191 = vmatprep.subr.bf16.mxu0 0
        %4192 = vmatpush2.bf16.msra.mxu0 0
        %4193 = vmatprep.mubr.bf16.mxu0 0
        %4194 = vmatmul.mubr.bf16.gmra.mxu0 %v4156
        %v4195 = vpop.f32.mrf.mxu0
        %v4196 = vadd.f32 %v4130, %v4195
        %v4197 = vpop.f32.mrf.mxu0
        %v4198 = vpop.f32.mrf.mxu0
        %v4199 = vadd.f32 %v4130, %v4198
        %v4200 = vpop.f32.mrf.mxu0
        %4201 = vmatprep.mubr.bf16.mxu0 0
        %4202 = vmatmul.mubr.bf16.gmra.mxu0 %v4159
        %v4203 = vpop.f32.mrf.mxu0
        %v4204 = vadd.f32 %v4130, %v4203
        %v4205 = vpop.f32.mrf.mxu0
        %v4206 = vpop.f32.mrf.mxu0
        %v4207 = vadd.f32 %v4130, %v4206
        %v4208 = vpop.f32.mrf.mxu0
        %4209 = vdwg.mxu0
        %v4210 = vadd.f32 %v3982, %v4196
        %v4211 = vadd.f32 %v3983, %v4199
        %v4212 = vadd.f32 %v3984, %v4204
        %v4213 = vadd.f32 %v3985, %v4207
        %v4214 = vsel %vm1118, %v4210, 0.0
        %4215 = vadd.xlane.f32.xlu0 %v4214
        %v4216 = vpop.xlane.xlu0 %4215
        %v4217 = vsel %vm1118, %v4211, 0.0
        %4218 = vadd.xlane.f32.xlu0 %v4217
        %v4219 = vpop.xlane.xlu0 %4218
        %v4220 = vsel %vm1118, %v4212, 0.0
        %4221 = vadd.xlane.f32.xlu0 %v4220
        %v4222 = vpop.xlane.xlu0 %4221
        %v4223 = vsel %vm1118, %v4213, 0.0
        %4224 = vadd.xlane.f32.xlu0 %v4223
        %v4225 = vpop.xlane.xlu0 %4224
        %v4226 = vmul.f32 %v4216, %v2316
        %v4227 = vmul.f32 %v4219, %v2316
        %v4228 = vmul.f32 %v4222, %v2316
        %v4229 = vmul.f32 %v4225, %v2316
        %v4230 = vsub.f32 %v4210, %v4226
        %v4231 = vsub.f32 %v4211, %v4227
        %v4232 = vsub.f32 %v4212, %v4228
        %v4233 = vsub.f32 %v4213, %v4229
        %v4234 = vmul.f32 %v4230, %v4230
        %v4235 = vmul.f32 %v4231, %v4231
        %v4236 = vmul.f32 %v4232, %v4232
        %v4237 = vmul.f32 %v4233, %v4233
        %v4238 = vsel %vm1118, %v4234, 0.0
        %4239 = vadd.xlane.f32.xlu0 %v4238
        %v4240 = vpop.xlane.xlu0 %4239
        %v4241 = vsel %vm1118, %v4235, 0.0
        %4242 = vadd.xlane.f32.xlu0 %v4241
        %v4243 = vpop.xlane.xlu0 %4242
        %v4244 = vsel %vm1118, %v4236, 0.0
        %4245 = vadd.xlane.f32.xlu0 %v4244
        %v4246 = vpop.xlane.xlu0 %4245
        %v4247 = vsel %vm1118, %v4237, 0.0
        %4248 = vadd.xlane.f32.xlu0 %v4247
        %v4249 = vpop.xlane.xlu0 %4248
        %v4250 = vmul.f32 %v4240, %v2316
        %v4251 = vmul.f32 %v4243, %v2316
        %v4252 = vmul.f32 %v4246, %v2316
        %v4253 = vmul.f32 %v4249, %v2316
        %v4254 = vadd.f32 %v4250, 1e-05
        %v4255 = vadd.f32 %v4251, 1e-05
        %v4256 = vadd.f32 %v4252, 1e-05
        %v4257 = vadd.f32 %v4253, 1e-05
        %v4258 = vrsqrt.pop %v4254
        %v4259 = vrsqrt.pop %v4255
        %v4260 = vrsqrt.pop %v4256
        %v4261 = vrsqrt.pop %v4257
        %v4262 = vmul.f32 %v4230, %v4258
        %v4263 = vmul.f32 %v4231, %v4259
        %v4264 = vmul.f32 %v4232, %v4260
        %v4265 = vmul.f32 %v4233, %v4261
        %v4266 = vlaneseq
        %v4267 = vshrl.u32 %v4266, 7
        %v4268 = vsub.s32 5, %v4267
        %v4269 = vrot.slane %v2670, %v4268
        %v4270 = vmul.f32 %v4262, %v4269
        %v4271 = vmul.f32 %v4263, %v4269
        %v4272 = vmul.f32 %v4264, %v4269
        %v4273 = vmul.f32 %v4265, %v4269
        %v4274 = vlaneseq
        %v4275 = vshrl.u32 %v4274, 7
        %v4276 = vsub.s32 6, %v4275
        %v4277 = vrot.slane %v2670, %v4276
        %v4278 = vadd.f32 %v4270, %v4277
        %v4279 = vadd.f32 %v4271, %v4277
        %v4280 = vadd.f32 %v4272, %v4277
        %v4281 = vadd.f32 %v4273, %v4277
        %v4282 = vlaneseq
        %v4283 = vshrl.u32 %v4282, 7
        %v4284 = vlaneseq
        %v4285 = vand.u32 %v4284, 127
        %v4286 = vmul.u32 %v4283, 16
        %vm4287 = vcmp.eq.s32.totalorder %v4285, %v4286
        %v4288 = vsel %vm4287, 1, 0
        %v4289 = vcvt.s32.f32 %v4288
        %v4290 = vpack.c.bf16 %v4289, %v4289
        %v4291 = vpack.c.bf16 %v4279, %v4278
        %v4292 = vpack.c.bf16 %v4281, %v4280
        %v4294 = vsel %vm2197, %v4290, 0
        %4296 = vmatprep.subr.bf16.mxu0 0
        %4297 = vmatpush1.bf16.msra.mxu0 0
        %4298 = vmatprep.subr.bf16.mxu0 0
        %4299 = vmatpush1.bf16.msra.mxu0 0
        %4300 = vmatprep.subr.bf16.mxu0 0
        %4301 = vmatpush1.bf16.msra.mxu0 0
        %4302 = vmatprep.subr.bf16.mxu0 0
        %4303 = vmatpush1.bf16.msra.mxu0 0
        %4304 = vmatprep.subr.bf16.mxu0 0
        %4305 = vmatpush1.bf16.msra.mxu0 0
        %4306 = vmatprep.subr.bf16.mxu0 0
        %4307 = vmatpush1.bf16.msra.mxu0 0
        %4308 = vmatprep.subr.bf16.mxu0 0
        %4309 = vmatpush1.bf16.msra.mxu0 %v4292
        %4310 = vmatprep.subr.bf16.mxu0 0
        %4311 = vmatpush1.bf16.msra.mxu0 %v4291
        %4312 = vmatprep.subr.bf16.mxu0 0
        %4313 = vmatpush2.bf16.msra.mxu0 0
        %4314 = vmatprep.subr.bf16.mxu0 0
        %4315 = vmatpush2.bf16.msra.mxu0 0
        %4316 = vmatprep.subr.bf16.mxu0 0
        %4317 = vmatpush2.bf16.msra.mxu0 0
        %4318 = vmatprep.subr.bf16.mxu0 0
        %4319 = vmatpush2.bf16.msra.mxu0 0
        %4320 = vmatprep.subr.bf16.mxu0 0
        %4321 = vmatpush2.bf16.msra.mxu0 0
        %4322 = vmatprep.subr.bf16.mxu0 0
        %4323 = vmatpush2.bf16.msra.mxu0 0
        %4324 = vmatprep.subr.bf16.mxu0 0
        %4325 = vmatpush2.bf16.msra.mxu0 0
        %4326 = vmatprep.subr.bf16.mxu0 0
        %4327 = vmatpush2.bf16.msra.mxu0 0
        %4328 = vmatprep.mubr.bf16.mxu0 0
        %4329 = vmatmul.mubr.bf16.gmra.mxu0 %v4294
        %v4330 = vpop.f32.mrf.mxu0
        %v4331 = vadd.f32 0.0, %v4330
        %v4332 = vpop.f32.mrf.mxu0
        %v4333 = vpop.f32.mrf.mxu0
        %v4334 = vpop.f32.mrf.mxu0
        %4335 = vdwg.mxu0
        %v4336 = vld [vmem:[%s7] sm:$0xf]
        %v4337 = vld [vmem:[%s7 + $0x4] sm:$0xf]
        %v4338 = vld [vmem:[%s7 + $0x8] sm:$0xf]
        %v4339 = vld [vmem:[%s7 + $0xc] sm:$0xf]
        %v4340 = vld [vmem:[%s7 + $0x10] sm:$0xf]
        %v4341 = vld [vmem:[%s7 + $0x14] sm:$0xf]
        %v4342 = vld [vmem:[%s7 + $0x18] sm:$0xf]
        %v4343 = vld [vmem:[%s7 + $0x1c] sm:$0xf]
        %v4344 = vpack.c.bf16 %v4331, %v4331
        %v4345 = vld [vmem:[%s8] sm:$0x1]
        %v4347 = vlaneseq
        %v4348 = vshrl.u32 %v4347, 7
        %v4349 = vsub.s32 0, %v4348
        %v4350 = vrot.slane %v4345, %v4349
        %v4360 = vunpack.c.l.b16 %v4336
        %v4361 = vunpack.c.l.b16 %v4337
        %v4362 = vunpack.c.l.b16 %v4338
        %v4363 = vunpack.c.l.b16 %v4339
        %v4364 = vunpack.c.l.b16 %v4340
        %v4365 = vunpack.c.l.b16 %v4341
        %v4366 = vunpack.c.l.b16 %v4342
        %v4367 = vunpack.c.l.b16 %v4343
        %v4368 = vpack.c.b16 %v4361, %v4360
        %v4369 = vpack.c.b16 %v4363, %v4362
        %v4370 = vpack.c.b16 %v4365, %v4364
        %v4371 = vpack.c.b16 %v4367, %v4366
        %v4377 = vsel %vm1118, %v4344, 0
        %4379 = vmatprep.subr.bf16.mxu0 0
        %4380 = vmatpush1.bf16.msra.mxu0 0
        %4381 = vmatprep.subr.bf16.mxu0 0
        %4382 = vmatpush1.bf16.msra.mxu0 0
        %4383 = vmatprep.subr.bf16.mxu0 0
        %4384 = vmatpush1.bf16.msra.mxu0 0
        %4385 = vmatprep.subr.bf16.mxu0 0
        %4386 = vmatpush1.bf16.msra.mxu0 0
        %4387 = vmatprep.subr.bf16.mxu0 0
        %4388 = vmatpush1.bf16.msra.mxu0 %v4371
        %4389 = vmatprep.subr.bf16.mxu0 0
        %4390 = vmatpush1.bf16.msra.mxu0 %v4370
        %4391 = vmatprep.subr.bf16.mxu0 0
        %4392 = vmatpush1.bf16.msra.mxu0 %v4369
        %4393 = vmatprep.subr.bf16.mxu0 0
        %4394 = vmatpush1.bf16.msra.mxu0 %v4368
        %4395 = vmatprep.subr.bf16.mxu0 0
        %4396 = vmatpush2.bf16.msra.mxu0 0
        %4397 = vmatprep.subr.bf16.mxu0 0
        %4398 = vmatpush2.bf16.msra.mxu0 0
        %4399 = vmatprep.subr.bf16.mxu0 0
        %4400 = vmatpush2.bf16.msra.mxu0 0
        %4401 = vmatprep.subr.bf16.mxu0 0
        %4402 = vmatpush2.bf16.msra.mxu0 0
        %4403 = vmatprep.subr.bf16.mxu0 0
        %4404 = vmatpush2.bf16.msra.mxu0 0
        %4405 = vmatprep.subr.bf16.mxu0 0
        %4406 = vmatpush2.bf16.msra.mxu0 0
        %4407 = vmatprep.subr.bf16.mxu0 0
        %4408 = vmatpush2.bf16.msra.mxu0 0
        %4409 = vmatprep.subr.bf16.mxu0 0
        %4410 = vmatpush2.bf16.msra.mxu0 0
        %4411 = vmatprep.mubr.bf16.mxu0 0
        %4412 = vmatmul.mubr.bf16.gmra.mxu0 %v4377
        %v4413 = vpop.f32.mrf.mxu0
        %v4414 = vadd.f32 %v4350, %v4413
        %v4415 = vpop.f32.mrf.mxu0
        %v4416 = vpop.f32.mrf.mxu0
        %v4417 = vpop.f32.mrf.mxu0
        %4418 = vdwg.mxu0
        %v4419 = vmul.f32 %v4414, 0.5
        %v4420 = vmul.f32 %v4414, 0.044715
        %v4421 = vmul.f32 %v4420, %v4414
        %v4422 = vmul.f32 %v4421, %v4414
        %v4423 = vadd.f32 %v4414, %v4422
        %v4424 = vmul.f32 %v4423, 0.7978846
        %v4425 = vtanh.pop %v4424
        %v4426 = vadd.f32 %v4425, 1.0
        %v4427 = vmul.f32 %v4419, %v4426
        %v4428 = vld [vmem:[%s9] sm:$0xf]
        %v4429 = vld [vmem:[%s9 + $0x4] sm:$0xf]
        %v4430 = vld [vmem:[%s9 + $0x8] sm:$0xf]
        %v4431 = vld [vmem:[%s9 + $0xc] sm:$0xf]
        %v4432 = vld [vmem:[%s9 + $0x10] sm:$0xf]
        %v4433 = vld [vmem:[%s9 + $0x14] sm:$0xf]
        %v4434 = vld [vmem:[%s9 + $0x18] sm:$0xf]
        %v4435 = vld [vmem:[%s9 + $0x1c] sm:$0xf]
        %v4436 = vpack.c.bf16 %v4427, %v4427
        %v4437 = vld [vmem:[%s10] sm:$0x1]
        %v4439 = vlaneseq
        %v4440 = vshrl.u32 %v4439, 7
        %v4441 = vsub.s32 0, %v4440
        %v4442 = vrot.slane %v4437, %v4441
        %v4452 = vunpack.c.l.b16 %v4428
        %v4453 = vunpack.c.l.b16 %v4429
        %v4454 = vunpack.c.l.b16 %v4430
        %v4455 = vunpack.c.l.b16 %v4431
        %v4456 = vunpack.c.l.b16 %v4432
        %v4457 = vunpack.c.l.b16 %v4433
        %v4458 = vunpack.c.l.b16 %v4434
        %v4459 = vunpack.c.l.b16 %v4435
        %v4460 = vpack.c.b16 %v4453, %v4452
        %v4461 = vpack.c.b16 %v4455, %v4454
        %v4462 = vpack.c.b16 %v4457, %v4456
        %v4463 = vpack.c.b16 %v4459, %v4458
        %v4469 = vsel %vm1118, %v4436, 0
        %4471 = vmatprep.subr.bf16.mxu0 0
        %4472 = vmatpush1.bf16.msra.mxu0 0
        %4473 = vmatprep.subr.bf16.mxu0 0
        %4474 = vmatpush1.bf16.msra.mxu0 0
        %4475 = vmatprep.subr.bf16.mxu0 0
        %4476 = vmatpush1.bf16.msra.mxu0 0
        %4477 = vmatprep.subr.bf16.mxu0 0
        %4478 = vmatpush1.bf16.msra.mxu0 0
        %4479 = vmatprep.subr.bf16.mxu0 0
        %4480 = vmatpush1.bf16.msra.mxu0 %v4463
        %4481 = vmatprep.subr.bf16.mxu0 0
        %4482 = vmatpush1.bf16.msra.mxu0 %v4462
        %4483 = vmatprep.subr.bf16.mxu0 0
        %4484 = vmatpush1.bf16.msra.mxu0 %v4461
        %4485 = vmatprep.subr.bf16.mxu0 0
        %4486 = vmatpush1.bf16.msra.mxu0 %v4460
        %4487 = vmatprep.subr.bf16.mxu0 0
        %4488 = vmatpush2.bf16.msra.mxu0 0
        %4489 = vmatprep.subr.bf16.mxu0 0
        %4490 = vmatpush2.bf16.msra.mxu0 0
        %4491 = vmatprep.subr.bf16.mxu0 0
        %4492 = vmatpush2.bf16.msra.mxu0 0
        %4493 = vmatprep.subr.bf16.mxu0 0
        %4494 = vmatpush2.bf16.msra.mxu0 0
        %4495 = vmatprep.subr.bf16.mxu0 0
        %4496 = vmatpush2.bf16.msra.mxu0 0
        %4497 = vmatprep.subr.bf16.mxu0 0
        %4498 = vmatpush2.bf16.msra.mxu0 0
        %4499 = vmatprep.subr.bf16.mxu0 0
        %4500 = vmatpush2.bf16.msra.mxu0 0
        %4501 = vmatprep.subr.bf16.mxu0 0
        %4502 = vmatpush2.bf16.msra.mxu0 0
        %4503 = vmatprep.mubr.bf16.mxu0 0
        %4504 = vmatmul.mubr.bf16.gmra.mxu0 %v4469
        %v4505 = vpop.f32.mrf.mxu0
        %v4506 = vadd.f32 %v4442, %v4505
        %v4507 = vpop.f32.mrf.mxu0
        %v4508 = vpop.f32.mrf.mxu0
        %v4509 = vpop.f32.mrf.mxu0
        %4510 = vdwg.mxu0
        %v4511 = vmul.f32 %v4506, 0.5
        %v4512 = vmul.f32 %v4506, 0.044715
        %v4513 = vmul.f32 %v4512, %v4506
        %v4514 = vmul.f32 %v4513, %v4506
        %v4515 = vadd.f32 %v4506, %v4514
        %v4516 = vmul.f32 %v4515, 0.7978846
        %v4517 = vtanh.pop %v4516
        %v4518 = vadd.f32 %v4517, 1.0
        %v4519 = vmul.f32 %v4511, %v4518
        %v4520 = vld [vmem:[%s11] sm:$0xf]
        %v4521 = vld [vmem:[%s11 + $0x4] sm:$0xf]
        %v4522 = vld [vmem:[%s11 + $0x8] sm:$0xf]
        %v4523 = vld [vmem:[%s11 + $0xc] sm:$0xf]
        %v4524 = vpack.c.bf16 %v4519, %v4519
        %v4525 = vld [vmem:[%s12] sm:$0x1]
        %v4527 = vlaneseq
        %v4528 = vshrl.u32 %v4527, 7
        %v4529 = vsub.s32 0, %v4528
        %v4530 = vrot.slane %v4525, %v4529
        %v4536 = vunpack.c.l.b16 %v4520
        %v4537 = vunpack.c.l.b16 %v4521
        %v4538 = vunpack.c.l.b16 %v4522
        %v4539 = vunpack.c.l.b16 %v4523
        %v4540 = vpack.c.b16 %v4537, %v4536
        %v4541 = vpack.c.b16 %v4539, %v4538
        %v4545 = vsel %vm2197, %v4524, 0
        %4547 = vmatprep.subr.bf16.mxu0 0
        %4548 = vmatpush1.bf16.msra.mxu0 0
        %4549 = vmatprep.subr.bf16.mxu0 0
        %4550 = vmatpush1.bf16.msra.mxu0 0
        %4551 = vmatprep.subr.bf16.mxu0 0
        %4552 = vmatpush1.bf16.msra.mxu0 0
        %4553 = vmatprep.subr.bf16.mxu0 0
        %4554 = vmatpush1.bf16.msra.mxu0 0
        %4555 = vmatprep.subr.bf16.mxu0 0
        %4556 = vmatpush1.bf16.msra.mxu0 0
        %4557 = vmatprep.subr.bf16.mxu0 0
        %4558 = vmatpush1.bf16.msra.mxu0 0
        %4559 = vmatprep.subr.bf16.mxu0 0
        %4560 = vmatpush1.bf16.msra.mxu0 %v4541
        %4561 = vmatprep.subr.bf16.mxu0 0
        %4562 = vmatpush1.bf16.msra.mxu0 %v4540
        %4563 = vmatprep.subr.bf16.mxu0 0
        %4564 = vmatpush2.bf16.msra.mxu0 0
        %4565 = vmatprep.subr.bf16.mxu0 0
        %4566 = vmatpush2.bf16.msra.mxu0 0
        %4567 = vmatprep.subr.bf16.mxu0 0
        %4568 = vmatpush2.bf16.msra.mxu0 0
        %4569 = vmatprep.subr.bf16.mxu0 0
        %4570 = vmatpush2.bf16.msra.mxu0 0
        %4571 = vmatprep.subr.bf16.mxu0 0
        %4572 = vmatpush2.bf16.msra.mxu0 0
        %4573 = vmatprep.subr.bf16.mxu0 0
        %4574 = vmatpush2.bf16.msra.mxu0 0
        %4575 = vmatprep.subr.bf16.mxu0 0
        %4576 = vmatpush2.bf16.msra.mxu0 0
        %4577 = vmatprep.subr.bf16.mxu0 0
        %4578 = vmatpush2.bf16.msra.mxu0 0
        %4579 = vmatprep.mubr.bf16.mxu0 0
        %4580 = vmatmul.mubr.bf16.gmra.mxu0 %v4545
        %v4581 = vpop.f32.mrf.mxu0
        %v4582 = vadd.f32 %v4530, %v4581
        %v4583 = vpop.f32.mrf.mxu0
        %v4584 = vpop.f32.mrf.mxu0
        %v4585 = vpop.f32.mrf.mxu0
        %4586 = vdwg.mxu0
        %4587 = vst [vmem:[%s436] sm:$0x3] %v4582
        %s4588 = sand.u32 %s313, 1
        %s4589 = scalar_lea.sflag [#allocation3], %s4588
        %s4590 = sand.u32 %s313, 1
        %s4591 = smul.addr %s4590, 2
        %s4592 = scalar_lea.vmem [#allocation2], %s4591
        // Predicated region
        $region73: #{tpu_custom_call.1} parent=71 // pred_check
          %p4593 = pneg %p323
        $region74: #{tpu_custom_call.1} parent=71 // pred_check_branch
          %4595 = sbr.rel (%p4593) target = $region76
        $region75: #{tpu_custom_call.1} parent=71 // pred_region
          %s4597 = ssub.s32 32, 32
          %4598 = vsyncadd %s4589, %s4597
          %s4599 = smul.addr %s27, 32
          %s4600 = scalar_lea.hbm %s13, %s4599
          %s4602 = sshll.u32 %s4592, 4
          %s4603 = int_to_ptr.vmem [resolvable:$true] %s4602
          %4605 = dma.vmem_to_hbm [thread:$0]  %s4603, 32, %s4600, %s4589
        $region76: #{tpu_custom_call.1} parent=71 // pred_fallthru
          _
      $region72: #{tpu_custom_call.1} parent=5 // pred_fallthru
        _
      %p4606 = scmp.le.s32.totalorder 2, %s22
      // Predicated region
      $region77: #{tpu_custom_call.1} parent=5 // pred_check
        %p4607 = pneg %p4606
      $region78: #{tpu_custom_call.1} parent=5 // pred_check_branch
        %4609 = sbr.rel (%p4607) target = $region80
      $region79: #{tpu_custom_call.1} parent=5 // pred_region
        %s4610 = ssub.s32 %s22, 2
        // Predicated region
        $region81: #{tpu_custom_call.1} parent=79 // pred_check
          %p4611 = pneg %p329
        $region82: #{tpu_custom_call.1} parent=79 // pred_check_branch
          %4613 = sbr.rel (%p4611) target = $region84
        $region83: #{tpu_custom_call.1} parent=79 // pred_region
          %s4614 = sand.u32 %s314, 1
          %s4615 = scalar_lea.sflag [#allocation3], %s4614
          %s4616 = sand.u32 %s314, 1
          %s4617 = smul.addr %s4616, 2
          %s4618 = scalar_lea.vmem [#allocation2], %s4617
          %4619 = dma.done %s4615, 32
        $region84: #{tpu_custom_call.1} parent=79 // pred_fallthru
          _
      $region80: #{tpu_custom_call.1} parent=5 // pred_fallthru
        _
    $region6: #{tpu_custom_call.1} parent=1 // loop_footer
      %s26 = sadd.s32 1, %s22
    $region7: #{tpu_custom_call.1} parent=1 // loop_footer_branch
      %21 = sbr.rel target = $region3
    $region8: #{tpu_custom_call.1} parent=1 // loop_exit
      _
    %4620 = vsyncpa [#allocation3], 1
    %s4621 = scalar_lea.sflag [#allocation3], 1
    %4622 = vsyncpa %s4621, 1

</llo_original>
